<compile_context>
chip_gen: v7x
topology: tpu7x:2x2x1
jax: 0.10.0
libtpu: 0.0.40
codegen_flags: <defaults>
</compile_context>

<pallas_src>
import math

import jax
import jax.numpy as jnp
from jax.experimental import pallas as pl
from jax.experimental.pallas import tpu as pltpu

# ---- model hyperparameters (small, consistent with the module) --------------
B = 2
QL = 8            # number of query tokens
KL = 16           # number of image-feature tokens
D_MODEL = 32
N_HEADS = 4
HEAD_DIM = D_MODEL // N_HEADS
HIDDEN = 64
LN_EPS = 1e-5     # nn.LayerNorm default
BH = B * N_HEADS  # merged (head, batch) einsum batch dim, g = h * B + b
SCALE = 1.0 / math.sqrt(HEAD_DIM)
# MXU operand dtype (f32 accumulation). Set to jnp.float32 for exact f32 parity.
MXU_DTYPE = jnp.bfloat16


# ---- in-kernel helpers (f32 elementwise math) --------------------------------
def _layernorm(x, gamma, beta):
    # x: (M, D); gamma/beta: (1, D)
    mu = jnp.mean(x, axis=-1, keepdims=True)
    xc = x - mu
    var = jnp.mean(xc * xc, axis=-1, keepdims=True)
    return xc * jax.lax.rsqrt(var + LN_EPS) * gamma + beta


def _gelu_exact(x):
    # nn.GELU() default = exact erf formulation
    return 0.5 * x * (1.0 + jax.lax.erf(x * (1.0 / math.sqrt(2.0))))


def _split_heads(t3, col0):
    # t3: (B, L, C) f32.  Returns (BH, L, HEAD_DIM) with g = h * B + b, built
    # from static lane slices stacked along a NEW LEADING axis (cheap concat;
    # no lane-axis concatenate, no lane-splitting reshape).
    parts = [t3[:, :, col0 + h * HEAD_DIM: col0 + (h + 1) * HEAD_DIM]
             for h in range(N_HEADS)]
    return jnp.concatenate(parts, axis=0)


def _mha_core(qg, kg, vg, wo_g, bo):
    # qg: (BH, QL, hd) f32; kg/vg: (BH, L, hd) f32
    # wo_g: (BH, hd, D) bf16 (per-head out-proj slabs, replicated over b)
    # bo: (1, D) f32
    s = jnp.einsum("gqd,gkd->gqk", qg.astype(MXU_DTYPE), kg.astype(MXU_DTYPE),
                   preferred_element_type=jnp.float32) * SCALE
    s = s - jnp.max(s, axis=-1, keepdims=True)           # stable softmax (f32)
    p = jnp.exp(s)
    p = p * pl.reciprocal(jnp.sum(p, axis=-1, keepdims=True), approx=True)
    # TODO(synk): attention dropout omitted (eval-mode / identity).
    og = jnp.einsum("gqk,gkd->gqd", p.astype(MXU_DTYPE), vg.astype(MXU_DTYPE),
                    preferred_element_type=jnp.float32)   # (BH, QL, hd)
    po = jnp.einsum("gqd,gdf->gqf", og.astype(MXU_DTYPE), wo_g,
                    preferred_element_type=jnp.float32)   # (BH, QL, D)
    # Sum the per-head partial out-projections (static leading-dim slices).
    out = po[0:B]
    for h in range(1, N_HEADS):
        out = out + po[h * B:(h + 1) * B]                 # (B, QL, D)
    return out.reshape(B * QL, D_MODEL) + bo


# ---- the Pallas kernel: full QFormer layer, all batch elements ---------------
def qformer_layer_kernel(
        q_ref, img_ref,
        g_sa_ref, be_sa_ref, w_qkv_s_ref, b_qkv_s_ref, wo_s_ref, bo_s_ref,
        g_ca_ref, be_ca_ref, w_q_c_ref, b_q_c_ref, w_kv_c_ref, b_kv_c_ref,
        wo_c_ref, bo_c_ref,
        g_ff_ref, be_ff_ref, w1_ref, b1_ref, w2_ref, b2_ref,
        o_ref):
    # Residual stream kept flat: (B*QL, D) — B folded into the matmul M dim.
    x2 = q_ref[...].astype(jnp.float32).reshape(B * QL, D_MODEL)
    img2 = img_ref[...].astype(jnp.float32).reshape(B * KL, D_MODEL)

    # 1) self-attention block (pre-LN + residual); fused QKV matmul (D, 3D)
    h_ln = _layernorm(x2, g_sa_ref[...], be_sa_ref[...])
    qkv = jnp.dot(h_ln.astype(MXU_DTYPE), w_qkv_s_ref[...],
                  preferred_element_type=jnp.float32) + b_qkv_s_ref[...]
    qkv3 = qkv.reshape(B, QL, 3 * D_MODEL)
    x2 = x2 + _mha_core(_split_heads(qkv3, 0),
                        _split_heads(qkv3, D_MODEL),
                        _split_heads(qkv3, 2 * D_MODEL),
                        wo_s_ref[...], bo_s_ref[...])

    # 2) cross-attention block: queries attend to image features; fused KV
    h_ln = _layernorm(x2, g_ca_ref[...], be_ca_ref[...])
    q_c = jnp.dot(h_ln.astype(MXU_DTYPE), w_q_c_ref[...],
                  preferred_element_type=jnp.float32) + b_q_c_ref[...]
    kv_c = jnp.dot(img2.astype(MXU_DTYPE), w_kv_c_ref[...],
                   preferred_element_type=jnp.float32) + b_kv_c_ref[...]
    q3 = q_c.reshape(B, QL, D_MODEL)
    kv3 = kv_c.reshape(B, KL, 2 * D_MODEL)
    x2 = x2 + _mha_core(_split_heads(q3, 0),
                        _split_heads(kv3, 0),
                        _split_heads(kv3, D_MODEL),
                        wo_c_ref[...], bo_c_ref[...])

    # 3) feed-forward block
    h_ln = _layernorm(x2, g_ff_ref[...], be_ff_ref[...])
    hh = jnp.dot(h_ln.astype(MXU_DTYPE), w1_ref[...],
                 preferred_element_type=jnp.float32) + b1_ref[...]
    hh = _gelu_exact(hh)
    # TODO(synk): FFN dropout omitted (eval-mode / identity).
    hh = jnp.dot(hh.astype(MXU_DTYPE), w2_ref[...],
                 preferred_element_type=jnp.float32) + b2_ref[...]
    x2 = x2 + hh

    o_ref[...] = x2.reshape(B, QL, D_MODEL).astype(o_ref.dtype)


# ---- wrapper: host-side parameter fusion, single-program pallas_call ---------
def qformer_layer(query_tokens, image_feats, params):
    ln, aw, ab, w1, b1, w2, b2 = params

    def rep_out_proj(w_o):
        # (D, D) (in, out) -> (BH, hd, D) with g = h * B + b (replicated over b)
        return jnp.repeat(w_o.reshape(N_HEADS, HEAD_DIM, D_MODEL),
                          B, axis=0).astype(MXU_DTYPE)

    # self-attention params (fused QKV)
    w_qkv_s = jnp.concatenate([aw[0], aw[1], aw[2]], axis=1).astype(MXU_DTYPE)  # (D, 3D)
    b_qkv_s = jnp.concatenate([ab[0], ab[1], ab[2]])[None, :]                   # (1, 3D)
    wo_s, bo_s = rep_out_proj(aw[3]), ab[3][None, :]
    # cross-attention params (fused KV)
    w_q_c, b_q_c = aw[4].astype(MXU_DTYPE), ab[4][None, :]
    w_kv_c = jnp.concatenate([aw[5], aw[6]], axis=1).astype(MXU_DTYPE)          # (D, 2D)
    b_kv_c = jnp.concatenate([ab[5], ab[6]])[None, :]                           # (1, 2D)
    wo_c, bo_c = rep_out_proj(aw[7]), ab[7][None, :]
    # layernorm params, pre-split to clean (1, D) rows
    g_sa, be_sa = ln[0, 0][None, :], ln[0, 1][None, :]
    g_ca, be_ca = ln[1, 0][None, :], ln[1, 1][None, :]
    g_ff, be_ff = ln[2, 0][None, :], ln[2, 1][None, :]

    vmem = pl.BlockSpec(memory_space=pltpu.MemorySpace.VMEM)
    return pl.pallas_call(
        qformer_layer_kernel,
        out_shape=jax.ShapeDtypeStruct((B, QL, D_MODEL), jnp.float32),
        in_specs=[vmem] * 22,
        out_specs=vmem,
    )(query_tokens, image_feats,
      g_sa, be_sa, w_qkv_s, b_qkv_s, wo_s, bo_s,
      g_ca, be_ca, w_q_c, b_q_c, w_kv_c, b_kv_c, wo_c, bo_c,
      g_ff, be_ff, w1.astype(MXU_DTYPE), b1, w2.astype(MXU_DTYPE), b2)


# ---- pure-JAX f32 reference (for correctness check) --------------------------
def _ref_layernorm(x, g, b):
    mu = jnp.mean(x, axis=-1, keepdims=True)
    var = jnp.mean((x - mu) ** 2, axis=-1, keepdims=True)
    return (x - mu) * jax.lax.rsqrt(var + LN_EPS) * g + b


def _ref_attention(xq, xkv, w, bvec):
    Bn, Lq, _ = xq.shape
    Lk = xkv.shape[1]
    Q = xq @ w[0] + bvec[0]
    K = xkv @ w[1] + bvec[1]
    V = xkv @ w[2] + bvec[2]
    Q = Q.reshape(Bn, Lq, N_HEADS, HEAD_DIM).transpose(0, 2, 1, 3)
    K = K.reshape(Bn, Lk, N_HEADS, HEAD_DIM).transpose(0, 2, 1, 3)
    V = V.reshape(Bn, Lk, N_HEADS, HEAD_DIM).transpose(0, 2, 1, 3)
    s = jnp.einsum("bhqd,bhkd->bhqk", Q, K) / math.sqrt(HEAD_DIM)
    p = jax.nn.softmax(s, axis=-1)
    o = jnp.einsum("bhqk,bhkd->bhqd", p, V).transpose(0, 2, 1, 3).reshape(Bn, Lq, D_MODEL)
    return o @ w[3] + bvec[3]


def qformer_layer_ref(q, img, params):
    ln, aw, ab, w1, b1, w2, b2 = params
    x = q
    xn = _ref_layernorm(x, ln[0, 0], ln[0, 1])
    x = x + _ref_attention(xn, xn, aw[0:4], ab[0:4])
    xn = _ref_layernorm(x, ln[1, 0], ln[1, 1])
    x = x + _ref_attention(xn, img, aw[4:8], ab[4:8])
    h = _ref_layernorm(x, ln[2, 0], ln[2, 1])
    h = jax.nn.gelu(h @ w1 + b1[0], approximate=False)
    return x + (h @ w2 + b2[0])


# ---- main ---------------------------------------------------------------------
if __name__ == "__main__":
    key = jax.random.PRNGKey(0)
    ks = jax.random.split(key, 10)

    query_tokens = jax.random.normal(ks[0], (B, QL, D_MODEL), jnp.float32)
    image_feats = jax.random.normal(ks[1], (B, KL, D_MODEL), jnp.float32)

    # LayerNorm params: gamma=1, beta=0 (PyTorch default), stacked (3, 2, D)
    ln = jnp.stack([jnp.stack([jnp.ones((D_MODEL,), jnp.float32),
                               jnp.zeros((D_MODEL,), jnp.float32)])] * 3)
    # Attention projections: 2 attn layers x 4 projections, (in, out) layout
    aw = 0.05 * jax.random.normal(ks[2], (8, D_MODEL, D_MODEL), jnp.float32)
    ab = 0.01 * jax.random.normal(ks[3], (8, D_MODEL), jnp.float32)
    # FFN params
    w1 = 0.05 * jax.random.normal(ks[4], (D_MODEL, HIDDEN), jnp.float32)
    b1 = 0.01 * jax.random.normal(ks[5], (1, HIDDEN), jnp.float32)
    w2 = 0.05 * jax.random.normal(ks[6], (HIDDEN, D_MODEL), jnp.float32)
    b2 = 0.01 * jax.random.normal(ks[7], (1, D_MODEL), jnp.float32)

    params = (ln, aw, ab, w1, b1, w2, b2)

    out = jax.jit(qformer_layer)(query_tokens, image_feats, params)
    out = jax.block_until_ready(out)

    ref = qformer_layer_ref(query_tokens, image_feats, params)
    assert out.shape == (B, QL, D_MODEL)
    # Tolerance reflects bf16 MXU operands (f32 accumulation) + approx reciprocal
    # in the softmax; observed error is O(1e-3) at these scales.
    assert jnp.allclose(out, ref, rtol=2e-2, atol=2e-2), \
        f"max abs err = {jnp.max(jnp.abs(out - ref))}"

    print("KERNEL_OK")
</pallas_src>

<mosaic_0001>
module attributes {stable_mosaic.version = 11 : i64} {
  func.func @qformer_layer_kernel(%arg0: memref<2x8x32xf32, #tpu.memory_space<vmem>>, %arg1: memref<2x16x32xf32, #tpu.memory_space<vmem>>, %arg2: memref<1x32xf32, #tpu.memory_space<vmem>>, %arg3: memref<1x32xf32, #tpu.memory_space<vmem>>, %arg4: memref<32x96xbf16, #tpu.memory_space<vmem>>, %arg5: memref<1x96xf32, #tpu.memory_space<vmem>>, %arg6: memref<8x8x32xbf16, #tpu.memory_space<vmem>>, %arg7: memref<1x32xf32, #tpu.memory_space<vmem>>, %arg8: memref<1x32xf32, #tpu.memory_space<vmem>>, %arg9: memref<1x32xf32, #tpu.memory_space<vmem>>, %arg10: memref<32x32xbf16, #tpu.memory_space<vmem>>, %arg11: memref<1x32xf32, #tpu.memory_space<vmem>>, %arg12: memref<32x64xbf16, #tpu.memory_space<vmem>>, %arg13: memref<1x64xf32, #tpu.memory_space<vmem>>, %arg14: memref<8x8x32xbf16, #tpu.memory_space<vmem>>, %arg15: memref<1x32xf32, #tpu.memory_space<vmem>>, %arg16: memref<1x32xf32, #tpu.memory_space<vmem>>, %arg17: memref<1x32xf32, #tpu.memory_space<vmem>>, %arg18: memref<32x64xbf16, #tpu.memory_space<vmem>>, %arg19: memref<1x64xf32, #tpu.memory_space<vmem>>, %arg20: memref<64x32xbf16, #tpu.memory_space<vmem>>, %arg21: memref<1x32xf32, #tpu.memory_space<vmem>>, %arg22: memref<2x8x32xf32, #tpu.memory_space<vmem>>) attributes {dimension_semantics = [], scalar_prefetch = 0 : i64, scratch_operands = 0 : i64, tpu.core_type = #tpu.core_type<tc>} {
    %c0 = arith.constant 0 : index
    %c0_0 = arith.constant 0 : index
    %c0_1 = arith.constant 0 : index
    %0 = vector.load %arg0[%c0, %c0_0, %c0_1] : memref<2x8x32xf32, #tpu.memory_space<vmem>>, vector<2x8x32xf32>
    %1 = vector.shape_cast %0 : vector<2x8x32xf32> to vector<16x32xf32>
    %c0_2 = arith.constant 0 : index
    %c0_3 = arith.constant 0 : index
    %c0_4 = arith.constant 0 : index
    %2 = vector.load %arg1[%c0_2, %c0_3, %c0_4] : memref<2x16x32xf32, #tpu.memory_space<vmem>>, vector<2x16x32xf32>
    %3 = vector.shape_cast %2 : vector<2x16x32xf32> to vector<32x32xf32>
    %c0_5 = arith.constant 0 : index
    %c0_6 = arith.constant 0 : index
    %4 = vector.load %arg2[%c0_5, %c0_6] : memref<1x32xf32, #tpu.memory_space<vmem>>, vector<1x32xf32>
    %c0_7 = arith.constant 0 : index
    %c0_8 = arith.constant 0 : index
    %5 = vector.load %arg3[%c0_7, %c0_8] : memref<1x32xf32, #tpu.memory_space<vmem>>, vector<1x32xf32>
    %cst = arith.constant dense<0.000000e+00> : vector<16xf32>
    %6 = vector.multi_reduction <add>, %1, %cst [1] : vector<16x32xf32> to vector<16xf32>
    %7 = vector.shape_cast %6 : vector<16xf32> to vector<16x1xf32>
    %cst_9 = arith.constant 3.200000e+01 : f32
    %8 = vector.broadcast %cst_9 : f32 to vector<16x1xf32>
    %9 = arith.divf %7, %8 : vector<16x1xf32>
    %10 = vector.broadcast %9 : vector<16x1xf32> to vector<16x32xf32>
    %11 = arith.subf %1, %10 : vector<16x32xf32>
    %12 = arith.mulf %11, %11 : vector<16x32xf32>
    %cst_10 = arith.constant dense<0.000000e+00> : vector<16xf32>
    %13 = vector.multi_reduction <add>, %12, %cst_10 [1] : vector<16x32xf32> to vector<16xf32>
    %14 = vector.shape_cast %13 : vector<16xf32> to vector<16x1xf32>
    %cst_11 = arith.constant 3.200000e+01 : f32
    %15 = vector.broadcast %cst_11 : f32 to vector<16x1xf32>
    %16 = arith.divf %14, %15 : vector<16x1xf32>
    %cst_12 = arith.constant 9.99999974E-6 : f32
    %17 = vector.broadcast %cst_12 : f32 to vector<16x1xf32>
    %18 = arith.addf %16, %17 : vector<16x1xf32>
    %19 = math.rsqrt %18 : vector<16x1xf32>
    %20 = vector.broadcast %19 : vector<16x1xf32> to vector<16x32xf32>
    %21 = arith.mulf %11, %20 : vector<16x32xf32>
    %22 = vector.broadcast %4 : vector<1x32xf32> to vector<16x32xf32>
    %23 = arith.mulf %21, %22 : vector<16x32xf32>
    %24 = vector.broadcast %5 : vector<1x32xf32> to vector<16x32xf32>
    %25 = arith.addf %23, %24 : vector<16x32xf32>
    %26 = arith.truncf %25 : vector<16x32xf32> to vector<16x32xbf16>
    %c0_13 = arith.constant 0 : index
    %c0_14 = arith.constant 0 : index
    %27 = vector.load %arg4[%c0_13, %c0_14] : memref<32x96xbf16, #tpu.memory_space<vmem>>, vector<32x96xbf16>
    %cst_15 = arith.constant dense<0.000000e+00> : vector<16x96xf32>
    %28 = tpu.matmul %26, %27, %cst_15 {dimension_numbers = #tpu.dot_dimension_numbers<[1], [0], [0], [1], [0, 0, 1, 1], [], []>} : vector<16x32xbf16>, vector<32x96xbf16>, vector<16x96xf32> -> vector<16x96xf32>
    %c0_16 = arith.constant 0 : index
    %c0_17 = arith.constant 0 : index
    %29 = vector.load %arg5[%c0_16, %c0_17] : memref<1x96xf32, #tpu.memory_space<vmem>>, vector<1x96xf32>
    %30 = vector.broadcast %29 : vector<1x96xf32> to vector<16x96xf32>
    %31 = arith.addf %28, %30 : vector<16x96xf32>
    %32 = vector.shape_cast %31 : vector<16x96xf32> to vector<2x8x96xf32>
    %33 = vector.extract_strided_slice %32 {offsets = [0, 0, 0], sizes = [2, 8, 8], strides = [1, 1, 1]} : vector<2x8x96xf32> to vector<2x8x8xf32>
    %34 = vector.extract_strided_slice %32 {offsets = [0, 0, 8], sizes = [2, 8, 8], strides = [1, 1, 1]} : vector<2x8x96xf32> to vector<2x8x8xf32>
    %35 = vector.extract_strided_slice %32 {offsets = [0, 0, 16], sizes = [2, 8, 8], strides = [1, 1, 1]} : vector<2x8x96xf32> to vector<2x8x8xf32>
    %36 = vector.extract_strided_slice %32 {offsets = [0, 0, 24], sizes = [2, 8, 8], strides = [1, 1, 1]} : vector<2x8x96xf32> to vector<2x8x8xf32>
    %37 = tpu.concatenate %33, %34, %35, %36 in 0 : vector<2x8x8xf32>, vector<2x8x8xf32>, vector<2x8x8xf32>, vector<2x8x8xf32> -> vector<8x8x8xf32>
    %38 = vector.extract_strided_slice %32 {offsets = [0, 0, 32], sizes = [2, 8, 8], strides = [1, 1, 1]} : vector<2x8x96xf32> to vector<2x8x8xf32>
    %39 = vector.extract_strided_slice %32 {offsets = [0, 0, 40], sizes = [2, 8, 8], strides = [1, 1, 1]} : vector<2x8x96xf32> to vector<2x8x8xf32>
    %40 = vector.extract_strided_slice %32 {offsets = [0, 0, 48], sizes = [2, 8, 8], strides = [1, 1, 1]} : vector<2x8x96xf32> to vector<2x8x8xf32>
    %41 = vector.extract_strided_slice %32 {offsets = [0, 0, 56], sizes = [2, 8, 8], strides = [1, 1, 1]} : vector<2x8x96xf32> to vector<2x8x8xf32>
    %42 = tpu.concatenate %38, %39, %40, %41 in 0 : vector<2x8x8xf32>, vector<2x8x8xf32>, vector<2x8x8xf32>, vector<2x8x8xf32> -> vector<8x8x8xf32>
    %43 = vector.extract_strided_slice %32 {offsets = [0, 0, 64], sizes = [2, 8, 8], strides = [1, 1, 1]} : vector<2x8x96xf32> to vector<2x8x8xf32>
    %44 = vector.extract_strided_slice %32 {offsets = [0, 0, 72], sizes = [2, 8, 8], strides = [1, 1, 1]} : vector<2x8x96xf32> to vector<2x8x8xf32>
    %45 = vector.extract_strided_slice %32 {offsets = [0, 0, 80], sizes = [2, 8, 8], strides = [1, 1, 1]} : vector<2x8x96xf32> to vector<2x8x8xf32>
    %46 = vector.extract_strided_slice %32 {offsets = [0, 0, 88], sizes = [2, 8, 8], strides = [1, 1, 1]} : vector<2x8x96xf32> to vector<2x8x8xf32>
    %47 = tpu.concatenate %43, %44, %45, %46 in 0 : vector<2x8x8xf32>, vector<2x8x8xf32>, vector<2x8x8xf32>, vector<2x8x8xf32> -> vector<8x8x8xf32>
    %c0_18 = arith.constant 0 : index
    %c0_19 = arith.constant 0 : index
    %c0_20 = arith.constant 0 : index
    %48 = vector.load %arg6[%c0_18, %c0_19, %c0_20] : memref<8x8x32xbf16, #tpu.memory_space<vmem>>, vector<8x8x32xbf16>
    %c0_21 = arith.constant 0 : index
    %c0_22 = arith.constant 0 : index
    %49 = vector.load %arg7[%c0_21, %c0_22] : memref<1x32xf32, #tpu.memory_space<vmem>>, vector<1x32xf32>
    %50 = arith.truncf %37 : vector<8x8x8xf32> to vector<8x8x8xbf16>
    %51 = arith.truncf %42 : vector<8x8x8xf32> to vector<8x8x8xbf16>
    "tpu.trace_start"() <{level = 10 : i32, message = "gqd,gkd->gqk"}> : () -> ()
    %cst_23 = arith.constant dense<0.000000e+00> : vector<8x8x8xf32>
    %52 = tpu.matmul %50, %51, %cst_23 {dimension_numbers = #tpu.dot_dimension_numbers<[2], [2], [1], [1], [0, 0, 0, 1, 1, 1], [0], [0]>} : vector<8x8x8xbf16>, vector<8x8x8xbf16>, vector<8x8x8xf32> -> vector<8x8x8xf32>
    "tpu.trace_stop"() : () -> ()
    %cst_24 = arith.constant 0.353553385 : f32
    %53 = vector.broadcast %cst_24 : f32 to vector<8x8x8xf32>
    %54 = arith.mulf %52, %53 : vector<8x8x8xf32>
    %cst_25 = arith.constant dense<0xFF800000> : vector<8x8xf32>
    %55 = vector.multi_reduction <maximumf>, %54, %cst_25 [2] : vector<8x8x8xf32> to vector<8x8xf32>
    %56 = vector.shape_cast %55 : vector<8x8xf32> to vector<8x8x1xf32>
    %57 = vector.broadcast %56 : vector<8x8x1xf32> to vector<8x8x8xf32>
    %58 = arith.subf %54, %57 : vector<8x8x8xf32>
    %59 = math.exp %58 : vector<8x8x8xf32>
    %cst_26 = arith.constant dense<0.000000e+00> : vector<8x8xf32>
    %60 = vector.multi_reduction <add>, %59, %cst_26 [2] : vector<8x8x8xf32> to vector<8x8xf32>
    %61 = vector.shape_cast %60 : vector<8x8xf32> to vector<8x8x1xf32>
    %62 = tpu.reciprocal %61 {approx = true} : vector<8x8x1xf32> -> vector<8x8x1xf32>
    %63 = vector.broadcast %62 : vector<8x8x1xf32> to vector<8x8x8xf32>
    %64 = arith.mulf %59, %63 : vector<8x8x8xf32>
    %65 = arith.truncf %64 : vector<8x8x8xf32> to vector<8x8x8xbf16>
    %66 = arith.truncf %47 : vector<8x8x8xf32> to vector<8x8x8xbf16>
    "tpu.trace_start"() <{level = 10 : i32, message = "gqk,gkd->gqd"}> : () -> ()
    %cst_27 = arith.constant dense<0.000000e+00> : vector<8x8x8xf32>
    %67 = tpu.matmul %65, %66, %cst_27 {dimension_numbers = #tpu.dot_dimension_numbers<[2], [1], [1], [2], [0, 0, 0, 1, 1, 2], [0], [0]>} : vector<8x8x8xbf16>, vector<8x8x8xbf16>, vector<8x8x8xf32> -> vector<8x8x8xf32>
    "tpu.trace_stop"() : () -> ()
    %68 = arith.truncf %67 : vector<8x8x8xf32> to vector<8x8x8xbf16>
    "tpu.trace_start"() <{level = 10 : i32, message = "gqd,gdf->gqf"}> : () -> ()
    %cst_28 = arith.constant dense<0.000000e+00> : vector<8x8x32xf32>
    %69 = tpu.matmul %68, %48, %cst_28 {dimension_numbers = #tpu.dot_dimension_numbers<[2], [1], [1], [2], [0, 0, 0, 1, 1, 2], [0], [0]>} : vector<8x8x8xbf16>, vector<8x8x32xbf16>, vector<8x8x32xf32> -> vector<8x8x32xf32>
    "tpu.trace_stop"() : () -> ()
    %70 = vector.extract_strided_slice %69 {offsets = [0, 0, 0], sizes = [2, 8, 32], strides = [1, 1, 1]} : vector<8x8x32xf32> to vector<2x8x32xf32>
    %71 = vector.extract_strided_slice %69 {offsets = [2, 0, 0], sizes = [2, 8, 32], strides = [1, 1, 1]} : vector<8x8x32xf32> to vector<2x8x32xf32>
    %72 = arith.addf %70, %71 : vector<2x8x32xf32>
    %73 = vector.extract_strided_slice %69 {offsets = [4, 0, 0], sizes = [2, 8, 32], strides = [1, 1, 1]} : vector<8x8x32xf32> to vector<2x8x32xf32>
    %74 = arith.addf %72, %73 : vector<2x8x32xf32>
    %75 = vector.extract_strided_slice %69 {offsets = [6, 0, 0], sizes = [2, 8, 32], strides = [1, 1, 1]} : vector<8x8x32xf32> to vector<2x8x32xf32>
    %76 = arith.addf %74, %75 : vector<2x8x32xf32>
    %77 = vector.shape_cast %76 : vector<2x8x32xf32> to vector<16x32xf32>
    %78 = vector.broadcast %49 : vector<1x32xf32> to vector<16x32xf32>
    %79 = arith.addf %77, %78 : vector<16x32xf32>
    %80 = arith.addf %1, %79 : vector<16x32xf32>
    %c0_29 = arith.constant 0 : index
    %c0_30 = arith.constant 0 : index
    %81 = vector.load %arg8[%c0_29, %c0_30] : memref<1x32xf32, #tpu.memory_space<vmem>>, vector<1x32xf32>
    %c0_31 = arith.constant 0 : index
    %c0_32 = arith.constant 0 : index
    %82 = vector.load %arg9[%c0_31, %c0_32] : memref<1x32xf32, #tpu.memory_space<vmem>>, vector<1x32xf32>
    %cst_33 = arith.constant dense<0.000000e+00> : vector<16xf32>
    %83 = vector.multi_reduction <add>, %80, %cst_33 [1] : vector<16x32xf32> to vector<16xf32>
    %84 = vector.shape_cast %83 : vector<16xf32> to vector<16x1xf32>
    %cst_34 = arith.constant 3.200000e+01 : f32
    %85 = vector.broadcast %cst_34 : f32 to vector<16x1xf32>
    %86 = arith.divf %84, %85 : vector<16x1xf32>
    %87 = vector.broadcast %86 : vector<16x1xf32> to vector<16x32xf32>
    %88 = arith.subf %80, %87 : vector<16x32xf32>
    %89 = arith.mulf %88, %88 : vector<16x32xf32>
    %cst_35 = arith.constant dense<0.000000e+00> : vector<16xf32>
    %90 = vector.multi_reduction <add>, %89, %cst_35 [1] : vector<16x32xf32> to vector<16xf32>
    %91 = vector.shape_cast %90 : vector<16xf32> to vector<16x1xf32>
    %cst_36 = arith.constant 3.200000e+01 : f32
    %92 = vector.broadcast %cst_36 : f32 to vector<16x1xf32>
    %93 = arith.divf %91, %92 : vector<16x1xf32>
    %cst_37 = arith.constant 9.99999974E-6 : f32
    %94 = vector.broadcast %cst_37 : f32 to vector<16x1xf32>
    %95 = arith.addf %93, %94 : vector<16x1xf32>
    %96 = math.rsqrt %95 : vector<16x1xf32>
    %97 = vector.broadcast %96 : vector<16x1xf32> to vector<16x32xf32>
    %98 = arith.mulf %88, %97 : vector<16x32xf32>
    %99 = vector.broadcast %81 : vector<1x32xf32> to vector<16x32xf32>
    %100 = arith.mulf %98, %99 : vector<16x32xf32>
    %101 = vector.broadcast %82 : vector<1x32xf32> to vector<16x32xf32>
    %102 = arith.addf %100, %101 : vector<16x32xf32>
    %103 = arith.truncf %102 : vector<16x32xf32> to vector<16x32xbf16>
    %c0_38 = arith.constant 0 : index
    %c0_39 = arith.constant 0 : index
    %104 = vector.load %arg10[%c0_38, %c0_39] : memref<32x32xbf16, #tpu.memory_space<vmem>>, vector<32x32xbf16>
    %cst_40 = arith.constant dense<0.000000e+00> : vector<16x32xf32>
    %105 = tpu.matmul %103, %104, %cst_40 {dimension_numbers = #tpu.dot_dimension_numbers<[1], [0], [0], [1], [0, 0, 1, 1], [], []>} : vector<16x32xbf16>, vector<32x32xbf16>, vector<16x32xf32> -> vector<16x32xf32>
    %c0_41 = arith.constant 0 : index
    %c0_42 = arith.constant 0 : index
    %106 = vector.load %arg11[%c0_41, %c0_42] : memref<1x32xf32, #tpu.memory_space<vmem>>, vector<1x32xf32>
    %107 = vector.broadcast %106 : vector<1x32xf32> to vector<16x32xf32>
    %108 = arith.addf %105, %107 : vector<16x32xf32>
    %109 = arith.truncf %3 : vector<32x32xf32> to vector<32x32xbf16>
    %c0_43 = arith.constant 0 : index
    %c0_44 = arith.constant 0 : index
    %110 = vector.load %arg12[%c0_43, %c0_44] : memref<32x64xbf16, #tpu.memory_space<vmem>>, vector<32x64xbf16>
    %cst_45 = arith.constant dense<0.000000e+00> : vector<32x64xf32>
    %111 = tpu.matmul %109, %110, %cst_45 {dimension_numbers = #tpu.dot_dimension_numbers<[1], [0], [0], [1], [0, 0, 1, 1], [], []>} : vector<32x32xbf16>, vector<32x64xbf16>, vector<32x64xf32> -> vector<32x64xf32>
    %c0_46 = arith.constant 0 : index
    %c0_47 = arith.constant 0 : index
    %112 = vector.load %arg13[%c0_46, %c0_47] : memref<1x64xf32, #tpu.memory_space<vmem>>, vector<1x64xf32>
    %113 = vector.broadcast %112 : vector<1x64xf32> to vector<32x64xf32>
    %114 = arith.addf %111, %113 : vector<32x64xf32>
    %115 = vector.shape_cast %108 : vector<16x32xf32> to vector<2x8x32xf32>
    %116 = vector.shape_cast %114 : vector<32x64xf32> to vector<2x16x64xf32>
    %117 = vector.extract_strided_slice %115 {offsets = [0, 0, 0], sizes = [2, 8, 8], strides = [1, 1, 1]} : vector<2x8x32xf32> to vector<2x8x8xf32>
    %118 = vector.extract_strided_slice %115 {offsets = [0, 0, 8], sizes = [2, 8, 8], strides = [1, 1, 1]} : vector<2x8x32xf32> to vector<2x8x8xf32>
    %119 = vector.extract_strided_slice %115 {offsets = [0, 0, 16], sizes = [2, 8, 8], strides = [1, 1, 1]} : vector<2x8x32xf32> to vector<2x8x8xf32>
    %120 = vector.extract_strided_slice %115 {offsets = [0, 0, 24], sizes = [2, 8, 8], strides = [1, 1, 1]} : vector<2x8x32xf32> to vector<2x8x8xf32>
    %121 = tpu.concatenate %117, %118, %119, %120 in 0 : vector<2x8x8xf32>, vector<2x8x8xf32>, vector<2x8x8xf32>, vector<2x8x8xf32> -> vector<8x8x8xf32>
    %122 = vector.extract_strided_slice %116 {offsets = [0, 0, 0], sizes = [2, 16, 8], strides = [1, 1, 1]} : vector<2x16x64xf32> to vector<2x16x8xf32>
    %123 = vector.extract_strided_slice %116 {offsets = [0, 0, 8], sizes = [2, 16, 8], strides = [1, 1, 1]} : vector<2x16x64xf32> to vector<2x16x8xf32>
    %124 = vector.extract_strided_slice %116 {offsets = [0, 0, 16], sizes = [2, 16, 8], strides = [1, 1, 1]} : vector<2x16x64xf32> to vector<2x16x8xf32>
    %125 = vector.extract_strided_slice %116 {offsets = [0, 0, 24], sizes = [2, 16, 8], strides = [1, 1, 1]} : vector<2x16x64xf32> to vector<2x16x8xf32>
    %126 = tpu.concatenate %122, %123, %124, %125 in 0 : vector<2x16x8xf32>, vector<2x16x8xf32>, vector<2x16x8xf32>, vector<2x16x8xf32> -> vector<8x16x8xf32>
    %127 = vector.extract_strided_slice %116 {offsets = [0, 0, 32], sizes = [2, 16, 8], strides = [1, 1, 1]} : vector<2x16x64xf32> to vector<2x16x8xf32>
    %128 = vector.extract_strided_slice %116 {offsets = [0, 0, 40], sizes = [2, 16, 8], strides = [1, 1, 1]} : vector<2x16x64xf32> to vector<2x16x8xf32>
    %129 = vector.extract_strided_slice %116 {offsets = [0, 0, 48], sizes = [2, 16, 8], strides = [1, 1, 1]} : vector<2x16x64xf32> to vector<2x16x8xf32>
    %130 = vector.extract_strided_slice %116 {offsets = [0, 0, 56], sizes = [2, 16, 8], strides = [1, 1, 1]} : vector<2x16x64xf32> to vector<2x16x8xf32>
    %131 = tpu.concatenate %127, %128, %129, %130 in 0 : vector<2x16x8xf32>, vector<2x16x8xf32>, vector<2x16x8xf32>, vector<2x16x8xf32> -> vector<8x16x8xf32>
    %c0_48 = arith.constant 0 : index
    %c0_49 = arith.constant 0 : index
    %c0_50 = arith.constant 0 : index
    %132 = vector.load %arg14[%c0_48, %c0_49, %c0_50] : memref<8x8x32xbf16, #tpu.memory_space<vmem>>, vector<8x8x32xbf16>
    %c0_51 = arith.constant 0 : index
    %c0_52 = arith.constant 0 : index
    %133 = vector.load %arg15[%c0_51, %c0_52] : memref<1x32xf32, #tpu.memory_space<vmem>>, vector<1x32xf32>
    %134 = arith.truncf %121 : vector<8x8x8xf32> to vector<8x8x8xbf16>
    %135 = arith.truncf %126 : vector<8x16x8xf32> to vector<8x16x8xbf16>
    "tpu.trace_start"() <{level = 10 : i32, message = "gqd,gkd->gqk"}> : () -> ()
    %cst_53 = arith.constant dense<0.000000e+00> : vector<8x8x16xf32>
    %136 = tpu.matmul %134, %135, %cst_53 {dimension_numbers = #tpu.dot_dimension_numbers<[2], [2], [1], [1], [0, 0, 0, 1, 1, 1], [0], [0]>} : vector<8x8x8xbf16>, vector<8x16x8xbf16>, vector<8x8x16xf32> -> vector<8x8x16xf32>
    "tpu.trace_stop"() : () -> ()
    %cst_54 = arith.constant 0.353553385 : f32
    %137 = vector.broadcast %cst_54 : f32 to vector<8x8x16xf32>
    %138 = arith.mulf %136, %137 : vector<8x8x16xf32>
    %cst_55 = arith.constant dense<0xFF800000> : vector<8x8xf32>
    %139 = vector.multi_reduction <maximumf>, %138, %cst_55 [2] : vector<8x8x16xf32> to vector<8x8xf32>
    %140 = vector.shape_cast %139 : vector<8x8xf32> to vector<8x8x1xf32>
    %141 = vector.broadcast %140 : vector<8x8x1xf32> to vector<8x8x16xf32>
    %142 = arith.subf %138, %141 : vector<8x8x16xf32>
    %143 = math.exp %142 : vector<8x8x16xf32>
    %cst_56 = arith.constant dense<0.000000e+00> : vector<8x8xf32>
    %144 = vector.multi_reduction <add>, %143, %cst_56 [2] : vector<8x8x16xf32> to vector<8x8xf32>
    %145 = vector.shape_cast %144 : vector<8x8xf32> to vector<8x8x1xf32>
    %146 = tpu.reciprocal %145 {approx = true} : vector<8x8x1xf32> -> vector<8x8x1xf32>
    %147 = vector.broadcast %146 : vector<8x8x1xf32> to vector<8x8x16xf32>
    %148 = arith.mulf %143, %147 : vector<8x8x16xf32>
    %149 = arith.truncf %148 : vector<8x8x16xf32> to vector<8x8x16xbf16>
    %150 = arith.truncf %131 : vector<8x16x8xf32> to vector<8x16x8xbf16>
    "tpu.trace_start"() <{level = 10 : i32, message = "gqk,gkd->gqd"}> : () -> ()
    %cst_57 = arith.constant dense<0.000000e+00> : vector<8x8x8xf32>
    %151 = tpu.matmul %149, %150, %cst_57 {dimension_numbers = #tpu.dot_dimension_numbers<[2], [1], [1], [2], [0, 0, 0, 1, 1, 2], [0], [0]>} : vector<8x8x16xbf16>, vector<8x16x8xbf16>, vector<8x8x8xf32> -> vector<8x8x8xf32>
    "tpu.trace_stop"() : () -> ()
    %152 = arith.truncf %151 : vector<8x8x8xf32> to vector<8x8x8xbf16>
    "tpu.trace_start"() <{level = 10 : i32, message = "gqd,gdf->gqf"}> : () -> ()
    %cst_58 = arith.constant dense<0.000000e+00> : vector<8x8x32xf32>
    %153 = tpu.matmul %152, %132, %cst_58 {dimension_numbers = #tpu.dot_dimension_numbers<[2], [1], [1], [2], [0, 0, 0, 1, 1, 2], [0], [0]>} : vector<8x8x8xbf16>, vector<8x8x32xbf16>, vector<8x8x32xf32> -> vector<8x8x32xf32>
    "tpu.trace_stop"() : () -> ()
    %154 = vector.extract_strided_slice %153 {offsets = [0, 0, 0], sizes = [2, 8, 32], strides = [1, 1, 1]} : vector<8x8x32xf32> to vector<2x8x32xf32>
    %155 = vector.extract_strided_slice %153 {offsets = [2, 0, 0], sizes = [2, 8, 32], strides = [1, 1, 1]} : vector<8x8x32xf32> to vector<2x8x32xf32>
    %156 = arith.addf %154, %155 : vector<2x8x32xf32>
    %157 = vector.extract_strided_slice %153 {offsets = [4, 0, 0], sizes = [2, 8, 32], strides = [1, 1, 1]} : vector<8x8x32xf32> to vector<2x8x32xf32>
    %158 = arith.addf %156, %157 : vector<2x8x32xf32>
    %159 = vector.extract_strided_slice %153 {offsets = [6, 0, 0], sizes = [2, 8, 32], strides = [1, 1, 1]} : vector<8x8x32xf32> to vector<2x8x32xf32>
    %160 = arith.addf %158, %159 : vector<2x8x32xf32>
    %161 = vector.shape_cast %160 : vector<2x8x32xf32> to vector<16x32xf32>
    %162 = vector.broadcast %133 : vector<1x32xf32> to vector<16x32xf32>
    %163 = arith.addf %161, %162 : vector<16x32xf32>
    %164 = arith.addf %80, %163 : vector<16x32xf32>
    %c0_59 = arith.constant 0 : index
    %c0_60 = arith.constant 0 : index
    %165 = vector.load %arg16[%c0_59, %c0_60] : memref<1x32xf32, #tpu.memory_space<vmem>>, vector<1x32xf32>
    %c0_61 = arith.constant 0 : index
    %c0_62 = arith.constant 0 : index
    %166 = vector.load %arg17[%c0_61, %c0_62] : memref<1x32xf32, #tpu.memory_space<vmem>>, vector<1x32xf32>
    %cst_63 = arith.constant dense<0.000000e+00> : vector<16xf32>
    %167 = vector.multi_reduction <add>, %164, %cst_63 [1] : vector<16x32xf32> to vector<16xf32>
    %168 = vector.shape_cast %167 : vector<16xf32> to vector<16x1xf32>
    %cst_64 = arith.constant 3.200000e+01 : f32
    %169 = vector.broadcast %cst_64 : f32 to vector<16x1xf32>
    %170 = arith.divf %168, %169 : vector<16x1xf32>
    %171 = vector.broadcast %170 : vector<16x1xf32> to vector<16x32xf32>
    %172 = arith.subf %164, %171 : vector<16x32xf32>
    %173 = arith.mulf %172, %172 : vector<16x32xf32>
    %cst_65 = arith.constant dense<0.000000e+00> : vector<16xf32>
    %174 = vector.multi_reduction <add>, %173, %cst_65 [1] : vector<16x32xf32> to vector<16xf32>
    %175 = vector.shape_cast %174 : vector<16xf32> to vector<16x1xf32>
    %cst_66 = arith.constant 3.200000e+01 : f32
    %176 = vector.broadcast %cst_66 : f32 to vector<16x1xf32>
    %177 = arith.divf %175, %176 : vector<16x1xf32>
    %cst_67 = arith.constant 9.99999974E-6 : f32
    %178 = vector.broadcast %cst_67 : f32 to vector<16x1xf32>
    %179 = arith.addf %177, %178 : vector<16x1xf32>
    %180 = math.rsqrt %179 : vector<16x1xf32>
    %181 = vector.broadcast %180 : vector<16x1xf32> to vector<16x32xf32>
    %182 = arith.mulf %172, %181 : vector<16x32xf32>
    %183 = vector.broadcast %165 : vector<1x32xf32> to vector<16x32xf32>
    %184 = arith.mulf %182, %183 : vector<16x32xf32>
    %185 = vector.broadcast %166 : vector<1x32xf32> to vector<16x32xf32>
    %186 = arith.addf %184, %185 : vector<16x32xf32>
    %187 = arith.truncf %186 : vector<16x32xf32> to vector<16x32xbf16>
    %c0_68 = arith.constant 0 : index
    %c0_69 = arith.constant 0 : index
    %188 = vector.load %arg18[%c0_68, %c0_69] : memref<32x64xbf16, #tpu.memory_space<vmem>>, vector<32x64xbf16>
    %cst_70 = arith.constant dense<0.000000e+00> : vector<16x64xf32>
    %189 = tpu.matmul %187, %188, %cst_70 {dimension_numbers = #tpu.dot_dimension_numbers<[1], [0], [0], [1], [0, 0, 1, 1], [], []>} : vector<16x32xbf16>, vector<32x64xbf16>, vector<16x64xf32> -> vector<16x64xf32>
    %c0_71 = arith.constant 0 : index
    %c0_72 = arith.constant 0 : index
    %190 = vector.load %arg19[%c0_71, %c0_72] : memref<1x64xf32, #tpu.memory_space<vmem>>, vector<1x64xf32>
    %191 = vector.broadcast %190 : vector<1x64xf32> to vector<16x64xf32>
    %192 = arith.addf %189, %191 : vector<16x64xf32>
    %cst_73 = arith.constant 5.000000e-01 : f32
    %193 = vector.broadcast %cst_73 : f32 to vector<16x64xf32>
    %194 = arith.mulf %193, %192 : vector<16x64xf32>
    %cst_74 = arith.constant 0.707106769 : f32
    %195 = vector.broadcast %cst_74 : f32 to vector<16x64xf32>
    %196 = arith.mulf %192, %195 : vector<16x64xf32>
    %197 = math.erf %196 : vector<16x64xf32>
    %cst_75 = arith.constant 1.000000e+00 : f32
    %198 = vector.broadcast %cst_75 : f32 to vector<16x64xf32>
    %199 = arith.addf %198, %197 : vector<16x64xf32>
    %200 = arith.mulf %194, %199 : vector<16x64xf32>
    %201 = arith.truncf %200 : vector<16x64xf32> to vector<16x64xbf16>
    %c0_76 = arith.constant 0 : index
    %c0_77 = arith.constant 0 : index
    %202 = vector.load %arg20[%c0_76, %c0_77] : memref<64x32xbf16, #tpu.memory_space<vmem>>, vector<64x32xbf16>
    %cst_78 = arith.constant dense<0.000000e+00> : vector<16x32xf32>
    %203 = tpu.matmul %201, %202, %cst_78 {dimension_numbers = #tpu.dot_dimension_numbers<[1], [0], [0], [1], [0, 0, 1, 1], [], []>} : vector<16x64xbf16>, vector<64x32xbf16>, vector<16x32xf32> -> vector<16x32xf32>
    %c0_79 = arith.constant 0 : index
    %c0_80 = arith.constant 0 : index
    %204 = vector.load %arg21[%c0_79, %c0_80] : memref<1x32xf32, #tpu.memory_space<vmem>>, vector<1x32xf32>
    %205 = vector.broadcast %204 : vector<1x32xf32> to vector<16x32xf32>
    %206 = arith.addf %203, %205 : vector<16x32xf32>
    %207 = arith.addf %164, %206 : vector<16x32xf32>
    %208 = vector.shape_cast %207 : vector<16x32xf32> to vector<2x8x32xf32>
    %c0_81 = arith.constant 0 : index
    %c0_82 = arith.constant 0 : index
    %c0_83 = arith.constant 0 : index
    %209 = vector.load %arg22[%c0_81, %c0_82, %c0_83] : memref<2x8x32xf32, #tpu.memory_space<vmem>>, vector<2x8x32xf32>
    tpu.vector_store %arg22[%c0_81, %c0_82, %c0_83], %208 {strides = array<i32>} : memref<2x8x32xf32, #tpu.memory_space<vmem>>, vector<2x8x32xf32>,
    return
  }
}

</mosaic_0001>

<llo_original>
// kernel: qformer_layer.1
$region0: #{qformer_layer.1}
  #allocation0 [shape = 'u32[]', space=smem, size = 0x4, offset = 0x4, fixed_abs, tag = 'smem constant byte address 0x4 - core index']
  #allocation1 [shape = 'u32[144,128]{1,0:T(1,128)}', space=vmem, size = 0x12000, scoped, tag = 'internal scratch']
  %s0 = inlined_call_operand.vmem [shape: f32[2,8,32], index: 0, kind: input, shape index: {}]
  %s1 = inlined_call_operand.vmem [shape: f32[2,16,32], index: 1, kind: input, shape index: {}]
  %s2 = inlined_call_operand.vmem [shape: f32[1,32], index: 2, kind: input, shape index: {}]
  %s3 = inlined_call_operand.vmem [shape: f32[1,32], index: 3, kind: input, shape index: {}]
  %s4 = inlined_call_operand.vmem [shape: bf16[32,96], index: 4, kind: input, shape index: {}]
  %s5 = inlined_call_operand.vmem [shape: f32[1,96], index: 5, kind: input, shape index: {}]
  %s6 = inlined_call_operand.vmem [shape: bf16[8,8,32], index: 6, kind: input, shape index: {}]
  %s7 = inlined_call_operand.vmem [shape: f32[1,32], index: 7, kind: input, shape index: {}]
  %s8 = inlined_call_operand.vmem [shape: f32[1,32], index: 8, kind: input, shape index: {}]
  %s9 = inlined_call_operand.vmem [shape: f32[1,32], index: 9, kind: input, shape index: {}]
  %s10 = inlined_call_operand.vmem [shape: bf16[32,32], index: 10, kind: input, shape index: {}]
  %s11 = inlined_call_operand.vmem [shape: f32[1,32], index: 11, kind: input, shape index: {}]
  %s12 = inlined_call_operand.vmem [shape: bf16[32,64], index: 12, kind: input, shape index: {}]
  %s13 = inlined_call_operand.vmem [shape: f32[1,64], index: 13, kind: input, shape index: {}]
  %s14 = inlined_call_operand.vmem [shape: bf16[8,8,32], index: 14, kind: input, shape index: {}]
  %s15 = inlined_call_operand.vmem [shape: f32[1,32], index: 15, kind: input, shape index: {}]
  %s16 = inlined_call_operand.vmem [shape: f32[1,32], index: 16, kind: input, shape index: {}]
  %s17 = inlined_call_operand.vmem [shape: f32[1,32], index: 17, kind: input, shape index: {}]
  %s18 = inlined_call_operand.vmem [shape: bf16[32,64], index: 18, kind: input, shape index: {}]
  %s19 = inlined_call_operand.vmem [shape: f32[1,64], index: 19, kind: input, shape index: {}]
  %s20 = inlined_call_operand.vmem [shape: bf16[64,32], index: 20, kind: input, shape index: {}]
  %s21 = inlined_call_operand.vmem [shape: f32[1,32], index: 21, kind: input, shape index: {}]
  %s22 = inlined_call_operand.hbm [shape: f32[2,8,32], index: 22, kind: output, shape index: {}]
  %s23 = sld [smem:[#allocation0]]
  $region98: #{qformer_layer.1} parent=0
    _
  %s25 = ssub.s32 1, %s23
  %s26 = scalar_select 0, %s25, %s23
  $region1: #{qformer_layer.1} parent=0
    #allocation2 [shape = 'u8[8192]{0}', space=vmem, size = 0x2000, scoped, tag = 'output window, operand 0, single buffered']
    #allocation3 [shape = 's32[1]{0}', space=sflag, size = 0x4, scoped, tag = 'scoped memory for qformer_layer.1']
    %27 = vsyncpa [#allocation3], 0
    // Predicated region
    $region2: #{qformer_layer.1} parent=1 // pred_check
      _
    $region3: #{qformer_layer.1} parent=1 // pred_check_branch
      %29 = sbr.rel (0) target = $region5
    $region4: #{qformer_layer.1} parent=1 // pred_region
      _
    $region5: #{qformer_layer.1} parent=1 // pred_fallthru
      _
    // Predicated region
    $region6: #{qformer_layer.1} parent=1 // pred_check
      _
    $region7: #{qformer_layer.1} parent=1 // pred_check_branch
      %31 = sbr.rel (0) target = $region9
    $region8: #{qformer_layer.1} parent=1 // pred_region
      _
    $region9: #{qformer_layer.1} parent=1 // pred_fallthru
      _
    // Predicated region
    $region10: #{qformer_layer.1} parent=1 // pred_check
      _
    $region11: #{qformer_layer.1} parent=1 // pred_check_branch
      %33 = sbr.rel (0) target = $region13
    $region12: #{qformer_layer.1} parent=1 // pred_region
      _
    $region13: #{qformer_layer.1} parent=1 // pred_fallthru
      _
    // Predicated region
    $region14: #{qformer_layer.1} parent=1 // pred_check
      _
    $region15: #{qformer_layer.1} parent=1 // pred_check_branch
      %35 = sbr.rel (0) target = $region17
    $region16: #{qformer_layer.1} parent=1 // pred_region
      _
    $region17: #{qformer_layer.1} parent=1 // pred_fallthru
      _
    // Predicated region
    $region18: #{qformer_layer.1} parent=1 // pred_check
      _
    $region19: #{qformer_layer.1} parent=1 // pred_check_branch
      %37 = sbr.rel (0) target = $region21
    $region20: #{qformer_layer.1} parent=1 // pred_region
      _
    $region21: #{qformer_layer.1} parent=1 // pred_fallthru
      _
    // Predicated region
    $region22: #{qformer_layer.1} parent=1 // pred_check
      _
    $region23: #{qformer_layer.1} parent=1 // pred_check_branch
      %39 = sbr.rel (0) target = $region25
    $region24: #{qformer_layer.1} parent=1 // pred_region
      _
    $region25: #{qformer_layer.1} parent=1 // pred_fallthru
      _
    // Predicated region
    $region26: #{qformer_layer.1} parent=1 // pred_check
      _
    $region27: #{qformer_layer.1} parent=1 // pred_check_branch
      %41 = sbr.rel (0) target = $region29
    $region28: #{qformer_layer.1} parent=1 // pred_region
      _
    $region29: #{qformer_layer.1} parent=1 // pred_fallthru
      _
    // Predicated region
    $region30: #{qformer_layer.1} parent=1 // pred_check
      _
    $region31: #{qformer_layer.1} parent=1 // pred_check_branch
      %43 = sbr.rel (0) target = $region33
    $region32: #{qformer_layer.1} parent=1 // pred_region
      _
    $region33: #{qformer_layer.1} parent=1 // pred_fallthru
      _
    // Predicated region
    $region34: #{qformer_layer.1} parent=1 // pred_check
      _
    $region35: #{qformer_layer.1} parent=1 // pred_check_branch
      %45 = sbr.rel (0) target = $region37
    $region36: #{qformer_layer.1} parent=1 // pred_region
      _
    $region37: #{qformer_layer.1} parent=1 // pred_fallthru
      _
    // Predicated region
    $region38: #{qformer_layer.1} parent=1 // pred_check
      _
    $region39: #{qformer_layer.1} parent=1 // pred_check_branch
      %47 = sbr.rel (0) target = $region41
    $region40: #{qformer_layer.1} parent=1 // pred_region
      _
    $region41: #{qformer_layer.1} parent=1 // pred_fallthru
      _
    // Predicated region
    $region42: #{qformer_layer.1} parent=1 // pred_check
      _
    $region43: #{qformer_layer.1} parent=1 // pred_check_branch
      %49 = sbr.rel (0) target = $region45
    $region44: #{qformer_layer.1} parent=1 // pred_region
      _
    $region45: #{qformer_layer.1} parent=1 // pred_fallthru
      _
    // Predicated region
    $region46: #{qformer_layer.1} parent=1 // pred_check
      _
    $region47: #{qformer_layer.1} parent=1 // pred_check_branch
      %51 = sbr.rel (0) target = $region49
    $region48: #{qformer_layer.1} parent=1 // pred_region
      _
    $region49: #{qformer_layer.1} parent=1 // pred_fallthru
      _
    // Predicated region
    $region50: #{qformer_layer.1} parent=1 // pred_check
      _
    $region51: #{qformer_layer.1} parent=1 // pred_check_branch
      %53 = sbr.rel (0) target = $region53
    $region52: #{qformer_layer.1} parent=1 // pred_region
      _
    $region53: #{qformer_layer.1} parent=1 // pred_fallthru
      _
    // Predicated region
    $region54: #{qformer_layer.1} parent=1 // pred_check
      _
    $region55: #{qformer_layer.1} parent=1 // pred_check_branch
      %55 = sbr.rel (0) target = $region57
    $region56: #{qformer_layer.1} parent=1 // pred_region
      _
    $region57: #{qformer_layer.1} parent=1 // pred_fallthru
      _
    // Predicated region
    $region58: #{qformer_layer.1} parent=1 // pred_check
      _
    $region59: #{qformer_layer.1} parent=1 // pred_check_branch
      %57 = sbr.rel (0) target = $region61
    $region60: #{qformer_layer.1} parent=1 // pred_region
      _
    $region61: #{qformer_layer.1} parent=1 // pred_fallthru
      _
    // Predicated region
    $region62: #{qformer_layer.1} parent=1 // pred_check
      _
    $region63: #{qformer_layer.1} parent=1 // pred_check_branch
      %59 = sbr.rel (0) target = $region65
    $region64: #{qformer_layer.1} parent=1 // pred_region
      _
    $region65: #{qformer_layer.1} parent=1 // pred_fallthru
      _
    // Predicated region
    $region66: #{qformer_layer.1} parent=1 // pred_check
      _
    $region67: #{qformer_layer.1} parent=1 // pred_check_branch
      %61 = sbr.rel (0) target = $region69
    $region68: #{qformer_layer.1} parent=1 // pred_region
      _
    $region69: #{qformer_layer.1} parent=1 // pred_fallthru
      _
    // Predicated region
    $region70: #{qformer_layer.1} parent=1 // pred_check
      _
    $region71: #{qformer_layer.1} parent=1 // pred_check_branch
      %63 = sbr.rel (0) target = $region73
    $region72: #{qformer_layer.1} parent=1 // pred_region
      _
    $region73: #{qformer_layer.1} parent=1 // pred_fallthru
      _
    // Predicated region
    $region74: #{qformer_layer.1} parent=1 // pred_check
      _
    $region75: #{qformer_layer.1} parent=1 // pred_check_branch
      %65 = sbr.rel (0) target = $region77
    $region76: #{qformer_layer.1} parent=1 // pred_region
      _
    $region77: #{qformer_layer.1} parent=1 // pred_fallthru
      _
    // Predicated region
    $region78: #{qformer_layer.1} parent=1 // pred_check
      _
    $region79: #{qformer_layer.1} parent=1 // pred_check_branch
      %67 = sbr.rel (0) target = $region81
    $region80: #{qformer_layer.1} parent=1 // pred_region
      _
    $region81: #{qformer_layer.1} parent=1 // pred_fallthru
      _
    // Predicated region
    $region82: #{qformer_layer.1} parent=1 // pred_check
      _
    $region83: #{qformer_layer.1} parent=1 // pred_check_branch
      %69 = sbr.rel (0) target = $region85
    $region84: #{qformer_layer.1} parent=1 // pred_region
      _
    $region85: #{qformer_layer.1} parent=1 // pred_fallthru
      _
    // Predicated region
    $region86: #{qformer_layer.1} parent=1 // pred_check
      _
    $region87: #{qformer_layer.1} parent=1 // pred_check_branch
      %71 = sbr.rel (0) target = $region89
    $region88: #{qformer_layer.1} parent=1 // pred_region
      _
    $region89: #{qformer_layer.1} parent=1 // pred_fallthru
      _
    %v73 = vld [vmem:[%s0] sm:$0xff]
    %v74 = vld [vmem:[%s0 + $0x8] sm:$0xff]
    %v75 = vld [vmem:[%s1] sm:$0xff]
    %v76 = vld [vmem:[%s1 + $0x8] sm:$0xff]
    %v77 = vld [vmem:[%s1 + $0x10] sm:$0xff]
    %v78 = vld [vmem:[%s1 + $0x18] sm:$0xff]
    %v79 = vld [vmem:[%s2] sm:$0x1]
    %v80 = vld [vmem:[%s3] sm:$0x1]
    %vm81 = vcmask 261120
    %v82 = vsel %vm81, %v73, 0.0
    %83 = vadd.xlane.f32.xlu0 %v82
    %v84 = vpop.xlane.xlu0 %83
    %v85 = vsel %vm81, %v74, 0.0
    %86 = vadd.xlane.f32.xlu0 %v85
    %v87 = vpop.xlane.xlu0 %86
    %v88 = vrcp.pop 32.0
    %v89 = vmul.f32 %v84, %v88
    %v90 = vmul.f32 %v87, %v88
    %v91 = vsub.f32 %v73, %v89
    %v92 = vsub.f32 %v74, %v90
    %v93 = vmul.f32 %v91, %v91
    %v94 = vmul.f32 %v92, %v92
    %v95 = vsel %vm81, %v93, 0.0
    %96 = vadd.xlane.f32.xlu0 %v95
    %v97 = vpop.xlane.xlu0 %96
    %v98 = vsel %vm81, %v94, 0.0
    %99 = vadd.xlane.f32.xlu0 %v98
    %v100 = vpop.xlane.xlu0 %99
    %v101 = vmul.f32 %v97, %v88
    %v102 = vmul.f32 %v100, %v88
    %v103 = vadd.f32 %v101, 1e-05
    %v104 = vadd.f32 %v102, 1e-05
    %v105 = vrsqrt.pop %v103
    %v106 = vrsqrt.pop %v104
    %v107 = vmul.f32 %v91, %v105
    %v108 = vmul.f32 %v92, %v106
    %v110 = vlaneseq
    %v111 = vshrl.u32 %v110, 7
    %v112 = vsub.s32 0, %v111
    %v113 = vrot.slane %v79, %v112
    %v115 = vmul.f32 %v107, %v113
    %v116 = vmul.f32 %v108, %v113
    %v118 = vlaneseq
    %v119 = vshrl.u32 %v118, 7
    %v120 = vsub.s32 0, %v119
    %v121 = vrot.slane %v80, %v120
    %v123 = vadd.f32 %v115, %v121
    %v124 = vadd.f32 %v116, %v121
    %v125 = vpack.c.bf16 %v124, %v123
    %v126 = vld [vmem:[%s4] sm:$0xf]
    %v127 = vld [vmem:[%s4 + $0x4] sm:$0xf]
    %v128 = vld [vmem:[%s4 + $0x8] sm:$0xf]
    %v129 = vld [vmem:[%s4 + $0xc] sm:$0xf]
    %v130 = vld [vmem:[%s5] sm:$0x1]
    %v132 = vlaneseq
    %v133 = vshrl.u32 %v132, 7
    %v134 = vsub.s32 0, %v133
    %v135 = vrot.slane %v130, %v134
    %v141 = vunpack.c.l.b16 %v126
    %v142 = vunpack.c.l.b16 %v127
    %v143 = vunpack.c.l.b16 %v128
    %v144 = vunpack.c.l.b16 %v129
    %v145 = vpack.c.b16 %v142, %v141
    %v146 = vpack.c.b16 %v144, %v143
    %v150 = vsel %vm81, %v125, 0
    %152 = vmatprep.subr.bf16.mxu0 0
    %153 = vmatpush1.bf16.msra.mxu0 %v145
    %154 = vmatprep.subr.bf16.mxu0 0
    %155 = vmatpush1.bf16.msra.mxu0 %v146
    %156 = vmatprep.subr.bf16.mxu0 0
    %157 = vmatpush1.bf16.msra.mxu0 0
    %158 = vmatprep.subr.bf16.mxu0 0
    %159 = vmatpush1.bf16.msra.mxu0 0
    %160 = vmatprep.subr.bf16.mxu0 0
    %161 = vmatpush1.bf16.msra.mxu0 0
    %162 = vmatprep.subr.bf16.mxu0 0
    %163 = vmatpush1.bf16.msra.mxu0 0
    %164 = vmatprep.subr.bf16.mxu0 0
    %165 = vmatpush1.bf16.msra.mxu0 0
    %166 = vmatprep.subr.bf16.mxu0 0
    %167 = vmatpush1.bf16.msra.mxu0 0
    %168 = vmatprep.subr.bf16.mxu0 0
    %169 = vmatpush1.bf16.msra.mxu0 0
    %170 = vmatprep.subr.bf16.mxu0 0
    %171 = vmatpush1.bf16.msra.mxu0 0
    %172 = vmatprep.subr.bf16.mxu0 0
    %173 = vmatpush1.bf16.msra.mxu0 0
    %174 = vmatprep.subr.bf16.mxu0 0
    %175 = vmatpush1.bf16.msra.mxu0 0
    %176 = vmatprep.subr.bf16.mxu0 0
    %177 = vmatpush1.bf16.msra.mxu0 0
    %178 = vmatprep.subr.bf16.mxu0 0
    %179 = vmatpush1.bf16.msra.mxu0 0
    %180 = vmatprep.subr.bf16.mxu0 0
    %181 = vmatpush1.bf16.msra.mxu0 0
    %182 = vmatprep.subr.bf16.mxu0 0
    %183 = vmatpush1.bf16.msra.mxu0 0
    %184 = vmatprep.mubr.bf16.mxu0 0
    %185 = vmatmul.mubr.bf16.gmra.mrb[0].mxu0 %v150
    %v186 = vpop.f32.mrb[0].mxu0
    %v187 = vadd.f32 %v135, %v186
    %v188 = vpop.f32.mrb[0].mxu0
    %v189 = vpop.f32.mrb[0].mxu0
    %v190 = vadd.f32 %v135, %v189
    %v191 = vpop.f32.mrb[0].mxu0
    %192 = vdwg.mxu0
    %195 = vrot.lane.b32.xlu0 %v187, 120
    %v196 = vpop.permute.xlu0 %195
    %197 = vrot.lane.b32.xlu0 %v190, 120
    %v198 = vpop.permute.xlu0 %197
    %201 = vrot.lane.b32.xlu0 %v187, 112
    %v202 = vpop.permute.xlu0 %201
    %203 = vrot.lane.b32.xlu0 %v190, 112
    %v204 = vpop.permute.xlu0 %203
    %207 = vrot.lane.b32.xlu0 %v187, 104
    %v208 = vpop.permute.xlu0 %207
    %209 = vrot.lane.b32.xlu0 %v190, 104
    %v210 = vpop.permute.xlu0 %209
    %v213 = vld [vmem:[%s6] sm:$0xf]
    %v214 = vld [vmem:[%s6 + $0x4] sm:$0xf]
    %v215 = vld [vmem:[%s6 + $0x8] sm:$0xf]
    %v216 = vld [vmem:[%s6 + $0xc] sm:$0xf]
    %v217 = vld [vmem:[%s6 + $0x10] sm:$0xf]
    %v218 = vld [vmem:[%s6 + $0x14] sm:$0xf]
    %v219 = vld [vmem:[%s6 + $0x18] sm:$0xf]
    %v220 = vld [vmem:[%s6 + $0x1c] sm:$0xf]
    %v221 = vld [vmem:[%s7] sm:$0x1]
    %v222 = vpack.c.bf16 %v187, %v187
    %v223 = vpack.c.bf16 %v190, %v190
    %v224 = vpack.c.bf16 %v196, %v196
    %v225 = vpack.c.bf16 %v198, %v198
    %v226 = vpack.c.bf16 %v202, %v202
    %v227 = vpack.c.bf16 %v204, %v204
    %v228 = vpack.c.bf16 %v208, %v208
    %v229 = vpack.c.bf16 %v210, %v210
    %231 = vrot.lane.b32.xlu0 %v222, 96
    %v232 = vpop.permute.xlu0 %231
    %vm233 = vcmask 64512
    %v235 = vsel %vm233, %v222, 0
    %v238 = vsel %vm233, %v232, 0
    %240 = vmatprep.subr.bf16.mxu0 0
    %241 = vmatpush1.bf16.xpose.msra.mxu0 %v238
    %242 = vmatprep.subr.bf16.mxu0 0
    %243 = vmatpush1.bf16.xpose.msra.mxu0 0
    %244 = vmatprep.subr.bf16.mxu0 0
    %245 = vmatpush1.bf16.xpose.msra.mxu0 0
    %246 = vmatprep.subr.bf16.mxu0 0
    %247 = vmatpush1.bf16.xpose.msra.mxu0 0
    %248 = vmatprep.subr.bf16.mxu0 0
    %249 = vmatpush1.bf16.xpose.msra.mxu0 0
    %250 = vmatprep.subr.bf16.mxu0 0
    %251 = vmatpush1.bf16.xpose.msra.mxu0 0
    %252 = vmatprep.subr.bf16.mxu0 0
    %253 = vmatpush1.bf16.xpose.msra.mxu0 0
    %254 = vmatprep.subr.bf16.mxu0 0
    %255 = vmatpush1.bf16.xpose.msra.mxu0 0
    %256 = vmatprep.subr.bf16.mxu0 0
    %257 = vmatpush1.bf16.xpose.msra.mxu0 0
    %258 = vmatprep.subr.bf16.mxu0 0
    %259 = vmatpush1.bf16.xpose.msra.mxu0 0
    %260 = vmatprep.subr.bf16.mxu0 0
    %261 = vmatpush1.bf16.xpose.msra.mxu0 0
    %262 = vmatprep.subr.bf16.mxu0 0
    %263 = vmatpush1.bf16.xpose.msra.mxu0 0
    %264 = vmatprep.subr.bf16.mxu0 0
    %265 = vmatpush1.bf16.xpose.msra.mxu0 0
    %266 = vmatprep.subr.bf16.mxu0 0
    %267 = vmatpush1.bf16.xpose.msra.mxu0 0
    %268 = vmatprep.subr.bf16.mxu0 0
    %269 = vmatpush1.bf16.xpose.msra.mxu0 0
    %270 = vmatprep.subr.bf16.mxu0 0
    %271 = vmatpush1.bf16.xpose.msra.mxu0 0
    %272 = vmatprep.mubr.bf16.mxu0 0
    %273 = vmatmul.mubr.bf16.gmra.mrb[0].mxu0 %v235
    %v274 = vpop.f32.mrb[0].mxu0
    %v275 = vadd.f32 0.0, %v274
    %v276 = vpop.f32.mrb[0].mxu0
    %v277 = vpop.f32.mrb[0].mxu0
    %v278 = vpop.f32.mrb[0].mxu0
    %279 = vdwg.mxu0
    %281 = vrot.lane.b32.xlu0 %v223, 96
    %v282 = vpop.permute.xlu0 %281
    %v284 = vsel %vm233, %v223, 0
    %v287 = vsel %vm233, %v282, 0
    %289 = vmatprep.subr.bf16.mxu0 0
    %290 = vmatpush1.bf16.xpose.msra.mxu0 %v287
    %291 = vmatprep.subr.bf16.mxu0 0
    %292 = vmatpush1.bf16.xpose.msra.mxu0 0
    %293 = vmatprep.subr.bf16.mxu0 0
    %294 = vmatpush1.bf16.xpose.msra.mxu0 0
    %295 = vmatprep.subr.bf16.mxu0 0
    %296 = vmatpush1.bf16.xpose.msra.mxu0 0
    %297 = vmatprep.subr.bf16.mxu0 0
    %298 = vmatpush1.bf16.xpose.msra.mxu0 0
    %299 = vmatprep.subr.bf16.mxu0 0
    %300 = vmatpush1.bf16.xpose.msra.mxu0 0
    %301 = vmatprep.subr.bf16.mxu0 0
    %302 = vmatpush1.bf16.xpose.msra.mxu0 0
    %303 = vmatprep.subr.bf16.mxu0 0
    %304 = vmatpush1.bf16.xpose.msra.mxu0 0
    %305 = vmatprep.subr.bf16.mxu0 0
    %306 = vmatpush1.bf16.xpose.msra.mxu0 0
    %307 = vmatprep.subr.bf16.mxu0 0
    %308 = vmatpush1.bf16.xpose.msra.mxu0 0
    %309 = vmatprep.subr.bf16.mxu0 0
    %310 = vmatpush1.bf16.xpose.msra.mxu0 0
    %311 = vmatprep.subr.bf16.mxu0 0
    %312 = vmatpush1.bf16.xpose.msra.mxu0 0
    %313 = vmatprep.subr.bf16.mxu0 0
    %314 = vmatpush1.bf16.xpose.msra.mxu0 0
    %315 = vmatprep.subr.bf16.mxu0 0
    %316 = vmatpush1.bf16.xpose.msra.mxu0 0
    %317 = vmatprep.subr.bf16.mxu0 0
    %318 = vmatpush1.bf16.xpose.msra.mxu0 0
    %319 = vmatprep.subr.bf16.mxu0 0
    %320 = vmatpush1.bf16.xpose.msra.mxu0 0
    %321 = vmatprep.mubr.bf16.mxu0 0
    %322 = vmatmul.mubr.bf16.gmra.mrb[0].mxu0 %v284
    %v323 = vpop.f32.mrb[0].mxu0
    %v324 = vadd.f32 0.0, %v323
    %v325 = vpop.f32.mrb[0].mxu0
    %v326 = vpop.f32.mrb[0].mxu0
    %v327 = vpop.f32.mrb[0].mxu0
    %328 = vdwg.mxu0
    %330 = vrot.lane.b32.xlu0 %v224, 96
    %v331 = vpop.permute.xlu0 %330
    %v333 = vsel %vm233, %v224, 0
    %v336 = vsel %vm233, %v331, 0
    %338 = vmatprep.subr.bf16.mxu0 0
    %339 = vmatpush1.bf16.xpose.msra.mxu0 %v336
    %340 = vmatprep.subr.bf16.mxu0 0
    %341 = vmatpush1.bf16.xpose.msra.mxu0 0
    %342 = vmatprep.subr.bf16.mxu0 0
    %343 = vmatpush1.bf16.xpose.msra.mxu0 0
    %344 = vmatprep.subr.bf16.mxu0 0
    %345 = vmatpush1.bf16.xpose.msra.mxu0 0
    %346 = vmatprep.subr.bf16.mxu0 0
    %347 = vmatpush1.bf16.xpose.msra.mxu0 0
    %348 = vmatprep.subr.bf16.mxu0 0
    %349 = vmatpush1.bf16.xpose.msra.mxu0 0
    %350 = vmatprep.subr.bf16.mxu0 0
    %351 = vmatpush1.bf16.xpose.msra.mxu0 0
    %352 = vmatprep.subr.bf16.mxu0 0
    %353 = vmatpush1.bf16.xpose.msra.mxu0 0
    %354 = vmatprep.subr.bf16.mxu0 0
    %355 = vmatpush1.bf16.xpose.msra.mxu0 0
    %356 = vmatprep.subr.bf16.mxu0 0
    %357 = vmatpush1.bf16.xpose.msra.mxu0 0
    %358 = vmatprep.subr.bf16.mxu0 0
    %359 = vmatpush1.bf16.xpose.msra.mxu0 0
    %360 = vmatprep.subr.bf16.mxu0 0
    %361 = vmatpush1.bf16.xpose.msra.mxu0 0
    %362 = vmatprep.subr.bf16.mxu0 0
    %363 = vmatpush1.bf16.xpose.msra.mxu0 0
    %364 = vmatprep.subr.bf16.mxu0 0
    %365 = vmatpush1.bf16.xpose.msra.mxu0 0
    %366 = vmatprep.subr.bf16.mxu0 0
    %367 = vmatpush1.bf16.xpose.msra.mxu0 0
    %368 = vmatprep.subr.bf16.mxu0 0
    %369 = vmatpush1.bf16.xpose.msra.mxu0 0
    %370 = vmatprep.mubr.bf16.mxu0 0
    %371 = vmatmul.mubr.bf16.gmra.mrb[0].mxu0 %v333
    %v372 = vpop.f32.mrb[0].mxu0
    %v373 = vadd.f32 0.0, %v372
    %v374 = vpop.f32.mrb[0].mxu0
    %v375 = vpop.f32.mrb[0].mxu0
    %v376 = vpop.f32.mrb[0].mxu0
    %377 = vdwg.mxu0
    %379 = vrot.lane.b32.xlu0 %v225, 96
    %v380 = vpop.permute.xlu0 %379
    %v382 = vsel %vm233, %v225, 0
    %v385 = vsel %vm233, %v380, 0
    %387 = vmatprep.subr.bf16.mxu0 0
    %388 = vmatpush1.bf16.xpose.msra.mxu0 %v385
    %389 = vmatprep.subr.bf16.mxu0 0
    %390 = vmatpush1.bf16.xpose.msra.mxu0 0
    %391 = vmatprep.subr.bf16.mxu0 0
    %392 = vmatpush1.bf16.xpose.msra.mxu0 0
    %393 = vmatprep.subr.bf16.mxu0 0
    %394 = vmatpush1.bf16.xpose.msra.mxu0 0
    %395 = vmatprep.subr.bf16.mxu0 0
    %396 = vmatpush1.bf16.xpose.msra.mxu0 0
    %397 = vmatprep.subr.bf16.mxu0 0
    %398 = vmatpush1.bf16.xpose.msra.mxu0 0
    %399 = vmatprep.subr.bf16.mxu0 0
    %400 = vmatpush1.bf16.xpose.msra.mxu0 0
    %401 = vmatprep.subr.bf16.mxu0 0
    %402 = vmatpush1.bf16.xpose.msra.mxu0 0
    %403 = vmatprep.subr.bf16.mxu0 0
    %404 = vmatpush1.bf16.xpose.msra.mxu0 0
    %405 = vmatprep.subr.bf16.mxu0 0
    %406 = vmatpush1.bf16.xpose.msra.mxu0 0
    %407 = vmatprep.subr.bf16.mxu0 0
    %408 = vmatpush1.bf16.xpose.msra.mxu0 0
    %409 = vmatprep.subr.bf16.mxu0 0
    %410 = vmatpush1.bf16.xpose.msra.mxu0 0
    %411 = vmatprep.subr.bf16.mxu0 0
    %412 = vmatpush1.bf16.xpose.msra.mxu0 0
    %413 = vmatprep.subr.bf16.mxu0 0
    %414 = vmatpush1.bf16.xpose.msra.mxu0 0
    %415 = vmatprep.subr.bf16.mxu0 0
    %416 = vmatpush1.bf16.xpose.msra.mxu0 0
    %417 = vmatprep.subr.bf16.mxu0 0
    %418 = vmatpush1.bf16.xpose.msra.mxu0 0
    %419 = vmatprep.mubr.bf16.mxu0 0
    %420 = vmatmul.mubr.bf16.gmra.mrb[0].mxu0 %v382
    %v421 = vpop.f32.mrb[0].mxu0
    %v422 = vadd.f32 0.0, %v421
    %v423 = vpop.f32.mrb[0].mxu0
    %v424 = vpop.f32.mrb[0].mxu0
    %v425 = vpop.f32.mrb[0].mxu0
    %426 = vdwg.mxu0
    %428 = vrot.lane.b32.xlu0 %v226, 96
    %v429 = vpop.permute.xlu0 %428
    %v431 = vsel %vm233, %v226, 0
    %v434 = vsel %vm233, %v429, 0
    %436 = vmatprep.subr.bf16.mxu0 0
    %437 = vmatpush1.bf16.xpose.msra.mxu0 %v434
    %438 = vmatprep.subr.bf16.mxu0 0
    %439 = vmatpush1.bf16.xpose.msra.mxu0 0
    %440 = vmatprep.subr.bf16.mxu0 0
    %441 = vmatpush1.bf16.xpose.msra.mxu0 0
    %442 = vmatprep.subr.bf16.mxu0 0
    %443 = vmatpush1.bf16.xpose.msra.mxu0 0
    %444 = vmatprep.subr.bf16.mxu0 0
    %445 = vmatpush1.bf16.xpose.msra.mxu0 0
    %446 = vmatprep.subr.bf16.mxu0 0
    %447 = vmatpush1.bf16.xpose.msra.mxu0 0
    %448 = vmatprep.subr.bf16.mxu0 0
    %449 = vmatpush1.bf16.xpose.msra.mxu0 0
    %450 = vmatprep.subr.bf16.mxu0 0
    %451 = vmatpush1.bf16.xpose.msra.mxu0 0
    %452 = vmatprep.subr.bf16.mxu0 0
    %453 = vmatpush1.bf16.xpose.msra.mxu0 0
    %454 = vmatprep.subr.bf16.mxu0 0
    %455 = vmatpush1.bf16.xpose.msra.mxu0 0
    %456 = vmatprep.subr.bf16.mxu0 0
    %457 = vmatpush1.bf16.xpose.msra.mxu0 0
    %458 = vmatprep.subr.bf16.mxu0 0
    %459 = vmatpush1.bf16.xpose.msra.mxu0 0
    %460 = vmatprep.subr.bf16.mxu0 0
    %461 = vmatpush1.bf16.xpose.msra.mxu0 0
    %462 = vmatprep.subr.bf16.mxu0 0
    %463 = vmatpush1.bf16.xpose.msra.mxu0 0
    %464 = vmatprep.subr.bf16.mxu0 0
    %465 = vmatpush1.bf16.xpose.msra.mxu0 0
    %466 = vmatprep.subr.bf16.mxu0 0
    %467 = vmatpush1.bf16.xpose.msra.mxu0 0
    %468 = vmatprep.mubr.bf16.mxu0 0
    %469 = vmatmul.mubr.bf16.gmra.mrb[0].mxu0 %v431
    %v470 = vpop.f32.mrb[0].mxu0
    %v471 = vadd.f32 0.0, %v470
    %v472 = vpop.f32.mrb[0].mxu0
    %v473 = vpop.f32.mrb[0].mxu0
    %v474 = vpop.f32.mrb[0].mxu0
    %475 = vdwg.mxu0
    %477 = vrot.lane.b32.xlu0 %v227, 96
    %v478 = vpop.permute.xlu0 %477
    %v480 = vsel %vm233, %v227, 0
    %v483 = vsel %vm233, %v478, 0
    %485 = vmatprep.subr.bf16.mxu0 0
    %486 = vmatpush1.bf16.xpose.msra.mxu0 %v483
    %487 = vmatprep.subr.bf16.mxu0 0
    %488 = vmatpush1.bf16.xpose.msra.mxu0 0
    %489 = vmatprep.subr.bf16.mxu0 0
    %490 = vmatpush1.bf16.xpose.msra.mxu0 0
    %491 = vmatprep.subr.bf16.mxu0 0
    %492 = vmatpush1.bf16.xpose.msra.mxu0 0
    %493 = vmatprep.subr.bf16.mxu0 0
    %494 = vmatpush1.bf16.xpose.msra.mxu0 0
    %495 = vmatprep.subr.bf16.mxu0 0
    %496 = vmatpush1.bf16.xpose.msra.mxu0 0
    %497 = vmatprep.subr.bf16.mxu0 0
    %498 = vmatpush1.bf16.xpose.msra.mxu0 0
    %499 = vmatprep.subr.bf16.mxu0 0
    %500 = vmatpush1.bf16.xpose.msra.mxu0 0
    %501 = vmatprep.subr.bf16.mxu0 0
    %502 = vmatpush1.bf16.xpose.msra.mxu0 0
    %503 = vmatprep.subr.bf16.mxu0 0
    %504 = vmatpush1.bf16.xpose.msra.mxu0 0
    %505 = vmatprep.subr.bf16.mxu0 0
    %506 = vmatpush1.bf16.xpose.msra.mxu0 0
    %507 = vmatprep.subr.bf16.mxu0 0
    %508 = vmatpush1.bf16.xpose.msra.mxu0 0
    %509 = vmatprep.subr.bf16.mxu0 0
    %510 = vmatpush1.bf16.xpose.msra.mxu0 0
    %511 = vmatprep.subr.bf16.mxu0 0
    %512 = vmatpush1.bf16.xpose.msra.mxu0 0
    %513 = vmatprep.subr.bf16.mxu0 0
    %514 = vmatpush1.bf16.xpose.msra.mxu0 0
    %515 = vmatprep.subr.bf16.mxu0 0
    %516 = vmatpush1.bf16.xpose.msra.mxu0 0
    %517 = vmatprep.mubr.bf16.mxu0 0
    %518 = vmatmul.mubr.bf16.gmra.mrb[0].mxu0 %v480
    %v519 = vpop.f32.mrb[0].mxu0
    %v520 = vadd.f32 0.0, %v519
    %v521 = vpop.f32.mrb[0].mxu0
    %v522 = vpop.f32.mrb[0].mxu0
    %v523 = vpop.f32.mrb[0].mxu0
    %524 = vdwg.mxu0
    %526 = vrot.lane.b32.xlu0 %v228, 96
    %v527 = vpop.permute.xlu0 %526
    %v529 = vsel %vm233, %v228, 0
    %v532 = vsel %vm233, %v527, 0
    %534 = vmatprep.subr.bf16.mxu0 0
    %535 = vmatpush1.bf16.xpose.msra.mxu0 %v532
    %536 = vmatprep.subr.bf16.mxu0 0
    %537 = vmatpush1.bf16.xpose.msra.mxu0 0
    %538 = vmatprep.subr.bf16.mxu0 0
    %539 = vmatpush1.bf16.xpose.msra.mxu0 0
    %540 = vmatprep.subr.bf16.mxu0 0
    %541 = vmatpush1.bf16.xpose.msra.mxu0 0
    %542 = vmatprep.subr.bf16.mxu0 0
    %543 = vmatpush1.bf16.xpose.msra.mxu0 0
    %544 = vmatprep.subr.bf16.mxu0 0
    %545 = vmatpush1.bf16.xpose.msra.mxu0 0
    %546 = vmatprep.subr.bf16.mxu0 0
    %547 = vmatpush1.bf16.xpose.msra.mxu0 0
    %548 = vmatprep.subr.bf16.mxu0 0
    %549 = vmatpush1.bf16.xpose.msra.mxu0 0
    %550 = vmatprep.subr.bf16.mxu0 0
    %551 = vmatpush1.bf16.xpose.msra.mxu0 0
    %552 = vmatprep.subr.bf16.mxu0 0
    %553 = vmatpush1.bf16.xpose.msra.mxu0 0
    %554 = vmatprep.subr.bf16.mxu0 0
    %555 = vmatpush1.bf16.xpose.msra.mxu0 0
    %556 = vmatprep.subr.bf16.mxu0 0
    %557 = vmatpush1.bf16.xpose.msra.mxu0 0
    %558 = vmatprep.subr.bf16.mxu0 0
    %559 = vmatpush1.bf16.xpose.msra.mxu0 0
    %560 = vmatprep.subr.bf16.mxu0 0
    %561 = vmatpush1.bf16.xpose.msra.mxu0 0
    %562 = vmatprep.subr.bf16.mxu0 0
    %563 = vmatpush1.bf16.xpose.msra.mxu0 0
    %564 = vmatprep.subr.bf16.mxu0 0
    %565 = vmatpush1.bf16.xpose.msra.mxu0 0
    %566 = vmatprep.mubr.bf16.mxu0 0
    %567 = vmatmul.mubr.bf16.gmra.mrb[0].mxu0 %v529
    %v568 = vpop.f32.mrb[0].mxu0
    %v569 = vadd.f32 0.0, %v568
    %v570 = vpop.f32.mrb[0].mxu0
    %v571 = vpop.f32.mrb[0].mxu0
    %v572 = vpop.f32.mrb[0].mxu0
    %573 = vdwg.mxu0
    %575 = vrot.lane.b32.xlu0 %v229, 96
    %v576 = vpop.permute.xlu0 %575
    %v578 = vsel %vm233, %v229, 0
    %v581 = vsel %vm233, %v576, 0
    %583 = vmatprep.subr.bf16.mxu0 0
    %584 = vmatpush1.bf16.xpose.msra.mxu0 %v581
    %585 = vmatprep.subr.bf16.mxu0 0
    %586 = vmatpush1.bf16.xpose.msra.mxu0 0
    %587 = vmatprep.subr.bf16.mxu0 0
    %588 = vmatpush1.bf16.xpose.msra.mxu0 0
    %589 = vmatprep.subr.bf16.mxu0 0
    %590 = vmatpush1.bf16.xpose.msra.mxu0 0
    %591 = vmatprep.subr.bf16.mxu0 0
    %592 = vmatpush1.bf16.xpose.msra.mxu0 0
    %593 = vmatprep.subr.bf16.mxu0 0
    %594 = vmatpush1.bf16.xpose.msra.mxu0 0
    %595 = vmatprep.subr.bf16.mxu0 0
    %596 = vmatpush1.bf16.xpose.msra.mxu0 0
    %597 = vmatprep.subr.bf16.mxu0 0
    %598 = vmatpush1.bf16.xpose.msra.mxu0 0
    %599 = vmatprep.subr.bf16.mxu0 0
    %600 = vmatpush1.bf16.xpose.msra.mxu0 0
    %601 = vmatprep.subr.bf16.mxu0 0
    %602 = vmatpush1.bf16.xpose.msra.mxu0 0
    %603 = vmatprep.subr.bf16.mxu0 0
    %604 = vmatpush1.bf16.xpose.msra.mxu0 0
    %605 = vmatprep.subr.bf16.mxu0 0
    %606 = vmatpush1.bf16.xpose.msra.mxu0 0
    %607 = vmatprep.subr.bf16.mxu0 0
    %608 = vmatpush1.bf16.xpose.msra.mxu0 0
    %609 = vmatprep.subr.bf16.mxu0 0
    %610 = vmatpush1.bf16.xpose.msra.mxu0 0
    %611 = vmatprep.subr.bf16.mxu0 0
    %612 = vmatpush1.bf16.xpose.msra.mxu0 0
    %613 = vmatprep.subr.bf16.mxu0 0
    %614 = vmatpush1.bf16.xpose.msra.mxu0 0
    %615 = vmatprep.mubr.bf16.mxu0 0
    %616 = vmatmul.mubr.bf16.gmra.mrb[0].mxu0 %v578
    %v617 = vpop.f32.mrb[0].mxu0
    %v618 = vadd.f32 0.0, %v617
    %v619 = vpop.f32.mrb[0].mxu0
    %v620 = vpop.f32.mrb[0].mxu0
    %v621 = vpop.f32.mrb[0].mxu0
    %622 = vdwg.mxu0
    %v623 = vmul.f32 %v275, 0.35355338
    %v624 = vmul.f32 %v324, 0.35355338
    %v625 = vmul.f32 %v373, 0.35355338
    %v626 = vmul.f32 %v422, 0.35355338
    %v627 = vmul.f32 %v471, 0.35355338
    %v628 = vmul.f32 %v520, 0.35355338
    %v629 = vmul.f32 %v569, 0.35355338
    %v630 = vmul.f32 %v618, 0.35355338
    %v631 = vsel %vm233, %v623, -inf
    %632 = vmax.xlane.f32.xlu0 %v631
    %v633 = vpop.xlane.xlu0 %632
    %v634 = vsel %vm233, %v624, -inf
    %635 = vmax.xlane.f32.xlu0 %v634
    %v636 = vpop.xlane.xlu0 %635
    %v637 = vsel %vm233, %v625, -inf
    %638 = vmax.xlane.f32.xlu0 %v637
    %v639 = vpop.xlane.xlu0 %638
    %v640 = vsel %vm233, %v626, -inf
    %641 = vmax.xlane.f32.xlu0 %v640
    %v642 = vpop.xlane.xlu0 %641
    %v643 = vsel %vm233, %v627, -inf
    %644 = vmax.xlane.f32.xlu0 %v643
    %v645 = vpop.xlane.xlu0 %644
    %v646 = vsel %vm233, %v628, -inf
    %647 = vmax.xlane.f32.xlu0 %v646
    %v648 = vpop.xlane.xlu0 %647
    %v649 = vsel %vm233, %v629, -inf
    %650 = vmax.xlane.f32.xlu0 %v649
    %v651 = vpop.xlane.xlu0 %650
    %v652 = vsel %vm233, %v630, -inf
    %653 = vmax.xlane.f32.xlu0 %v652
    %v654 = vpop.xlane.xlu0 %653
    %v655 = vsub.f32 %v623, %v633
    %v656 = vsub.f32 %v624, %v636
    %v657 = vsub.f32 %v625, %v639
    %v658 = vsub.f32 %v626, %v642
    %v659 = vsub.f32 %v627, %v645
    %v660 = vsub.f32 %v628, %v648
    %v661 = vsub.f32 %v629, %v651
    %v662 = vsub.f32 %v630, %v654
    %v663 = vmul.f32 %v655, 1.442695
    %v664 = vpow.pop %v663
    %v665 = vmul.f32 %v656, 1.442695
    %v666 = vpow.pop %v665
    %v667 = vmul.f32 %v657, 1.442695
    %v668 = vpow.pop %v667
    %v669 = vmul.f32 %v658, 1.442695
    %v670 = vpow.pop %v669
    %v671 = vmul.f32 %v659, 1.442695
    %v672 = vpow.pop %v671
    %v673 = vmul.f32 %v660, 1.442695
    %v674 = vpow.pop %v673
    %v675 = vmul.f32 %v661, 1.442695
    %v676 = vpow.pop %v675
    %v677 = vmul.f32 %v662, 1.442695
    %v678 = vpow.pop %v677
    %v679 = vsel %vm233, %v664, 0.0
    %680 = vadd.xlane.f32.xlu0 %v679
    %v681 = vpop.xlane.xlu0 %680
    %v682 = vsel %vm233, %v666, 0.0
    %683 = vadd.xlane.f32.xlu0 %v682
    %v684 = vpop.xlane.xlu0 %683
    %v685 = vsel %vm233, %v668, 0.0
    %686 = vadd.xlane.f32.xlu0 %v685
    %v687 = vpop.xlane.xlu0 %686
    %v688 = vsel %vm233, %v670, 0.0
    %689 = vadd.xlane.f32.xlu0 %v688
    %v690 = vpop.xlane.xlu0 %689
    %v691 = vsel %vm233, %v672, 0.0
    %692 = vadd.xlane.f32.xlu0 %v691
    %v693 = vpop.xlane.xlu0 %692
    %v694 = vsel %vm233, %v674, 0.0
    %695 = vadd.xlane.f32.xlu0 %v694
    %v696 = vpop.xlane.xlu0 %695
    %v697 = vsel %vm233, %v676, 0.0
    %698 = vadd.xlane.f32.xlu0 %v697
    %v699 = vpop.xlane.xlu0 %698
    %v700 = vsel %vm233, %v678, 0.0
    %701 = vadd.xlane.f32.xlu0 %v700
    %v702 = vpop.xlane.xlu0 %701
    %v703 = vrcp.pop %v681
    %v704 = vrcp.pop %v684
    %v705 = vrcp.pop %v687
    %v706 = vrcp.pop %v690
    %v707 = vrcp.pop %v693
    %v708 = vrcp.pop %v696
    %v709 = vrcp.pop %v699
    %v710 = vrcp.pop %v702
    %v711 = vmul.f32 %v664, %v703
    %v712 = vmul.f32 %v666, %v704
    %v713 = vmul.f32 %v668, %v705
    %v714 = vmul.f32 %v670, %v706
    %v715 = vmul.f32 %v672, %v707
    %v716 = vmul.f32 %v674, %v708
    %v717 = vmul.f32 %v676, %v709
    %v718 = vmul.f32 %v678, %v710
    %v719 = vpack.c.bf16 %v711, %v711
    %v720 = vpack.c.bf16 %v712, %v712
    %v721 = vpack.c.bf16 %v713, %v713
    %v722 = vpack.c.bf16 %v714, %v714
    %v723 = vpack.c.bf16 %v715, %v715
    %v724 = vpack.c.bf16 %v716, %v716
    %v725 = vpack.c.bf16 %v717, %v717
    %v726 = vpack.c.bf16 %v718, %v718
    %727 = vrot.lane.b32.xlu0 %v222, 64
    %v728 = vpop.permute.xlu0 %727
    %v730 = vsel %vm233, %v719, 0
    %vm732 = vcmask 1043456
    %v734 = vsel %vm732, %v728, 0
    %736 = vmatprep.subr.bf16.mxu0 0
    %737 = vmatpush1.bf16.msra.mxu0 %v734
    %738 = vmatprep.subr.bf16.mxu0 0
    %739 = vmatpush1.bf16.msra.mxu0 0
    %740 = vmatprep.subr.bf16.mxu0 0
    %741 = vmatpush1.bf16.msra.mxu0 0
    %742 = vmatprep.subr.bf16.mxu0 0
    %743 = vmatpush1.bf16.msra.mxu0 0
    %744 = vmatprep.subr.bf16.mxu0 0
    %745 = vmatpush1.bf16.msra.mxu0 0
    %746 = vmatprep.subr.bf16.mxu0 0
    %747 = vmatpush1.bf16.msra.mxu0 0
    %748 = vmatprep.subr.bf16.mxu0 0
    %749 = vmatpush1.bf16.msra.mxu0 0
    %750 = vmatprep.subr.bf16.mxu0 0
    %751 = vmatpush1.bf16.msra.mxu0 0
    %752 = vmatprep.subr.bf16.mxu0 0
    %753 = vmatpush1.bf16.msra.mxu0 0
    %754 = vmatprep.subr.bf16.mxu0 0
    %755 = vmatpush1.bf16.msra.mxu0 0
    %756 = vmatprep.subr.bf16.mxu0 0
    %757 = vmatpush1.bf16.msra.mxu0 0
    %758 = vmatprep.subr.bf16.mxu0 0
    %759 = vmatpush1.bf16.msra.mxu0 0
    %760 = vmatprep.subr.bf16.mxu0 0
    %761 = vmatpush1.bf16.msra.mxu0 0
    %762 = vmatprep.subr.bf16.mxu0 0
    %763 = vmatpush1.bf16.msra.mxu0 0
    %764 = vmatprep.subr.bf16.mxu0 0
    %765 = vmatpush1.bf16.msra.mxu0 0
    %766 = vmatprep.subr.bf16.mxu0 0
    %767 = vmatpush1.bf16.msra.mxu0 0
    %768 = vmatprep.mubr.bf16.mxu0 0
    %769 = vmatmul.mubr.bf16.gmra.mrb[0].mxu0 %v730
    %v770 = vpop.f32.mrb[0].mxu0
    %v771 = vadd.f32 0.0, %v770
    %v772 = vpop.f32.mrb[0].mxu0
    %v773 = vpop.f32.mrb[0].mxu0
    %v774 = vpop.f32.mrb[0].mxu0
    %775 = vdwg.mxu0
    %776 = vrot.lane.b32.xlu0 %v223, 64
    %v777 = vpop.permute.xlu0 %776
    %v779 = vsel %vm233, %v720, 0
    %v782 = vsel %vm732, %v777, 0
    %784 = vmatprep.subr.bf16.mxu0 0
    %785 = vmatpush1.bf16.msra.mxu0 %v782
    %786 = vmatprep.subr.bf16.mxu0 0
    %787 = vmatpush1.bf16.msra.mxu0 0
    %788 = vmatprep.subr.bf16.mxu0 0
    %789 = vmatpush1.bf16.msra.mxu0 0
    %790 = vmatprep.subr.bf16.mxu0 0
    %791 = vmatpush1.bf16.msra.mxu0 0
    %792 = vmatprep.subr.bf16.mxu0 0
    %793 = vmatpush1.bf16.msra.mxu0 0
    %794 = vmatprep.subr.bf16.mxu0 0
    %795 = vmatpush1.bf16.msra.mxu0 0
    %796 = vmatprep.subr.bf16.mxu0 0
    %797 = vmatpush1.bf16.msra.mxu0 0
    %798 = vmatprep.subr.bf16.mxu0 0
    %799 = vmatpush1.bf16.msra.mxu0 0
    %800 = vmatprep.subr.bf16.mxu0 0
    %801 = vmatpush1.bf16.msra.mxu0 0
    %802 = vmatprep.subr.bf16.mxu0 0
    %803 = vmatpush1.bf16.msra.mxu0 0
    %804 = vmatprep.subr.bf16.mxu0 0
    %805 = vmatpush1.bf16.msra.mxu0 0
    %806 = vmatprep.subr.bf16.mxu0 0
    %807 = vmatpush1.bf16.msra.mxu0 0
    %808 = vmatprep.subr.bf16.mxu0 0
    %809 = vmatpush1.bf16.msra.mxu0 0
    %810 = vmatprep.subr.bf16.mxu0 0
    %811 = vmatpush1.bf16.msra.mxu0 0
    %812 = vmatprep.subr.bf16.mxu0 0
    %813 = vmatpush1.bf16.msra.mxu0 0
    %814 = vmatprep.subr.bf16.mxu0 0
    %815 = vmatpush1.bf16.msra.mxu0 0
    %816 = vmatprep.mubr.bf16.mxu0 0
    %817 = vmatmul.mubr.bf16.gmra.mrb[0].mxu0 %v779
    %v818 = vpop.f32.mrb[0].mxu0
    %v819 = vadd.f32 0.0, %v818
    %v820 = vpop.f32.mrb[0].mxu0
    %v821 = vpop.f32.mrb[0].mxu0
    %v822 = vpop.f32.mrb[0].mxu0
    %823 = vdwg.mxu0
    %824 = vrot.lane.b32.xlu0 %v224, 64
    %v825 = vpop.permute.xlu0 %824
    %v827 = vsel %vm233, %v721, 0
    %v830 = vsel %vm732, %v825, 0
    %832 = vmatprep.subr.bf16.mxu0 0
    %833 = vmatpush1.bf16.msra.mxu0 %v830
    %834 = vmatprep.subr.bf16.mxu0 0
    %835 = vmatpush1.bf16.msra.mxu0 0
    %836 = vmatprep.subr.bf16.mxu0 0
    %837 = vmatpush1.bf16.msra.mxu0 0
    %838 = vmatprep.subr.bf16.mxu0 0
    %839 = vmatpush1.bf16.msra.mxu0 0
    %840 = vmatprep.subr.bf16.mxu0 0
    %841 = vmatpush1.bf16.msra.mxu0 0
    %842 = vmatprep.subr.bf16.mxu0 0
    %843 = vmatpush1.bf16.msra.mxu0 0
    %844 = vmatprep.subr.bf16.mxu0 0
    %845 = vmatpush1.bf16.msra.mxu0 0
    %846 = vmatprep.subr.bf16.mxu0 0
    %847 = vmatpush1.bf16.msra.mxu0 0
    %848 = vmatprep.subr.bf16.mxu0 0
    %849 = vmatpush1.bf16.msra.mxu0 0
    %850 = vmatprep.subr.bf16.mxu0 0
    %851 = vmatpush1.bf16.msra.mxu0 0
    %852 = vmatprep.subr.bf16.mxu0 0
    %853 = vmatpush1.bf16.msra.mxu0 0
    %854 = vmatprep.subr.bf16.mxu0 0
    %855 = vmatpush1.bf16.msra.mxu0 0
    %856 = vmatprep.subr.bf16.mxu0 0
    %857 = vmatpush1.bf16.msra.mxu0 0
    %858 = vmatprep.subr.bf16.mxu0 0
    %859 = vmatpush1.bf16.msra.mxu0 0
    %860 = vmatprep.subr.bf16.mxu0 0
    %861 = vmatpush1.bf16.msra.mxu0 0
    %862 = vmatprep.subr.bf16.mxu0 0
    %863 = vmatpush1.bf16.msra.mxu0 0
    %864 = vmatprep.mubr.bf16.mxu0 0
    %865 = vmatmul.mubr.bf16.gmra.mrb[0].mxu0 %v827
    %v866 = vpop.f32.mrb[0].mxu0
    %v867 = vadd.f32 0.0, %v866
    %v868 = vpop.f32.mrb[0].mxu0
    %v869 = vpop.f32.mrb[0].mxu0
    %v870 = vpop.f32.mrb[0].mxu0
    %871 = vdwg.mxu0
    %872 = vrot.lane.b32.xlu0 %v225, 64
    %v873 = vpop.permute.xlu0 %872
    %v875 = vsel %vm233, %v722, 0
    %v878 = vsel %vm732, %v873, 0
    %880 = vmatprep.subr.bf16.mxu0 0
    %881 = vmatpush1.bf16.msra.mxu0 %v878
    %882 = vmatprep.subr.bf16.mxu0 0
    %883 = vmatpush1.bf16.msra.mxu0 0
    %884 = vmatprep.subr.bf16.mxu0 0
    %885 = vmatpush1.bf16.msra.mxu0 0
    %886 = vmatprep.subr.bf16.mxu0 0
    %887 = vmatpush1.bf16.msra.mxu0 0
    %888 = vmatprep.subr.bf16.mxu0 0
    %889 = vmatpush1.bf16.msra.mxu0 0
    %890 = vmatprep.subr.bf16.mxu0 0
    %891 = vmatpush1.bf16.msra.mxu0 0
    %892 = vmatprep.subr.bf16.mxu0 0
    %893 = vmatpush1.bf16.msra.mxu0 0
    %894 = vmatprep.subr.bf16.mxu0 0
    %895 = vmatpush1.bf16.msra.mxu0 0
    %896 = vmatprep.subr.bf16.mxu0 0
    %897 = vmatpush1.bf16.msra.mxu0 0
    %898 = vmatprep.subr.bf16.mxu0 0
    %899 = vmatpush1.bf16.msra.mxu0 0
    %900 = vmatprep.subr.bf16.mxu0 0
    %901 = vmatpush1.bf16.msra.mxu0 0
    %902 = vmatprep.subr.bf16.mxu0 0
    %903 = vmatpush1.bf16.msra.mxu0 0
    %904 = vmatprep.subr.bf16.mxu0 0
    %905 = vmatpush1.bf16.msra.mxu0 0
    %906 = vmatprep.subr.bf16.mxu0 0
    %907 = vmatpush1.bf16.msra.mxu0 0
    %908 = vmatprep.subr.bf16.mxu0 0
    %909 = vmatpush1.bf16.msra.mxu0 0
    %910 = vmatprep.subr.bf16.mxu0 0
    %911 = vmatpush1.bf16.msra.mxu0 0
    %912 = vmatprep.mubr.bf16.mxu0 0
    %913 = vmatmul.mubr.bf16.gmra.mrb[0].mxu0 %v875
    %v914 = vpop.f32.mrb[0].mxu0
    %v915 = vadd.f32 0.0, %v914
    %v916 = vpop.f32.mrb[0].mxu0
    %v917 = vpop.f32.mrb[0].mxu0
    %v918 = vpop.f32.mrb[0].mxu0
    %919 = vdwg.mxu0
    %920 = vrot.lane.b32.xlu0 %v226, 64
    %v921 = vpop.permute.xlu0 %920
    %v923 = vsel %vm233, %v723, 0
    %v926 = vsel %vm732, %v921, 0
    %928 = vmatprep.subr.bf16.mxu0 0
    %929 = vmatpush1.bf16.msra.mxu0 %v926
    %930 = vmatprep.subr.bf16.mxu0 0
    %931 = vmatpush1.bf16.msra.mxu0 0
    %932 = vmatprep.subr.bf16.mxu0 0
    %933 = vmatpush1.bf16.msra.mxu0 0
    %934 = vmatprep.subr.bf16.mxu0 0
    %935 = vmatpush1.bf16.msra.mxu0 0
    %936 = vmatprep.subr.bf16.mxu0 0
    %937 = vmatpush1.bf16.msra.mxu0 0
    %938 = vmatprep.subr.bf16.mxu0 0
    %939 = vmatpush1.bf16.msra.mxu0 0
    %940 = vmatprep.subr.bf16.mxu0 0
    %941 = vmatpush1.bf16.msra.mxu0 0
    %942 = vmatprep.subr.bf16.mxu0 0
    %943 = vmatpush1.bf16.msra.mxu0 0
    %944 = vmatprep.subr.bf16.mxu0 0
    %945 = vmatpush1.bf16.msra.mxu0 0
    %946 = vmatprep.subr.bf16.mxu0 0
    %947 = vmatpush1.bf16.msra.mxu0 0
    %948 = vmatprep.subr.bf16.mxu0 0
    %949 = vmatpush1.bf16.msra.mxu0 0
    %950 = vmatprep.subr.bf16.mxu0 0
    %951 = vmatpush1.bf16.msra.mxu0 0
    %952 = vmatprep.subr.bf16.mxu0 0
    %953 = vmatpush1.bf16.msra.mxu0 0
    %954 = vmatprep.subr.bf16.mxu0 0
    %955 = vmatpush1.bf16.msra.mxu0 0
    %956 = vmatprep.subr.bf16.mxu0 0
    %957 = vmatpush1.bf16.msra.mxu0 0
    %958 = vmatprep.subr.bf16.mxu0 0
    %959 = vmatpush1.bf16.msra.mxu0 0
    %960 = vmatprep.mubr.bf16.mxu0 0
    %961 = vmatmul.mubr.bf16.gmra.mrb[0].mxu0 %v923
    %v962 = vpop.f32.mrb[0].mxu0
    %v963 = vadd.f32 0.0, %v962
    %v964 = vpop.f32.mrb[0].mxu0
    %v965 = vpop.f32.mrb[0].mxu0
    %v966 = vpop.f32.mrb[0].mxu0
    %967 = vdwg.mxu0
    %968 = vrot.lane.b32.xlu0 %v227, 64
    %v969 = vpop.permute.xlu0 %968
    %v971 = vsel %vm233, %v724, 0
    %v974 = vsel %vm732, %v969, 0
    %976 = vmatprep.subr.bf16.mxu0 0
    %977 = vmatpush1.bf16.msra.mxu0 %v974
    %978 = vmatprep.subr.bf16.mxu0 0
    %979 = vmatpush1.bf16.msra.mxu0 0
    %980 = vmatprep.subr.bf16.mxu0 0
    %981 = vmatpush1.bf16.msra.mxu0 0
    %982 = vmatprep.subr.bf16.mxu0 0
    %983 = vmatpush1.bf16.msra.mxu0 0
    %984 = vmatprep.subr.bf16.mxu0 0
    %985 = vmatpush1.bf16.msra.mxu0 0
    %986 = vmatprep.subr.bf16.mxu0 0
    %987 = vmatpush1.bf16.msra.mxu0 0
    %988 = vmatprep.subr.bf16.mxu0 0
    %989 = vmatpush1.bf16.msra.mxu0 0
    %990 = vmatprep.subr.bf16.mxu0 0
    %991 = vmatpush1.bf16.msra.mxu0 0
    %992 = vmatprep.subr.bf16.mxu0 0
    %993 = vmatpush1.bf16.msra.mxu0 0
    %994 = vmatprep.subr.bf16.mxu0 0
    %995 = vmatpush1.bf16.msra.mxu0 0
    %996 = vmatprep.subr.bf16.mxu0 0
    %997 = vmatpush1.bf16.msra.mxu0 0
    %998 = vmatprep.subr.bf16.mxu0 0
    %999 = vmatpush1.bf16.msra.mxu0 0
    %1000 = vmatprep.subr.bf16.mxu0 0
    %1001 = vmatpush1.bf16.msra.mxu0 0
    %1002 = vmatprep.subr.bf16.mxu0 0
    %1003 = vmatpush1.bf16.msra.mxu0 0
    %1004 = vmatprep.subr.bf16.mxu0 0
    %1005 = vmatpush1.bf16.msra.mxu0 0
    %1006 = vmatprep.subr.bf16.mxu0 0
    %1007 = vmatpush1.bf16.msra.mxu0 0
    %1008 = vmatprep.mubr.bf16.mxu0 0
    %1009 = vmatmul.mubr.bf16.gmra.mrb[0].mxu0 %v971
    %v1010 = vpop.f32.mrb[0].mxu0
    %v1011 = vadd.f32 0.0, %v1010
    %v1012 = vpop.f32.mrb[0].mxu0
    %v1013 = vpop.f32.mrb[0].mxu0
    %v1014 = vpop.f32.mrb[0].mxu0
    %1015 = vdwg.mxu0
    %1016 = vrot.lane.b32.xlu0 %v228, 64
    %v1017 = vpop.permute.xlu0 %1016
    %v1019 = vsel %vm233, %v725, 0
    %v1022 = vsel %vm732, %v1017, 0
    %1024 = vmatprep.subr.bf16.mxu0 0
    %1025 = vmatpush1.bf16.msra.mxu0 %v1022
    %1026 = vmatprep.subr.bf16.mxu0 0
    %1027 = vmatpush1.bf16.msra.mxu0 0
    %1028 = vmatprep.subr.bf16.mxu0 0
    %1029 = vmatpush1.bf16.msra.mxu0 0
    %1030 = vmatprep.subr.bf16.mxu0 0
    %1031 = vmatpush1.bf16.msra.mxu0 0
    %1032 = vmatprep.subr.bf16.mxu0 0
    %1033 = vmatpush1.bf16.msra.mxu0 0
    %1034 = vmatprep.subr.bf16.mxu0 0
    %1035 = vmatpush1.bf16.msra.mxu0 0
    %1036 = vmatprep.subr.bf16.mxu0 0
    %1037 = vmatpush1.bf16.msra.mxu0 0
    %1038 = vmatprep.subr.bf16.mxu0 0
    %1039 = vmatpush1.bf16.msra.mxu0 0
    %1040 = vmatprep.subr.bf16.mxu0 0
    %1041 = vmatpush1.bf16.msra.mxu0 0
    %1042 = vmatprep.subr.bf16.mxu0 0
    %1043 = vmatpush1.bf16.msra.mxu0 0
    %1044 = vmatprep.subr.bf16.mxu0 0
    %1045 = vmatpush1.bf16.msra.mxu0 0
    %1046 = vmatprep.subr.bf16.mxu0 0
    %1047 = vmatpush1.bf16.msra.mxu0 0
    %1048 = vmatprep.subr.bf16.mxu0 0
    %1049 = vmatpush1.bf16.msra.mxu0 0
    %1050 = vmatprep.subr.bf16.mxu0 0
    %1051 = vmatpush1.bf16.msra.mxu0 0
    %1052 = vmatprep.subr.bf16.mxu0 0
    %1053 = vmatpush1.bf16.msra.mxu0 0
    %1054 = vmatprep.subr.bf16.mxu0 0
    %1055 = vmatpush1.bf16.msra.mxu0 0
    %1056 = vmatprep.mubr.bf16.mxu0 0
    %1057 = vmatmul.mubr.bf16.gmra.mrb[0].mxu0 %v1019
    %v1058 = vpop.f32.mrb[0].mxu0
    %v1059 = vadd.f32 0.0, %v1058
    %v1060 = vpop.f32.mrb[0].mxu0
    %v1061 = vpop.f32.mrb[0].mxu0
    %v1062 = vpop.f32.mrb[0].mxu0
    %1063 = vdwg.mxu0
    %1064 = vrot.lane.b32.xlu0 %v229, 64
    %v1065 = vpop.permute.xlu0 %1064
    %v1067 = vsel %vm233, %v726, 0
    %v1070 = vsel %vm732, %v1065, 0
    %1072 = vmatprep.subr.bf16.mxu0 0
    %1073 = vmatpush1.bf16.msra.mxu0 %v1070
    %1074 = vmatprep.subr.bf16.mxu0 0
    %1075 = vmatpush1.bf16.msra.mxu0 0
    %1076 = vmatprep.subr.bf16.mxu0 0
    %1077 = vmatpush1.bf16.msra.mxu0 0
    %1078 = vmatprep.subr.bf16.mxu0 0
    %1079 = vmatpush1.bf16.msra.mxu0 0
    %1080 = vmatprep.subr.bf16.mxu0 0
    %1081 = vmatpush1.bf16.msra.mxu0 0
    %1082 = vmatprep.subr.bf16.mxu0 0
    %1083 = vmatpush1.bf16.msra.mxu0 0
    %1084 = vmatprep.subr.bf16.mxu0 0
    %1085 = vmatpush1.bf16.msra.mxu0 0
    %1086 = vmatprep.subr.bf16.mxu0 0
    %1087 = vmatpush1.bf16.msra.mxu0 0
    %1088 = vmatprep.subr.bf16.mxu0 0
    %1089 = vmatpush1.bf16.msra.mxu0 0
    %1090 = vmatprep.subr.bf16.mxu0 0
    %1091 = vmatpush1.bf16.msra.mxu0 0
    %1092 = vmatprep.subr.bf16.mxu0 0
    %1093 = vmatpush1.bf16.msra.mxu0 0
    %1094 = vmatprep.subr.bf16.mxu0 0
    %1095 = vmatpush1.bf16.msra.mxu0 0
    %1096 = vmatprep.subr.bf16.mxu0 0
    %1097 = vmatpush1.bf16.msra.mxu0 0
    %1098 = vmatprep.subr.bf16.mxu0 0
    %1099 = vmatpush1.bf16.msra.mxu0 0
    %1100 = vmatprep.subr.bf16.mxu0 0
    %1101 = vmatpush1.bf16.msra.mxu0 0
    %1102 = vmatprep.subr.bf16.mxu0 0
    %1103 = vmatpush1.bf16.msra.mxu0 0
    %1104 = vmatprep.mubr.bf16.mxu0 0
    %1105 = vmatmul.mubr.bf16.gmra.mrb[0].mxu0 %v1067
    %v1106 = vpop.f32.mrb[0].mxu0
    %v1107 = vadd.f32 0.0, %v1106
    %v1108 = vpop.f32.mrb[0].mxu0
    %v1109 = vpop.f32.mrb[0].mxu0
    %v1110 = vpop.f32.mrb[0].mxu0
    %1111 = vdwg.mxu0
    %v1112 = vpack.c.bf16 %v771, %v771
    %v1113 = vpack.c.bf16 %v819, %v819
    %v1114 = vpack.c.bf16 %v867, %v867
    %v1115 = vpack.c.bf16 %v915, %v915
    %v1116 = vpack.c.bf16 %v963, %v963
    %v1117 = vpack.c.bf16 %v1011, %v1011
    %v1118 = vpack.c.bf16 %v1059, %v1059
    %v1119 = vpack.c.bf16 %v1107, %v1107
    %v1121 = vsel %vm233, %v1112, 0
    %v1124 = vsel %vm732, %v213, 0
    %1126 = vmatprep.subr.bf16.mxu0 0
    %1127 = vmatpush1.bf16.msra.mxu0 %v1124
    %1128 = vmatprep.subr.bf16.mxu0 0
    %1129 = vmatpush1.bf16.msra.mxu0 0
    %1130 = vmatprep.subr.bf16.mxu0 0
    %1131 = vmatpush1.bf16.msra.mxu0 0
    %1132 = vmatprep.subr.bf16.mxu0 0
    %1133 = vmatpush1.bf16.msra.mxu0 0
    %1134 = vmatprep.subr.bf16.mxu0 0
    %1135 = vmatpush1.bf16.msra.mxu0 0
    %1136 = vmatprep.subr.bf16.mxu0 0
    %1137 = vmatpush1.bf16.msra.mxu0 0
    %1138 = vmatprep.subr.bf16.mxu0 0
    %1139 = vmatpush1.bf16.msra.mxu0 0
    %1140 = vmatprep.subr.bf16.mxu0 0
    %1141 = vmatpush1.bf16.msra.mxu0 0
    %1142 = vmatprep.subr.bf16.mxu0 0
    %1143 = vmatpush1.bf16.msra.mxu0 0
    %1144 = vmatprep.subr.bf16.mxu0 0
    %1145 = vmatpush1.bf16.msra.mxu0 0
    %1146 = vmatprep.subr.bf16.mxu0 0
    %1147 = vmatpush1.bf16.msra.mxu0 0
    %1148 = vmatprep.subr.bf16.mxu0 0
    %1149 = vmatpush1.bf16.msra.mxu0 0
    %1150 = vmatprep.subr.bf16.mxu0 0
    %1151 = vmatpush1.bf16.msra.mxu0 0
    %1152 = vmatprep.subr.bf16.mxu0 0
    %1153 = vmatpush1.bf16.msra.mxu0 0
    %1154 = vmatprep.subr.bf16.mxu0 0
    %1155 = vmatpush1.bf16.msra.mxu0 0
    %1156 = vmatprep.subr.bf16.mxu0 0
    %1157 = vmatpush1.bf16.msra.mxu0 0
    %1158 = vmatprep.mubr.bf16.mxu0 0
    %1159 = vmatmul.mubr.bf16.gmra.mrb[0].mxu0 %v1121
    %v1160 = vpop.f32.mrb[0].mxu0
    %v1161 = vadd.f32 0.0, %v1160
    %v1162 = vpop.f32.mrb[0].mxu0
    %v1163 = vpop.f32.mrb[0].mxu0
    %v1164 = vpop.f32.mrb[0].mxu0
    %1165 = vdwg.mxu0
    %v1167 = vsel %vm233, %v1113, 0
    %v1170 = vsel %vm732, %v214, 0
    %1172 = vmatprep.subr.bf16.mxu0 0
    %1173 = vmatpush1.bf16.msra.mxu0 %v1170
    %1174 = vmatprep.subr.bf16.mxu0 0
    %1175 = vmatpush1.bf16.msra.mxu0 0
    %1176 = vmatprep.subr.bf16.mxu0 0
    %1177 = vmatpush1.bf16.msra.mxu0 0
    %1178 = vmatprep.subr.bf16.mxu0 0
    %1179 = vmatpush1.bf16.msra.mxu0 0
    %1180 = vmatprep.subr.bf16.mxu0 0
    %1181 = vmatpush1.bf16.msra.mxu0 0
    %1182 = vmatprep.subr.bf16.mxu0 0
    %1183 = vmatpush1.bf16.msra.mxu0 0
    %1184 = vmatprep.subr.bf16.mxu0 0
    %1185 = vmatpush1.bf16.msra.mxu0 0
    %1186 = vmatprep.subr.bf16.mxu0 0
    %1187 = vmatpush1.bf16.msra.mxu0 0
    %1188 = vmatprep.subr.bf16.mxu0 0
    %1189 = vmatpush1.bf16.msra.mxu0 0
    %1190 = vmatprep.subr.bf16.mxu0 0
    %1191 = vmatpush1.bf16.msra.mxu0 0
    %1192 = vmatprep.subr.bf16.mxu0 0
    %1193 = vmatpush1.bf16.msra.mxu0 0
    %1194 = vmatprep.subr.bf16.mxu0 0
    %1195 = vmatpush1.bf16.msra.mxu0 0
    %1196 = vmatprep.subr.bf16.mxu0 0
    %1197 = vmatpush1.bf16.msra.mxu0 0
    %1198 = vmatprep.subr.bf16.mxu0 0
    %1199 = vmatpush1.bf16.msra.mxu0 0
    %1200 = vmatprep.subr.bf16.mxu0 0
    %1201 = vmatpush1.bf16.msra.mxu0 0
    %1202 = vmatprep.subr.bf16.mxu0 0
    %1203 = vmatpush1.bf16.msra.mxu0 0
    %1204 = vmatprep.mubr.bf16.mxu0 0
    %1205 = vmatmul.mubr.bf16.gmra.mrb[0].mxu0 %v1167
    %v1206 = vpop.f32.mrb[0].mxu0
    %v1207 = vadd.f32 0.0, %v1206
    %v1208 = vpop.f32.mrb[0].mxu0
    %v1209 = vpop.f32.mrb[0].mxu0
    %v1210 = vpop.f32.mrb[0].mxu0
    %1211 = vdwg.mxu0
    %v1213 = vsel %vm233, %v1114, 0
    %v1216 = vsel %vm732, %v215, 0
    %1218 = vmatprep.subr.bf16.mxu0 0
    %1219 = vmatpush1.bf16.msra.mxu0 %v1216
    %1220 = vmatprep.subr.bf16.mxu0 0
    %1221 = vmatpush1.bf16.msra.mxu0 0
    %1222 = vmatprep.subr.bf16.mxu0 0
    %1223 = vmatpush1.bf16.msra.mxu0 0
    %1224 = vmatprep.subr.bf16.mxu0 0
    %1225 = vmatpush1.bf16.msra.mxu0 0
    %1226 = vmatprep.subr.bf16.mxu0 0
    %1227 = vmatpush1.bf16.msra.mxu0 0
    %1228 = vmatprep.subr.bf16.mxu0 0
    %1229 = vmatpush1.bf16.msra.mxu0 0
    %1230 = vmatprep.subr.bf16.mxu0 0
    %1231 = vmatpush1.bf16.msra.mxu0 0
    %1232 = vmatprep.subr.bf16.mxu0 0
    %1233 = vmatpush1.bf16.msra.mxu0 0
    %1234 = vmatprep.subr.bf16.mxu0 0
    %1235 = vmatpush1.bf16.msra.mxu0 0
    %1236 = vmatprep.subr.bf16.mxu0 0
    %1237 = vmatpush1.bf16.msra.mxu0 0
    %1238 = vmatprep.subr.bf16.mxu0 0
    %1239 = vmatpush1.bf16.msra.mxu0 0
    %1240 = vmatprep.subr.bf16.mxu0 0
    %1241 = vmatpush1.bf16.msra.mxu0 0
    %1242 = vmatprep.subr.bf16.mxu0 0
    %1243 = vmatpush1.bf16.msra.mxu0 0
    %1244 = vmatprep.subr.bf16.mxu0 0
    %1245 = vmatpush1.bf16.msra.mxu0 0
    %1246 = vmatprep.subr.bf16.mxu0 0
    %1247 = vmatpush1.bf16.msra.mxu0 0
    %1248 = vmatprep.subr.bf16.mxu0 0
    %1249 = vmatpush1.bf16.msra.mxu0 0
    %1250 = vmatprep.mubr.bf16.mxu0 0
    %1251 = vmatmul.mubr.bf16.gmra.mrb[0].mxu0 %v1213
    %v1252 = vpop.f32.mrb[0].mxu0
    %v1253 = vadd.f32 0.0, %v1252
    %v1254 = vpop.f32.mrb[0].mxu0
    %v1255 = vpop.f32.mrb[0].mxu0
    %v1256 = vpop.f32.mrb[0].mxu0
    %1257 = vdwg.mxu0
    %v1259 = vsel %vm233, %v1115, 0
    %v1262 = vsel %vm732, %v216, 0
    %1264 = vmatprep.subr.bf16.mxu0 0
    %1265 = vmatpush1.bf16.msra.mxu0 %v1262
    %1266 = vmatprep.subr.bf16.mxu0 0
    %1267 = vmatpush1.bf16.msra.mxu0 0
    %1268 = vmatprep.subr.bf16.mxu0 0
    %1269 = vmatpush1.bf16.msra.mxu0 0
    %1270 = vmatprep.subr.bf16.mxu0 0
    %1271 = vmatpush1.bf16.msra.mxu0 0
    %1272 = vmatprep.subr.bf16.mxu0 0
    %1273 = vmatpush1.bf16.msra.mxu0 0
    %1274 = vmatprep.subr.bf16.mxu0 0
    %1275 = vmatpush1.bf16.msra.mxu0 0
    %1276 = vmatprep.subr.bf16.mxu0 0
    %1277 = vmatpush1.bf16.msra.mxu0 0
    %1278 = vmatprep.subr.bf16.mxu0 0
    %1279 = vmatpush1.bf16.msra.mxu0 0
    %1280 = vmatprep.subr.bf16.mxu0 0
    %1281 = vmatpush1.bf16.msra.mxu0 0
    %1282 = vmatprep.subr.bf16.mxu0 0
    %1283 = vmatpush1.bf16.msra.mxu0 0
    %1284 = vmatprep.subr.bf16.mxu0 0
    %1285 = vmatpush1.bf16.msra.mxu0 0
    %1286 = vmatprep.subr.bf16.mxu0 0
    %1287 = vmatpush1.bf16.msra.mxu0 0
    %1288 = vmatprep.subr.bf16.mxu0 0
    %1289 = vmatpush1.bf16.msra.mxu0 0
    %1290 = vmatprep.subr.bf16.mxu0 0
    %1291 = vmatpush1.bf16.msra.mxu0 0
    %1292 = vmatprep.subr.bf16.mxu0 0
    %1293 = vmatpush1.bf16.msra.mxu0 0
    %1294 = vmatprep.subr.bf16.mxu0 0
    %1295 = vmatpush1.bf16.msra.mxu0 0
    %1296 = vmatprep.mubr.bf16.mxu0 0
    %1297 = vmatmul.mubr.bf16.gmra.mrb[0].mxu0 %v1259
    %v1298 = vpop.f32.mrb[0].mxu0
    %v1299 = vadd.f32 0.0, %v1298
    %v1300 = vpop.f32.mrb[0].mxu0
    %v1301 = vpop.f32.mrb[0].mxu0
    %v1302 = vpop.f32.mrb[0].mxu0
    %1303 = vdwg.mxu0
    %v1305 = vsel %vm233, %v1116, 0
    %v1308 = vsel %vm732, %v217, 0
    %1310 = vmatprep.subr.bf16.mxu0 0
    %1311 = vmatpush1.bf16.msra.mxu0 %v1308
    %1312 = vmatprep.subr.bf16.mxu0 0
    %1313 = vmatpush1.bf16.msra.mxu0 0
    %1314 = vmatprep.subr.bf16.mxu0 0
    %1315 = vmatpush1.bf16.msra.mxu0 0
    %1316 = vmatprep.subr.bf16.mxu0 0
    %1317 = vmatpush1.bf16.msra.mxu0 0
    %1318 = vmatprep.subr.bf16.mxu0 0
    %1319 = vmatpush1.bf16.msra.mxu0 0
    %1320 = vmatprep.subr.bf16.mxu0 0
    %1321 = vmatpush1.bf16.msra.mxu0 0
    %1322 = vmatprep.subr.bf16.mxu0 0
    %1323 = vmatpush1.bf16.msra.mxu0 0
    %1324 = vmatprep.subr.bf16.mxu0 0
    %1325 = vmatpush1.bf16.msra.mxu0 0
    %1326 = vmatprep.subr.bf16.mxu0 0
    %1327 = vmatpush1.bf16.msra.mxu0 0
    %1328 = vmatprep.subr.bf16.mxu0 0
    %1329 = vmatpush1.bf16.msra.mxu0 0
    %1330 = vmatprep.subr.bf16.mxu0 0
    %1331 = vmatpush1.bf16.msra.mxu0 0
    %1332 = vmatprep.subr.bf16.mxu0 0
    %1333 = vmatpush1.bf16.msra.mxu0 0
    %1334 = vmatprep.subr.bf16.mxu0 0
    %1335 = vmatpush1.bf16.msra.mxu0 0
    %1336 = vmatprep.subr.bf16.mxu0 0
    %1337 = vmatpush1.bf16.msra.mxu0 0
    %1338 = vmatprep.subr.bf16.mxu0 0
    %1339 = vmatpush1.bf16.msra.mxu0 0
    %1340 = vmatprep.subr.bf16.mxu0 0
    %1341 = vmatpush1.bf16.msra.mxu0 0
    %1342 = vmatprep.mubr.bf16.mxu0 0
    %1343 = vmatmul.mubr.bf16.gmra.mrb[0].mxu0 %v1305
    %v1344 = vpop.f32.mrb[0].mxu0
    %v1345 = vadd.f32 0.0, %v1344
    %v1346 = vpop.f32.mrb[0].mxu0
    %v1347 = vpop.f32.mrb[0].mxu0
    %v1348 = vpop.f32.mrb[0].mxu0
    %1349 = vdwg.mxu0
    %v1351 = vsel %vm233, %v1117, 0
    %v1354 = vsel %vm732, %v218, 0
    %1356 = vmatprep.subr.bf16.mxu0 0
    %1357 = vmatpush1.bf16.msra.mxu0 %v1354
    %1358 = vmatprep.subr.bf16.mxu0 0
    %1359 = vmatpush1.bf16.msra.mxu0 0
    %1360 = vmatprep.subr.bf16.mxu0 0
    %1361 = vmatpush1.bf16.msra.mxu0 0
    %1362 = vmatprep.subr.bf16.mxu0 0
    %1363 = vmatpush1.bf16.msra.mxu0 0
    %1364 = vmatprep.subr.bf16.mxu0 0
    %1365 = vmatpush1.bf16.msra.mxu0 0
    %1366 = vmatprep.subr.bf16.mxu0 0
    %1367 = vmatpush1.bf16.msra.mxu0 0
    %1368 = vmatprep.subr.bf16.mxu0 0
    %1369 = vmatpush1.bf16.msra.mxu0 0
    %1370 = vmatprep.subr.bf16.mxu0 0
    %1371 = vmatpush1.bf16.msra.mxu0 0
    %1372 = vmatprep.subr.bf16.mxu0 0
    %1373 = vmatpush1.bf16.msra.mxu0 0
    %1374 = vmatprep.subr.bf16.mxu0 0
    %1375 = vmatpush1.bf16.msra.mxu0 0
    %1376 = vmatprep.subr.bf16.mxu0 0
    %1377 = vmatpush1.bf16.msra.mxu0 0
    %1378 = vmatprep.subr.bf16.mxu0 0
    %1379 = vmatpush1.bf16.msra.mxu0 0
    %1380 = vmatprep.subr.bf16.mxu0 0
    %1381 = vmatpush1.bf16.msra.mxu0 0
    %1382 = vmatprep.subr.bf16.mxu0 0
    %1383 = vmatpush1.bf16.msra.mxu0 0
    %1384 = vmatprep.subr.bf16.mxu0 0
    %1385 = vmatpush1.bf16.msra.mxu0 0
    %1386 = vmatprep.subr.bf16.mxu0 0
    %1387 = vmatpush1.bf16.msra.mxu0 0
    %1388 = vmatprep.mubr.bf16.mxu0 0
    %1389 = vmatmul.mubr.bf16.gmra.mrb[0].mxu0 %v1351
    %v1390 = vpop.f32.mrb[0].mxu0
    %v1391 = vadd.f32 0.0, %v1390
    %v1392 = vpop.f32.mrb[0].mxu0
    %v1393 = vpop.f32.mrb[0].mxu0
    %v1394 = vpop.f32.mrb[0].mxu0
    %1395 = vdwg.mxu0
    %v1397 = vsel %vm233, %v1118, 0
    %v1400 = vsel %vm732, %v219, 0
    %1402 = vmatprep.subr.bf16.mxu0 0
    %1403 = vmatpush1.bf16.msra.mxu0 %v1400
    %1404 = vmatprep.subr.bf16.mxu0 0
    %1405 = vmatpush1.bf16.msra.mxu0 0
    %1406 = vmatprep.subr.bf16.mxu0 0
    %1407 = vmatpush1.bf16.msra.mxu0 0
    %1408 = vmatprep.subr.bf16.mxu0 0
    %1409 = vmatpush1.bf16.msra.mxu0 0
    %1410 = vmatprep.subr.bf16.mxu0 0
    %1411 = vmatpush1.bf16.msra.mxu0 0
    %1412 = vmatprep.subr.bf16.mxu0 0
    %1413 = vmatpush1.bf16.msra.mxu0 0
    %1414 = vmatprep.subr.bf16.mxu0 0
    %1415 = vmatpush1.bf16.msra.mxu0 0
    %1416 = vmatprep.subr.bf16.mxu0 0
    %1417 = vmatpush1.bf16.msra.mxu0 0
    %1418 = vmatprep.subr.bf16.mxu0 0
    %1419 = vmatpush1.bf16.msra.mxu0 0
    %1420 = vmatprep.subr.bf16.mxu0 0
    %1421 = vmatpush1.bf16.msra.mxu0 0
    %1422 = vmatprep.subr.bf16.mxu0 0
    %1423 = vmatpush1.bf16.msra.mxu0 0
    %1424 = vmatprep.subr.bf16.mxu0 0
    %1425 = vmatpush1.bf16.msra.mxu0 0
    %1426 = vmatprep.subr.bf16.mxu0 0
    %1427 = vmatpush1.bf16.msra.mxu0 0
    %1428 = vmatprep.subr.bf16.mxu0 0
    %1429 = vmatpush1.bf16.msra.mxu0 0
    %1430 = vmatprep.subr.bf16.mxu0 0
    %1431 = vmatpush1.bf16.msra.mxu0 0
    %1432 = vmatprep.subr.bf16.mxu0 0
    %1433 = vmatpush1.bf16.msra.mxu0 0
    %1434 = vmatprep.mubr.bf16.mxu0 0
    %1435 = vmatmul.mubr.bf16.gmra.mrb[0].mxu0 %v1397
    %v1436 = vpop.f32.mrb[0].mxu0
    %v1437 = vadd.f32 0.0, %v1436
    %v1438 = vpop.f32.mrb[0].mxu0
    %v1439 = vpop.f32.mrb[0].mxu0
    %v1440 = vpop.f32.mrb[0].mxu0
    %1441 = vdwg.mxu0
    %v1443 = vsel %vm233, %v1119, 0
    %v1446 = vsel %vm732, %v220, 0
    %1448 = vmatprep.subr.bf16.mxu0 0
    %1449 = vmatpush1.bf16.msra.mxu0 %v1446
    %1450 = vmatprep.subr.bf16.mxu0 0
    %1451 = vmatpush1.bf16.msra.mxu0 0
    %1452 = vmatprep.subr.bf16.mxu0 0
    %1453 = vmatpush1.bf16.msra.mxu0 0
    %1454 = vmatprep.subr.bf16.mxu0 0
    %1455 = vmatpush1.bf16.msra.mxu0 0
    %1456 = vmatprep.subr.bf16.mxu0 0
    %1457 = vmatpush1.bf16.msra.mxu0 0
    %1458 = vmatprep.subr.bf16.mxu0 0
    %1459 = vmatpush1.bf16.msra.mxu0 0
    %1460 = vmatprep.subr.bf16.mxu0 0
    %1461 = vmatpush1.bf16.msra.mxu0 0
    %1462 = vmatprep.subr.bf16.mxu0 0
    %1463 = vmatpush1.bf16.msra.mxu0 0
    %1464 = vmatprep.subr.bf16.mxu0 0
    %1465 = vmatpush1.bf16.msra.mxu0 0
    %1466 = vmatprep.subr.bf16.mxu0 0
    %1467 = vmatpush1.bf16.msra.mxu0 0
    %1468 = vmatprep.subr.bf16.mxu0 0
    %1469 = vmatpush1.bf16.msra.mxu0 0
    %1470 = vmatprep.subr.bf16.mxu0 0
    %1471 = vmatpush1.bf16.msra.mxu0 0
    %1472 = vmatprep.subr.bf16.mxu0 0
    %1473 = vmatpush1.bf16.msra.mxu0 0
    %1474 = vmatprep.subr.bf16.mxu0 0
    %1475 = vmatpush1.bf16.msra.mxu0 0
    %1476 = vmatprep.subr.bf16.mxu0 0
    %1477 = vmatpush1.bf16.msra.mxu0 0
    %1478 = vmatprep.subr.bf16.mxu0 0
    %1479 = vmatpush1.bf16.msra.mxu0 0
    %1480 = vmatprep.mubr.bf16.mxu0 0
    %1481 = vmatmul.mubr.bf16.gmra.mrb[0].mxu0 %v1443
    %v1482 = vpop.f32.mrb[0].mxu0
    %v1483 = vadd.f32 0.0, %v1482
    %v1484 = vpop.f32.mrb[0].mxu0
    %v1485 = vpop.f32.mrb[0].mxu0
    %v1486 = vpop.f32.mrb[0].mxu0
    %1487 = vdwg.mxu0
    %v1488 = vadd.f32 %v1161, %v1253
    %v1489 = vadd.f32 %v1207, %v1299
    %v1490 = vadd.f32 %v1488, %v1345
    %v1491 = vadd.f32 %v1489, %v1391
    %v1492 = vadd.f32 %v1490, %v1437
    %v1493 = vadd.f32 %v1491, %v1483
    %v1495 = vlaneseq
    %v1496 = vshrl.u32 %v1495, 7
    %v1497 = vsub.s32 0, %v1496
    %v1498 = vrot.slane %v221, %v1497
    %v1500 = vadd.f32 %v1492, %v1498
    %v1501 = vadd.f32 %v1493, %v1498
    %v1502 = vadd.f32 %v73, %v1500
    %v1503 = vadd.f32 %v74, %v1501
    %v1504 = vld [vmem:[%s8] sm:$0x1]
    %v1505 = vld [vmem:[%s9] sm:$0x1]
    %v1506 = vsel %vm81, %v1502, 0.0
    %1507 = vadd.xlane.f32.xlu0 %v1506
    %v1508 = vpop.xlane.xlu0 %1507
    %v1509 = vsel %vm81, %v1503, 0.0
    %1510 = vadd.xlane.f32.xlu0 %v1509
    %v1511 = vpop.xlane.xlu0 %1510
    %v1512 = vmul.f32 %v1508, %v88
    %v1513 = vmul.f32 %v1511, %v88
    %v1514 = vsub.f32 %v1502, %v1512
    %v1515 = vsub.f32 %v1503, %v1513
    %v1516 = vmul.f32 %v1514, %v1514
    %v1517 = vmul.f32 %v1515, %v1515
    %v1518 = vsel %vm81, %v1516, 0.0
    %1519 = vadd.xlane.f32.xlu0 %v1518
    %v1520 = vpop.xlane.xlu0 %1519
    %v1521 = vsel %vm81, %v1517, 0.0
    %1522 = vadd.xlane.f32.xlu0 %v1521
    %v1523 = vpop.xlane.xlu0 %1522
    %v1524 = vmul.f32 %v1520, %v88
    %v1525 = vmul.f32 %v1523, %v88
    %v1526 = vadd.f32 %v1524, 1e-05
    %v1527 = vadd.f32 %v1525, 1e-05
    %v1528 = vrsqrt.pop %v1526
    %v1529 = vrsqrt.pop %v1527
    %v1530 = vmul.f32 %v1514, %v1528
    %v1531 = vmul.f32 %v1515, %v1529
    %v1533 = vlaneseq
    %v1534 = vshrl.u32 %v1533, 7
    %v1535 = vsub.s32 0, %v1534
    %v1536 = vrot.slane %v1504, %v1535
    %v1538 = vmul.f32 %v1530, %v1536
    %v1539 = vmul.f32 %v1531, %v1536
    %v1541 = vlaneseq
    %v1542 = vshrl.u32 %v1541, 7
    %v1543 = vsub.s32 0, %v1542
    %v1544 = vrot.slane %v1505, %v1543
    %v1546 = vadd.f32 %v1538, %v1544
    %v1547 = vadd.f32 %v1539, %v1544
    %v1548 = vpack.c.bf16 %v1547, %v1546
    %v1549 = vld [vmem:[%s10] sm:$0xf]
    %v1550 = vld [vmem:[%s10 + $0x4] sm:$0xf]
    %v1551 = vld [vmem:[%s10 + $0x8] sm:$0xf]
    %v1552 = vld [vmem:[%s10 + $0xc] sm:$0xf]
    %v1553 = vld [vmem:[%s11] sm:$0x1]
    %v1555 = vlaneseq
    %v1556 = vshrl.u32 %v1555, 7
    %v1557 = vsub.s32 0, %v1556
    %v1558 = vrot.slane %v1553, %v1557
    %v1564 = vunpack.c.l.b16 %v1549
    %v1565 = vunpack.c.l.b16 %v1550
    %v1566 = vunpack.c.l.b16 %v1551
    %v1567 = vunpack.c.l.b16 %v1552
    %v1568 = vpack.c.b16 %v1565, %v1564
    %v1569 = vpack.c.b16 %v1567, %v1566
    %v1573 = vsel %vm81, %v1548, 0
    %1575 = vmatprep.subr.bf16.mxu0 0
    %1576 = vmatpush1.bf16.msra.mxu0 %v1568
    %1577 = vmatprep.subr.bf16.mxu0 0
    %1578 = vmatpush1.bf16.msra.mxu0 %v1569
    %1579 = vmatprep.subr.bf16.mxu0 0
    %1580 = vmatpush1.bf16.msra.mxu0 0
    %1581 = vmatprep.subr.bf16.mxu0 0
    %1582 = vmatpush1.bf16.msra.mxu0 0
    %1583 = vmatprep.subr.bf16.mxu0 0
    %1584 = vmatpush1.bf16.msra.mxu0 0
    %1585 = vmatprep.subr.bf16.mxu0 0
    %1586 = vmatpush1.bf16.msra.mxu0 0
    %1587 = vmatprep.subr.bf16.mxu0 0
    %1588 = vmatpush1.bf16.msra.mxu0 0
    %1589 = vmatprep.subr.bf16.mxu0 0
    %1590 = vmatpush1.bf16.msra.mxu0 0
    %1591 = vmatprep.subr.bf16.mxu0 0
    %1592 = vmatpush1.bf16.msra.mxu0 0
    %1593 = vmatprep.subr.bf16.mxu0 0
    %1594 = vmatpush1.bf16.msra.mxu0 0
    %1595 = vmatprep.subr.bf16.mxu0 0
    %1596 = vmatpush1.bf16.msra.mxu0 0
    %1597 = vmatprep.subr.bf16.mxu0 0
    %1598 = vmatpush1.bf16.msra.mxu0 0
    %1599 = vmatprep.subr.bf16.mxu0 0
    %1600 = vmatpush1.bf16.msra.mxu0 0
    %1601 = vmatprep.subr.bf16.mxu0 0
    %1602 = vmatpush1.bf16.msra.mxu0 0
    %1603 = vmatprep.subr.bf16.mxu0 0
    %1604 = vmatpush1.bf16.msra.mxu0 0
    %1605 = vmatprep.subr.bf16.mxu0 0
    %1606 = vmatpush1.bf16.msra.mxu0 0
    %1607 = vmatprep.mubr.bf16.mxu0 0
    %1608 = vmatmul.mubr.bf16.gmra.mrb[0].mxu0 %v1573
    %v1609 = vpop.f32.mrb[0].mxu0
    %v1610 = vadd.f32 %v1558, %v1609
    %v1611 = vpop.f32.mrb[0].mxu0
    %v1612 = vpop.f32.mrb[0].mxu0
    %v1613 = vadd.f32 %v1558, %v1612
    %v1614 = vpop.f32.mrb[0].mxu0
    %1615 = vdwg.mxu0
    %v1616 = vpack.c.bf16 %v76, %v75
    %v1617 = vpack.c.bf16 %v78, %v77
    %v1618 = vld [vmem:[%s12] sm:$0xf]
    %v1619 = vld [vmem:[%s12 + $0x4] sm:$0xf]
    %v1620 = vld [vmem:[%s12 + $0x8] sm:$0xf]
    %v1621 = vld [vmem:[%s12 + $0xc] sm:$0xf]
    %v1622 = vld [vmem:[%s13] sm:$0x1]
    %v1624 = vlaneseq
    %v1625 = vshrl.u32 %v1624, 7
    %v1626 = vsub.s32 0, %v1625
    %v1627 = vrot.slane %v1622, %v1626
    %v1633 = vunpack.c.l.b16 %v1618
    %v1634 = vunpack.c.l.b16 %v1619
    %v1635 = vunpack.c.l.b16 %v1620
    %v1636 = vunpack.c.l.b16 %v1621
    %v1637 = vpack.c.b16 %v1634, %v1633
    %v1638 = vpack.c.b16 %v1636, %v1635
    %v1642 = vsel %vm81, %v1616, 0
    %v1645 = vsel %vm81, %v1617, 0
    %1647 = vmatprep.subr.bf16.mxu0 0
    %1648 = vmatpush1.bf16.msra.mxu0 %v1637
    %1649 = vmatprep.subr.bf16.mxu0 0
    %1650 = vmatpush1.bf16.msra.mxu0 %v1638
    %1651 = vmatprep.subr.bf16.mxu0 0
    %1652 = vmatpush1.bf16.msra.mxu0 0
    %1653 = vmatprep.subr.bf16.mxu0 0
    %1654 = vmatpush1.bf16.msra.mxu0 0
    %1655 = vmatprep.subr.bf16.mxu0 0
    %1656 = vmatpush1.bf16.msra.mxu0 0
    %1657 = vmatprep.subr.bf16.mxu0 0
    %1658 = vmatpush1.bf16.msra.mxu0 0
    %1659 = vmatprep.subr.bf16.mxu0 0
    %1660 = vmatpush1.bf16.msra.mxu0 0
    %1661 = vmatprep.subr.bf16.mxu0 0
    %1662 = vmatpush1.bf16.msra.mxu0 0
    %1663 = vmatprep.subr.bf16.mxu0 0
    %1664 = vmatpush1.bf16.msra.mxu0 0
    %1665 = vmatprep.subr.bf16.mxu0 0
    %1666 = vmatpush1.bf16.msra.mxu0 0
    %1667 = vmatprep.subr.bf16.mxu0 0
    %1668 = vmatpush1.bf16.msra.mxu0 0
    %1669 = vmatprep.subr.bf16.mxu0 0
    %1670 = vmatpush1.bf16.msra.mxu0 0
    %1671 = vmatprep.subr.bf16.mxu0 0
    %1672 = vmatpush1.bf16.msra.mxu0 0
    %1673 = vmatprep.subr.bf16.mxu0 0
    %1674 = vmatpush1.bf16.msra.mxu0 0
    %1675 = vmatprep.subr.bf16.mxu0 0
    %1676 = vmatpush1.bf16.msra.mxu0 0
    %1677 = vmatprep.subr.bf16.mxu0 0
    %1678 = vmatpush1.bf16.msra.mxu0 0
    %1679 = vmatprep.mubr.bf16.mxu0 0
    %1680 = vmatmul.mubr.bf16.gmra.mrb[0].mxu0 %v1642
    %v1681 = vpop.f32.mrb[0].mxu0
    %v1682 = vadd.f32 %v1627, %v1681
    %v1683 = vpop.f32.mrb[0].mxu0
    %v1684 = vpop.f32.mrb[0].mxu0
    %v1685 = vadd.f32 %v1627, %v1684
    %v1686 = vpop.f32.mrb[0].mxu0
    %1687 = vmatprep.mubr.bf16.mxu0 0
    %1688 = vmatmul.mubr.bf16.gmra.mrb[0].mxu0 %v1645
    %v1689 = vpop.f32.mrb[0].mxu0
    %v1690 = vadd.f32 %v1627, %v1689
    %v1691 = vpop.f32.mrb[0].mxu0
    %v1692 = vpop.f32.mrb[0].mxu0
    %v1693 = vadd.f32 %v1627, %v1692
    %v1694 = vpop.f32.mrb[0].mxu0
    %1695 = vdwg.mxu0
    %1698 = vrot.lane.b32.xlu0 %v1610, 120
    %v1699 = vpop.permute.xlu0 %1698
    %1700 = vrot.lane.b32.xlu0 %v1613, 120
    %v1701 = vpop.permute.xlu0 %1700
    %1704 = vrot.lane.b32.xlu0 %v1610, 112
    %v1705 = vpop.permute.xlu0 %1704
    %1706 = vrot.lane.b32.xlu0 %v1613, 112
    %v1707 = vpop.permute.xlu0 %1706
    %1710 = vrot.lane.b32.xlu0 %v1610, 104
    %v1711 = vpop.permute.xlu0 %1710
    %1712 = vrot.lane.b32.xlu0 %v1613, 104
    %v1713 = vpop.permute.xlu0 %1712
    %1720 = vrot.lane.b32.xlu0 %v1682, 120
    %v1721 = vpop.permute.xlu0 %1720
    %1722 = vrot.lane.b32.xlu0 %v1685, 120
    %v1723 = vpop.permute.xlu0 %1722
    %1724 = vrot.lane.b32.xlu0 %v1690, 120
    %v1725 = vpop.permute.xlu0 %1724
    %1726 = vrot.lane.b32.xlu0 %v1693, 120
    %v1727 = vpop.permute.xlu0 %1726
    %1732 = vrot.lane.b32.xlu0 %v1682, 112
    %v1733 = vpop.permute.xlu0 %1732
    %1734 = vrot.lane.b32.xlu0 %v1685, 112
    %v1735 = vpop.permute.xlu0 %1734
    %1736 = vrot.lane.b32.xlu0 %v1690, 112
    %v1737 = vpop.permute.xlu0 %1736
    %1738 = vrot.lane.b32.xlu0 %v1693, 112
    %v1739 = vpop.permute.xlu0 %1738
    %1744 = vrot.lane.b32.xlu0 %v1682, 104
    %v1745 = vpop.permute.xlu0 %1744
    %1746 = vrot.lane.b32.xlu0 %v1685, 104
    %v1747 = vpop.permute.xlu0 %1746
    %1748 = vrot.lane.b32.xlu0 %v1690, 104
    %v1749 = vpop.permute.xlu0 %1748
    %1750 = vrot.lane.b32.xlu0 %v1693, 104
    %v1751 = vpop.permute.xlu0 %1750
    %v1756 = vld [vmem:[%s14] sm:$0xf]
    %v1757 = vld [vmem:[%s14 + $0x4] sm:$0xf]
    %v1758 = vld [vmem:[%s14 + $0x8] sm:$0xf]
    %v1759 = vld [vmem:[%s14 + $0xc] sm:$0xf]
    %v1760 = vld [vmem:[%s14 + $0x10] sm:$0xf]
    %v1761 = vld [vmem:[%s14 + $0x14] sm:$0xf]
    %v1762 = vld [vmem:[%s14 + $0x18] sm:$0xf]
    %v1763 = vld [vmem:[%s14 + $0x1c] sm:$0xf]
    %v1764 = vld [vmem:[%s15] sm:$0x1]
    %v1765 = vpack.c.bf16 %v1610, %v1610
    %v1766 = vpack.c.bf16 %v1613, %v1613
    %v1767 = vpack.c.bf16 %v1699, %v1699
    %v1768 = vpack.c.bf16 %v1701, %v1701
    %v1769 = vpack.c.bf16 %v1705, %v1705
    %v1770 = vpack.c.bf16 %v1707, %v1707
    %v1771 = vpack.c.bf16 %v1711, %v1711
    %v1772 = vpack.c.bf16 %v1713, %v1713
    %v1773 = vpack.c.bf16 %v1685, %v1682
    %v1774 = vpack.c.bf16 %v1693, %v1690
    %v1775 = vpack.c.bf16 %v1723, %v1721
    %v1776 = vpack.c.bf16 %v1727, %v1725
    %v1777 = vpack.c.bf16 %v1735, %v1733
    %v1778 = vpack.c.bf16 %v1739, %v1737
    %v1779 = vpack.c.bf16 %v1747, %v1745
    %v1780 = vpack.c.bf16 %v1751, %v1749
    %v1782 = vsel %vm233, %v1765, 0
    %v1785 = vsel %vm233, %v1773, 0
    %1787 = vmatprep.subr.bf16.mxu0 0
    %1788 = vmatpush1.bf16.xpose.msra.mxu0 %v1785
    %1789 = vmatprep.subr.bf16.mxu0 0
    %1790 = vmatpush1.bf16.xpose.msra.mxu0 0
    %1791 = vmatprep.subr.bf16.mxu0 0
    %1792 = vmatpush1.bf16.xpose.msra.mxu0 0
    %1793 = vmatprep.subr.bf16.mxu0 0
    %1794 = vmatpush1.bf16.xpose.msra.mxu0 0
    %1795 = vmatprep.subr.bf16.mxu0 0
    %1796 = vmatpush1.bf16.xpose.msra.mxu0 0
    %1797 = vmatprep.subr.bf16.mxu0 0
    %1798 = vmatpush1.bf16.xpose.msra.mxu0 0
    %1799 = vmatprep.subr.bf16.mxu0 0
    %1800 = vmatpush1.bf16.xpose.msra.mxu0 0
    %1801 = vmatprep.subr.bf16.mxu0 0
    %1802 = vmatpush1.bf16.xpose.msra.mxu0 0
    %1803 = vmatprep.subr.bf16.mxu0 0
    %1804 = vmatpush1.bf16.xpose.msra.mxu0 0
    %1805 = vmatprep.subr.bf16.mxu0 0
    %1806 = vmatpush1.bf16.xpose.msra.mxu0 0
    %1807 = vmatprep.subr.bf16.mxu0 0
    %1808 = vmatpush1.bf16.xpose.msra.mxu0 0
    %1809 = vmatprep.subr.bf16.mxu0 0
    %1810 = vmatpush1.bf16.xpose.msra.mxu0 0
    %1811 = vmatprep.subr.bf16.mxu0 0
    %1812 = vmatpush1.bf16.xpose.msra.mxu0 0
    %1813 = vmatprep.subr.bf16.mxu0 0
    %1814 = vmatpush1.bf16.xpose.msra.mxu0 0
    %1815 = vmatprep.subr.bf16.mxu0 0
    %1816 = vmatpush1.bf16.xpose.msra.mxu0 0
    %1817 = vmatprep.subr.bf16.mxu0 0
    %1818 = vmatpush1.bf16.xpose.msra.mxu0 0
    %1819 = vmatprep.mubr.bf16.mxu0 0
    %1820 = vmatmul.mubr.bf16.gmra.mrb[0].mxu0 %v1782
    %v1821 = vpop.f32.mrb[0].mxu0
    %v1822 = vadd.f32 0.0, %v1821
    %v1823 = vpop.f32.mrb[0].mxu0
    %v1824 = vpop.f32.mrb[0].mxu0
    %v1825 = vpop.f32.mrb[0].mxu0
    %1826 = vdwg.mxu0
    %v1828 = vsel %vm233, %v1766, 0
    %v1831 = vsel %vm233, %v1774, 0
    %1833 = vmatprep.subr.bf16.mxu0 0
    %1834 = vmatpush1.bf16.xpose.msra.mxu0 %v1831
    %1835 = vmatprep.subr.bf16.mxu0 0
    %1836 = vmatpush1.bf16.xpose.msra.mxu0 0
    %1837 = vmatprep.subr.bf16.mxu0 0
    %1838 = vmatpush1.bf16.xpose.msra.mxu0 0
    %1839 = vmatprep.subr.bf16.mxu0 0
    %1840 = vmatpush1.bf16.xpose.msra.mxu0 0
    %1841 = vmatprep.subr.bf16.mxu0 0
    %1842 = vmatpush1.bf16.xpose.msra.mxu0 0
    %1843 = vmatprep.subr.bf16.mxu0 0
    %1844 = vmatpush1.bf16.xpose.msra.mxu0 0
    %1845 = vmatprep.subr.bf16.mxu0 0
    %1846 = vmatpush1.bf16.xpose.msra.mxu0 0
    %1847 = vmatprep.subr.bf16.mxu0 0
    %1848 = vmatpush1.bf16.xpose.msra.mxu0 0
    %1849 = vmatprep.subr.bf16.mxu0 0
    %1850 = vmatpush1.bf16.xpose.msra.mxu0 0
    %1851 = vmatprep.subr.bf16.mxu0 0
    %1852 = vmatpush1.bf16.xpose.msra.mxu0 0
    %1853 = vmatprep.subr.bf16.mxu0 0
    %1854 = vmatpush1.bf16.xpose.msra.mxu0 0
    %1855 = vmatprep.subr.bf16.mxu0 0
    %1856 = vmatpush1.bf16.xpose.msra.mxu0 0
    %1857 = vmatprep.subr.bf16.mxu0 0
    %1858 = vmatpush1.bf16.xpose.msra.mxu0 0
    %1859 = vmatprep.subr.bf16.mxu0 0
    %1860 = vmatpush1.bf16.xpose.msra.mxu0 0
    %1861 = vmatprep.subr.bf16.mxu0 0
    %1862 = vmatpush1.bf16.xpose.msra.mxu0 0
    %1863 = vmatprep.subr.bf16.mxu0 0
    %1864 = vmatpush1.bf16.xpose.msra.mxu0 0
    %1865 = vmatprep.mubr.bf16.mxu0 0
    %1866 = vmatmul.mubr.bf16.gmra.mrb[0].mxu0 %v1828
    %v1867 = vpop.f32.mrb[0].mxu0
    %v1868 = vadd.f32 0.0, %v1867
    %v1869 = vpop.f32.mrb[0].mxu0
    %v1870 = vpop.f32.mrb[0].mxu0
    %v1871 = vpop.f32.mrb[0].mxu0
    %1872 = vdwg.mxu0
    %v1874 = vsel %vm233, %v1767, 0
    %v1877 = vsel %vm233, %v1775, 0
    %1879 = vmatprep.subr.bf16.mxu0 0
    %1880 = vmatpush1.bf16.xpose.msra.mxu0 %v1877
    %1881 = vmatprep.subr.bf16.mxu0 0
    %1882 = vmatpush1.bf16.xpose.msra.mxu0 0
    %1883 = vmatprep.subr.bf16.mxu0 0
    %1884 = vmatpush1.bf16.xpose.msra.mxu0 0
    %1885 = vmatprep.subr.bf16.mxu0 0
    %1886 = vmatpush1.bf16.xpose.msra.mxu0 0
    %1887 = vmatprep.subr.bf16.mxu0 0
    %1888 = vmatpush1.bf16.xpose.msra.mxu0 0
    %1889 = vmatprep.subr.bf16.mxu0 0
    %1890 = vmatpush1.bf16.xpose.msra.mxu0 0
    %1891 = vmatprep.subr.bf16.mxu0 0
    %1892 = vmatpush1.bf16.xpose.msra.mxu0 0
    %1893 = vmatprep.subr.bf16.mxu0 0
    %1894 = vmatpush1.bf16.xpose.msra.mxu0 0
    %1895 = vmatprep.subr.bf16.mxu0 0
    %1896 = vmatpush1.bf16.xpose.msra.mxu0 0
    %1897 = vmatprep.subr.bf16.mxu0 0
    %1898 = vmatpush1.bf16.xpose.msra.mxu0 0
    %1899 = vmatprep.subr.bf16.mxu0 0
    %1900 = vmatpush1.bf16.xpose.msra.mxu0 0
    %1901 = vmatprep.subr.bf16.mxu0 0
    %1902 = vmatpush1.bf16.xpose.msra.mxu0 0
    %1903 = vmatprep.subr.bf16.mxu0 0
    %1904 = vmatpush1.bf16.xpose.msra.mxu0 0
    %1905 = vmatprep.subr.bf16.mxu0 0
    %1906 = vmatpush1.bf16.xpose.msra.mxu0 0
    %1907 = vmatprep.subr.bf16.mxu0 0
    %1908 = vmatpush1.bf16.xpose.msra.mxu0 0
    %1909 = vmatprep.subr.bf16.mxu0 0
    %1910 = vmatpush1.bf16.xpose.msra.mxu0 0
    %1911 = vmatprep.mubr.bf16.mxu0 0
    %1912 = vmatmul.mubr.bf16.gmra.mrb[0].mxu0 %v1874
    %v1913 = vpop.f32.mrb[0].mxu0
    %v1914 = vadd.f32 0.0, %v1913
    %v1915 = vpop.f32.mrb[0].mxu0
    %v1916 = vpop.f32.mrb[0].mxu0
    %v1917 = vpop.f32.mrb[0].mxu0
    %1918 = vdwg.mxu0
    %v1920 = vsel %vm233, %v1768, 0
    %v1923 = vsel %vm233, %v1776, 0
    %1925 = vmatprep.subr.bf16.mxu0 0
    %1926 = vmatpush1.bf16.xpose.msra.mxu0 %v1923
    %1927 = vmatprep.subr.bf16.mxu0 0
    %1928 = vmatpush1.bf16.xpose.msra.mxu0 0
    %1929 = vmatprep.subr.bf16.mxu0 0
    %1930 = vmatpush1.bf16.xpose.msra.mxu0 0
    %1931 = vmatprep.subr.bf16.mxu0 0
    %1932 = vmatpush1.bf16.xpose.msra.mxu0 0
    %1933 = vmatprep.subr.bf16.mxu0 0
    %1934 = vmatpush1.bf16.xpose.msra.mxu0 0
    %1935 = vmatprep.subr.bf16.mxu0 0
    %1936 = vmatpush1.bf16.xpose.msra.mxu0 0
    %1937 = vmatprep.subr.bf16.mxu0 0
    %1938 = vmatpush1.bf16.xpose.msra.mxu0 0
    %1939 = vmatprep.subr.bf16.mxu0 0
    %1940 = vmatpush1.bf16.xpose.msra.mxu0 0
    %1941 = vmatprep.subr.bf16.mxu0 0
    %1942 = vmatpush1.bf16.xpose.msra.mxu0 0
    %1943 = vmatprep.subr.bf16.mxu0 0
    %1944 = vmatpush1.bf16.xpose.msra.mxu0 0
    %1945 = vmatprep.subr.bf16.mxu0 0
    %1946 = vmatpush1.bf16.xpose.msra.mxu0 0
    %1947 = vmatprep.subr.bf16.mxu0 0
    %1948 = vmatpush1.bf16.xpose.msra.mxu0 0
    %1949 = vmatprep.subr.bf16.mxu0 0
    %1950 = vmatpush1.bf16.xpose.msra.mxu0 0
    %1951 = vmatprep.subr.bf16.mxu0 0
    %1952 = vmatpush1.bf16.xpose.msra.mxu0 0
    %1953 = vmatprep.subr.bf16.mxu0 0
    %1954 = vmatpush1.bf16.xpose.msra.mxu0 0
    %1955 = vmatprep.subr.bf16.mxu0 0
    %1956 = vmatpush1.bf16.xpose.msra.mxu0 0
    %1957 = vmatprep.mubr.bf16.mxu0 0
    %1958 = vmatmul.mubr.bf16.gmra.mrb[0].mxu0 %v1920
    %v1959 = vpop.f32.mrb[0].mxu0
    %v1960 = vadd.f32 0.0, %v1959
    %v1961 = vpop.f32.mrb[0].mxu0
    %v1962 = vpop.f32.mrb[0].mxu0
    %v1963 = vpop.f32.mrb[0].mxu0
    %1964 = vdwg.mxu0
    %v1966 = vsel %vm233, %v1769, 0
    %v1969 = vsel %vm233, %v1777, 0
    %1971 = vmatprep.subr.bf16.mxu0 0
    %1972 = vmatpush1.bf16.xpose.msra.mxu0 %v1969
    %1973 = vmatprep.subr.bf16.mxu0 0
    %1974 = vmatpush1.bf16.xpose.msra.mxu0 0
    %1975 = vmatprep.subr.bf16.mxu0 0
    %1976 = vmatpush1.bf16.xpose.msra.mxu0 0
    %1977 = vmatprep.subr.bf16.mxu0 0
    %1978 = vmatpush1.bf16.xpose.msra.mxu0 0
    %1979 = vmatprep.subr.bf16.mxu0 0
    %1980 = vmatpush1.bf16.xpose.msra.mxu0 0
    %1981 = vmatprep.subr.bf16.mxu0 0
    %1982 = vmatpush1.bf16.xpose.msra.mxu0 0
    %1983 = vmatprep.subr.bf16.mxu0 0
    %1984 = vmatpush1.bf16.xpose.msra.mxu0 0
    %1985 = vmatprep.subr.bf16.mxu0 0
    %1986 = vmatpush1.bf16.xpose.msra.mxu0 0
    %1987 = vmatprep.subr.bf16.mxu0 0
    %1988 = vmatpush1.bf16.xpose.msra.mxu0 0
    %1989 = vmatprep.subr.bf16.mxu0 0
    %1990 = vmatpush1.bf16.xpose.msra.mxu0 0
    %1991 = vmatprep.subr.bf16.mxu0 0
    %1992 = vmatpush1.bf16.xpose.msra.mxu0 0
    %1993 = vmatprep.subr.bf16.mxu0 0
    %1994 = vmatpush1.bf16.xpose.msra.mxu0 0
    %1995 = vmatprep.subr.bf16.mxu0 0
    %1996 = vmatpush1.bf16.xpose.msra.mxu0 0
    %1997 = vmatprep.subr.bf16.mxu0 0
    %1998 = vmatpush1.bf16.xpose.msra.mxu0 0
    %1999 = vmatprep.subr.bf16.mxu0 0
    %2000 = vmatpush1.bf16.xpose.msra.mxu0 0
    %2001 = vmatprep.subr.bf16.mxu0 0
    %2002 = vmatpush1.bf16.xpose.msra.mxu0 0
    %2003 = vmatprep.mubr.bf16.mxu0 0
    %2004 = vmatmul.mubr.bf16.gmra.mrb[0].mxu0 %v1966
    %v2005 = vpop.f32.mrb[0].mxu0
    %v2006 = vadd.f32 0.0, %v2005
    %v2007 = vpop.f32.mrb[0].mxu0
    %v2008 = vpop.f32.mrb[0].mxu0
    %v2009 = vpop.f32.mrb[0].mxu0
    %2010 = vdwg.mxu0
    %v2012 = vsel %vm233, %v1770, 0
    %v2015 = vsel %vm233, %v1778, 0
    %2017 = vmatprep.subr.bf16.mxu0 0
    %2018 = vmatpush1.bf16.xpose.msra.mxu0 %v2015
    %2019 = vmatprep.subr.bf16.mxu0 0
    %2020 = vmatpush1.bf16.xpose.msra.mxu0 0
    %2021 = vmatprep.subr.bf16.mxu0 0
    %2022 = vmatpush1.bf16.xpose.msra.mxu0 0
    %2023 = vmatprep.subr.bf16.mxu0 0
    %2024 = vmatpush1.bf16.xpose.msra.mxu0 0
    %2025 = vmatprep.subr.bf16.mxu0 0
    %2026 = vmatpush1.bf16.xpose.msra.mxu0 0
    %2027 = vmatprep.subr.bf16.mxu0 0
    %2028 = vmatpush1.bf16.xpose.msra.mxu0 0
    %2029 = vmatprep.subr.bf16.mxu0 0
    %2030 = vmatpush1.bf16.xpose.msra.mxu0 0
    %2031 = vmatprep.subr.bf16.mxu0 0
    %2032 = vmatpush1.bf16.xpose.msra.mxu0 0
    %2033 = vmatprep.subr.bf16.mxu0 0
    %2034 = vmatpush1.bf16.xpose.msra.mxu0 0
    %2035 = vmatprep.subr.bf16.mxu0 0
    %2036 = vmatpush1.bf16.xpose.msra.mxu0 0
    %2037 = vmatprep.subr.bf16.mxu0 0
    %2038 = vmatpush1.bf16.xpose.msra.mxu0 0
    %2039 = vmatprep.subr.bf16.mxu0 0
    %2040 = vmatpush1.bf16.xpose.msra.mxu0 0
    %2041 = vmatprep.subr.bf16.mxu0 0
    %2042 = vmatpush1.bf16.xpose.msra.mxu0 0
    %2043 = vmatprep.subr.bf16.mxu0 0
    %2044 = vmatpush1.bf16.xpose.msra.mxu0 0
    %2045 = vmatprep.subr.bf16.mxu0 0
    %2046 = vmatpush1.bf16.xpose.msra.mxu0 0
    %2047 = vmatprep.subr.bf16.mxu0 0
    %2048 = vmatpush1.bf16.xpose.msra.mxu0 0
    %2049 = vmatprep.mubr.bf16.mxu0 0
    %2050 = vmatmul.mubr.bf16.gmra.mrb[0].mxu0 %v2012
    %v2051 = vpop.f32.mrb[0].mxu0
    %v2052 = vadd.f32 0.0, %v2051
    %v2053 = vpop.f32.mrb[0].mxu0
    %v2054 = vpop.f32.mrb[0].mxu0
    %v2055 = vpop.f32.mrb[0].mxu0
    %2056 = vdwg.mxu0
    %v2058 = vsel %vm233, %v1771, 0
    %v2061 = vsel %vm233, %v1779, 0
    %2063 = vmatprep.subr.bf16.mxu0 0
    %2064 = vmatpush1.bf16.xpose.msra.mxu0 %v2061
    %2065 = vmatprep.subr.bf16.mxu0 0
    %2066 = vmatpush1.bf16.xpose.msra.mxu0 0
    %2067 = vmatprep.subr.bf16.mxu0 0
    %2068 = vmatpush1.bf16.xpose.msra.mxu0 0
    %2069 = vmatprep.subr.bf16.mxu0 0
    %2070 = vmatpush1.bf16.xpose.msra.mxu0 0
    %2071 = vmatprep.subr.bf16.mxu0 0
    %2072 = vmatpush1.bf16.xpose.msra.mxu0 0
    %2073 = vmatprep.subr.bf16.mxu0 0
    %2074 = vmatpush1.bf16.xpose.msra.mxu0 0
    %2075 = vmatprep.subr.bf16.mxu0 0
    %2076 = vmatpush1.bf16.xpose.msra.mxu0 0
    %2077 = vmatprep.subr.bf16.mxu0 0
    %2078 = vmatpush1.bf16.xpose.msra.mxu0 0
    %2079 = vmatprep.subr.bf16.mxu0 0
    %2080 = vmatpush1.bf16.xpose.msra.mxu0 0
    %2081 = vmatprep.subr.bf16.mxu0 0
    %2082 = vmatpush1.bf16.xpose.msra.mxu0 0
    %2083 = vmatprep.subr.bf16.mxu0 0
    %2084 = vmatpush1.bf16.xpose.msra.mxu0 0
    %2085 = vmatprep.subr.bf16.mxu0 0
    %2086 = vmatpush1.bf16.xpose.msra.mxu0 0
    %2087 = vmatprep.subr.bf16.mxu0 0
    %2088 = vmatpush1.bf16.xpose.msra.mxu0 0
    %2089 = vmatprep.subr.bf16.mxu0 0
    %2090 = vmatpush1.bf16.xpose.msra.mxu0 0
    %2091 = vmatprep.subr.bf16.mxu0 0
    %2092 = vmatpush1.bf16.xpose.msra.mxu0 0
    %2093 = vmatprep.subr.bf16.mxu0 0
    %2094 = vmatpush1.bf16.xpose.msra.mxu0 0
    %2095 = vmatprep.mubr.bf16.mxu0 0
    %2096 = vmatmul.mubr.bf16.gmra.mrb[0].mxu0 %v2058
    %v2097 = vpop.f32.mrb[0].mxu0
    %v2098 = vadd.f32 0.0, %v2097
    %v2099 = vpop.f32.mrb[0].mxu0
    %v2100 = vpop.f32.mrb[0].mxu0
    %v2101 = vpop.f32.mrb[0].mxu0
    %2102 = vdwg.mxu0
    %v2104 = vsel %vm233, %v1772, 0
    %v2107 = vsel %vm233, %v1780, 0
    %2109 = vmatprep.subr.bf16.mxu0 0
    %2110 = vmatpush1.bf16.xpose.msra.mxu0 %v2107
    %2111 = vmatprep.subr.bf16.mxu0 0
    %2112 = vmatpush1.bf16.xpose.msra.mxu0 0
    %2113 = vmatprep.subr.bf16.mxu0 0
    %2114 = vmatpush1.bf16.xpose.msra.mxu0 0
    %2115 = vmatprep.subr.bf16.mxu0 0
    %2116 = vmatpush1.bf16.xpose.msra.mxu0 0
    %2117 = vmatprep.subr.bf16.mxu0 0
    %2118 = vmatpush1.bf16.xpose.msra.mxu0 0
    %2119 = vmatprep.subr.bf16.mxu0 0
    %2120 = vmatpush1.bf16.xpose.msra.mxu0 0
    %2121 = vmatprep.subr.bf16.mxu0 0
    %2122 = vmatpush1.bf16.xpose.msra.mxu0 0
    %2123 = vmatprep.subr.bf16.mxu0 0
    %2124 = vmatpush1.bf16.xpose.msra.mxu0 0
    %2125 = vmatprep.subr.bf16.mxu0 0
    %2126 = vmatpush1.bf16.xpose.msra.mxu0 0
    %2127 = vmatprep.subr.bf16.mxu0 0
    %2128 = vmatpush1.bf16.xpose.msra.mxu0 0
    %2129 = vmatprep.subr.bf16.mxu0 0
    %2130 = vmatpush1.bf16.xpose.msra.mxu0 0
    %2131 = vmatprep.subr.bf16.mxu0 0
    %2132 = vmatpush1.bf16.xpose.msra.mxu0 0
    %2133 = vmatprep.subr.bf16.mxu0 0
    %2134 = vmatpush1.bf16.xpose.msra.mxu0 0
    %2135 = vmatprep.subr.bf16.mxu0 0
    %2136 = vmatpush1.bf16.xpose.msra.mxu0 0
    %2137 = vmatprep.subr.bf16.mxu0 0
    %2138 = vmatpush1.bf16.xpose.msra.mxu0 0
    %2139 = vmatprep.subr.bf16.mxu0 0
    %2140 = vmatpush1.bf16.xpose.msra.mxu0 0
    %2141 = vmatprep.mubr.bf16.mxu0 0
    %2142 = vmatmul.mubr.bf16.gmra.mrb[0].mxu0 %v2104
    %v2143 = vpop.f32.mrb[0].mxu0
    %v2144 = vadd.f32 0.0, %v2143
    %v2145 = vpop.f32.mrb[0].mxu0
    %v2146 = vpop.f32.mrb[0].mxu0
    %v2147 = vpop.f32.mrb[0].mxu0
    %2148 = vdwg.mxu0
    %v2149 = vmul.f32 %v1822, 0.35355338
    %v2150 = vmul.f32 %v1868, 0.35355338
    %v2151 = vmul.f32 %v1914, 0.35355338
    %v2152 = vmul.f32 %v1960, 0.35355338
    %v2153 = vmul.f32 %v2006, 0.35355338
    %v2154 = vmul.f32 %v2052, 0.35355338
    %v2155 = vmul.f32 %v2098, 0.35355338
    %v2156 = vmul.f32 %v2144, 0.35355338
    %vm2157 = vcmask 130048
    %v2158 = vsel %vm2157, %v2149, -inf
    %2159 = vmax.xlane.f32.xlu0 %v2158
    %v2160 = vpop.xlane.xlu0 %2159
    %v2161 = vsel %vm2157, %v2150, -inf
    %2162 = vmax.xlane.f32.xlu0 %v2161
    %v2163 = vpop.xlane.xlu0 %2162
    %v2164 = vsel %vm2157, %v2151, -inf
    %2165 = vmax.xlane.f32.xlu0 %v2164
    %v2166 = vpop.xlane.xlu0 %2165
    %v2167 = vsel %vm2157, %v2152, -inf
    %2168 = vmax.xlane.f32.xlu0 %v2167
    %v2169 = vpop.xlane.xlu0 %2168
    %v2170 = vsel %vm2157, %v2153, -inf
    %2171 = vmax.xlane.f32.xlu0 %v2170
    %v2172 = vpop.xlane.xlu0 %2171
    %v2173 = vsel %vm2157, %v2154, -inf
    %2174 = vmax.xlane.f32.xlu0 %v2173
    %v2175 = vpop.xlane.xlu0 %2174
    %v2176 = vsel %vm2157, %v2155, -inf
    %2177 = vmax.xlane.f32.xlu0 %v2176
    %v2178 = vpop.xlane.xlu0 %2177
    %v2179 = vsel %vm2157, %v2156, -inf
    %2180 = vmax.xlane.f32.xlu0 %v2179
    %v2181 = vpop.xlane.xlu0 %2180
    %v2182 = vsub.f32 %v2149, %v2160
    %v2183 = vsub.f32 %v2150, %v2163
    %v2184 = vsub.f32 %v2151, %v2166
    %v2185 = vsub.f32 %v2152, %v2169
    %v2186 = vsub.f32 %v2153, %v2172
    %v2187 = vsub.f32 %v2154, %v2175
    %v2188 = vsub.f32 %v2155, %v2178
    %v2189 = vsub.f32 %v2156, %v2181
    %v2190 = vmul.f32 %v2182, 1.442695
    %v2191 = vpow.pop %v2190
    %v2192 = vmul.f32 %v2183, 1.442695
    %v2193 = vpow.pop %v2192
    %v2194 = vmul.f32 %v2184, 1.442695
    %v2195 = vpow.pop %v2194
    %v2196 = vmul.f32 %v2185, 1.442695
    %v2197 = vpow.pop %v2196
    %v2198 = vmul.f32 %v2186, 1.442695
    %v2199 = vpow.pop %v2198
    %v2200 = vmul.f32 %v2187, 1.442695
    %v2201 = vpow.pop %v2200
    %v2202 = vmul.f32 %v2188, 1.442695
    %v2203 = vpow.pop %v2202
    %v2204 = vmul.f32 %v2189, 1.442695
    %v2205 = vpow.pop %v2204
    %v2206 = vsel %vm2157, %v2191, 0.0
    %2207 = vadd.xlane.f32.xlu0 %v2206
    %v2208 = vpop.xlane.xlu0 %2207
    %v2209 = vsel %vm2157, %v2193, 0.0
    %2210 = vadd.xlane.f32.xlu0 %v2209
    %v2211 = vpop.xlane.xlu0 %2210
    %v2212 = vsel %vm2157, %v2195, 0.0
    %2213 = vadd.xlane.f32.xlu0 %v2212
    %v2214 = vpop.xlane.xlu0 %2213
    %v2215 = vsel %vm2157, %v2197, 0.0
    %2216 = vadd.xlane.f32.xlu0 %v2215
    %v2217 = vpop.xlane.xlu0 %2216
    %v2218 = vsel %vm2157, %v2199, 0.0
    %2219 = vadd.xlane.f32.xlu0 %v2218
    %v2220 = vpop.xlane.xlu0 %2219
    %v2221 = vsel %vm2157, %v2201, 0.0
    %2222 = vadd.xlane.f32.xlu0 %v2221
    %v2223 = vpop.xlane.xlu0 %2222
    %v2224 = vsel %vm2157, %v2203, 0.0
    %2225 = vadd.xlane.f32.xlu0 %v2224
    %v2226 = vpop.xlane.xlu0 %2225
    %v2227 = vsel %vm2157, %v2205, 0.0
    %2228 = vadd.xlane.f32.xlu0 %v2227
    %v2229 = vpop.xlane.xlu0 %2228
    %v2230 = vrcp.pop %v2208
    %v2231 = vrcp.pop %v2211
    %v2232 = vrcp.pop %v2214
    %v2233 = vrcp.pop %v2217
    %v2234 = vrcp.pop %v2220
    %v2235 = vrcp.pop %v2223
    %v2236 = vrcp.pop %v2226
    %v2237 = vrcp.pop %v2229
    %v2238 = vmul.f32 %v2191, %v2230
    %v2239 = vmul.f32 %v2193, %v2231
    %v2240 = vmul.f32 %v2195, %v2232
    %v2241 = vmul.f32 %v2197, %v2233
    %v2242 = vmul.f32 %v2199, %v2234
    %v2243 = vmul.f32 %v2201, %v2235
    %v2244 = vmul.f32 %v2203, %v2236
    %v2245 = vmul.f32 %v2205, %v2237
    %v2246 = vpack.c.bf16 %v2238, %v2238
    %v2247 = vpack.c.bf16 %v2239, %v2239
    %v2248 = vpack.c.bf16 %v2240, %v2240
    %v2249 = vpack.c.bf16 %v2241, %v2241
    %v2250 = vpack.c.bf16 %v2242, %v2242
    %v2251 = vpack.c.bf16 %v2243, %v2243
    %v2252 = vpack.c.bf16 %v2244, %v2244
    %v2253 = vpack.c.bf16 %v2245, %v2245
    %2255 = vrot.lane.b32.xlu0 %v1773, 96
    %v2256 = vpop.permute.xlu0 %2255
    %v2259 = vsel %vm2157, %v2246, 0
    %2261 = vmatprep.subr.bf16.mxu0 0
    %2262 = vmatpush1.bf16.msra.mxu0 %v2256
    %2263 = vmatprep.subr.bf16.mxu0 0
    %2264 = vmatpush1.bf16.msra.mxu0 0
    %2265 = vmatprep.subr.bf16.mxu0 0
    %2266 = vmatpush1.bf16.msra.mxu0 0
    %2267 = vmatprep.subr.bf16.mxu0 0
    %2268 = vmatpush1.bf16.msra.mxu0 0
    %2269 = vmatprep.subr.bf16.mxu0 0
    %2270 = vmatpush1.bf16.msra.mxu0 0
    %2271 = vmatprep.subr.bf16.mxu0 0
    %2272 = vmatpush1.bf16.msra.mxu0 0
    %2273 = vmatprep.subr.bf16.mxu0 0
    %2274 = vmatpush1.bf16.msra.mxu0 0
    %2275 = vmatprep.subr.bf16.mxu0 0
    %2276 = vmatpush1.bf16.msra.mxu0 0
    %2277 = vmatprep.subr.bf16.mxu0 0
    %2278 = vmatpush1.bf16.msra.mxu0 0
    %2279 = vmatprep.subr.bf16.mxu0 0
    %2280 = vmatpush1.bf16.msra.mxu0 0
    %2281 = vmatprep.subr.bf16.mxu0 0
    %2282 = vmatpush1.bf16.msra.mxu0 0
    %2283 = vmatprep.subr.bf16.mxu0 0
    %2284 = vmatpush1.bf16.msra.mxu0 0
    %2285 = vmatprep.subr.bf16.mxu0 0
    %2286 = vmatpush1.bf16.msra.mxu0 0
    %2287 = vmatprep.subr.bf16.mxu0 0
    %2288 = vmatpush1.bf16.msra.mxu0 0
    %2289 = vmatprep.subr.bf16.mxu0 0
    %2290 = vmatpush1.bf16.msra.mxu0 0
    %2291 = vmatprep.subr.bf16.mxu0 0
    %2292 = vmatpush1.bf16.msra.mxu0 0
    %2293 = vmatprep.mubr.bf16.mxu0 0
    %2294 = vmatmul.mubr.bf16.gmra.mrb[0].mxu0 %v2259
    %v2295 = vpop.f32.mrb[0].mxu0
    %v2296 = vadd.f32 0.0, %v2295
    %v2297 = vpop.f32.mrb[0].mxu0
    %v2298 = vpop.f32.mrb[0].mxu0
    %v2299 = vpop.f32.mrb[0].mxu0
    %2300 = vdwg.mxu0
    %2302 = vrot.lane.b32.xlu0 %v1774, 96
    %v2303 = vpop.permute.xlu0 %2302
    %v2306 = vsel %vm2157, %v2247, 0
    %2308 = vmatprep.subr.bf16.mxu0 0
    %2309 = vmatpush1.bf16.msra.mxu0 %v2303
    %2310 = vmatprep.subr.bf16.mxu0 0
    %2311 = vmatpush1.bf16.msra.mxu0 0
    %2312 = vmatprep.subr.bf16.mxu0 0
    %2313 = vmatpush1.bf16.msra.mxu0 0
    %2314 = vmatprep.subr.bf16.mxu0 0
    %2315 = vmatpush1.bf16.msra.mxu0 0
    %2316 = vmatprep.subr.bf16.mxu0 0
    %2317 = vmatpush1.bf16.msra.mxu0 0
    %2318 = vmatprep.subr.bf16.mxu0 0
    %2319 = vmatpush1.bf16.msra.mxu0 0
    %2320 = vmatprep.subr.bf16.mxu0 0
    %2321 = vmatpush1.bf16.msra.mxu0 0
    %2322 = vmatprep.subr.bf16.mxu0 0
    %2323 = vmatpush1.bf16.msra.mxu0 0
    %2324 = vmatprep.subr.bf16.mxu0 0
    %2325 = vmatpush1.bf16.msra.mxu0 0
    %2326 = vmatprep.subr.bf16.mxu0 0
    %2327 = vmatpush1.bf16.msra.mxu0 0
    %2328 = vmatprep.subr.bf16.mxu0 0
    %2329 = vmatpush1.bf16.msra.mxu0 0
    %2330 = vmatprep.subr.bf16.mxu0 0
    %2331 = vmatpush1.bf16.msra.mxu0 0
    %2332 = vmatprep.subr.bf16.mxu0 0
    %2333 = vmatpush1.bf16.msra.mxu0 0
    %2334 = vmatprep.subr.bf16.mxu0 0
    %2335 = vmatpush1.bf16.msra.mxu0 0
    %2336 = vmatprep.subr.bf16.mxu0 0
    %2337 = vmatpush1.bf16.msra.mxu0 0
    %2338 = vmatprep.subr.bf16.mxu0 0
    %2339 = vmatpush1.bf16.msra.mxu0 0
    %2340 = vmatprep.mubr.bf16.mxu0 0
    %2341 = vmatmul.mubr.bf16.gmra.mrb[0].mxu0 %v2306
    %v2342 = vpop.f32.mrb[0].mxu0
    %v2343 = vadd.f32 0.0, %v2342
    %v2344 = vpop.f32.mrb[0].mxu0
    %v2345 = vpop.f32.mrb[0].mxu0
    %v2346 = vpop.f32.mrb[0].mxu0
    %2347 = vdwg.mxu0
    %2349 = vrot.lane.b32.xlu0 %v1775, 96
    %v2350 = vpop.permute.xlu0 %2349
    %v2353 = vsel %vm2157, %v2248, 0
    %2355 = vmatprep.subr.bf16.mxu0 0
    %2356 = vmatpush1.bf16.msra.mxu0 %v2350
    %2357 = vmatprep.subr.bf16.mxu0 0
    %2358 = vmatpush1.bf16.msra.mxu0 0
    %2359 = vmatprep.subr.bf16.mxu0 0
    %2360 = vmatpush1.bf16.msra.mxu0 0
    %2361 = vmatprep.subr.bf16.mxu0 0
    %2362 = vmatpush1.bf16.msra.mxu0 0
    %2363 = vmatprep.subr.bf16.mxu0 0
    %2364 = vmatpush1.bf16.msra.mxu0 0
    %2365 = vmatprep.subr.bf16.mxu0 0
    %2366 = vmatpush1.bf16.msra.mxu0 0
    %2367 = vmatprep.subr.bf16.mxu0 0
    %2368 = vmatpush1.bf16.msra.mxu0 0
    %2369 = vmatprep.subr.bf16.mxu0 0
    %2370 = vmatpush1.bf16.msra.mxu0 0
    %2371 = vmatprep.subr.bf16.mxu0 0
    %2372 = vmatpush1.bf16.msra.mxu0 0
    %2373 = vmatprep.subr.bf16.mxu0 0
    %2374 = vmatpush1.bf16.msra.mxu0 0
    %2375 = vmatprep.subr.bf16.mxu0 0
    %2376 = vmatpush1.bf16.msra.mxu0 0
    %2377 = vmatprep.subr.bf16.mxu0 0
    %2378 = vmatpush1.bf16.msra.mxu0 0
    %2379 = vmatprep.subr.bf16.mxu0 0
    %2380 = vmatpush1.bf16.msra.mxu0 0
    %2381 = vmatprep.subr.bf16.mxu0 0
    %2382 = vmatpush1.bf16.msra.mxu0 0
    %2383 = vmatprep.subr.bf16.mxu0 0
    %2384 = vmatpush1.bf16.msra.mxu0 0
    %2385 = vmatprep.subr.bf16.mxu0 0
    %2386 = vmatpush1.bf16.msra.mxu0 0
    %2387 = vmatprep.mubr.bf16.mxu0 0
    %2388 = vmatmul.mubr.bf16.gmra.mrb[0].mxu0 %v2353
    %v2389 = vpop.f32.mrb[0].mxu0
    %v2390 = vadd.f32 0.0, %v2389
    %v2391 = vpop.f32.mrb[0].mxu0
    %v2392 = vpop.f32.mrb[0].mxu0
    %v2393 = vpop.f32.mrb[0].mxu0
    %2394 = vdwg.mxu0
    %2396 = vrot.lane.b32.xlu0 %v1776, 96
    %v2397 = vpop.permute.xlu0 %2396
    %v2400 = vsel %vm2157, %v2249, 0
    %2402 = vmatprep.subr.bf16.mxu0 0
    %2403 = vmatpush1.bf16.msra.mxu0 %v2397
    %2404 = vmatprep.subr.bf16.mxu0 0
    %2405 = vmatpush1.bf16.msra.mxu0 0
    %2406 = vmatprep.subr.bf16.mxu0 0
    %2407 = vmatpush1.bf16.msra.mxu0 0
    %2408 = vmatprep.subr.bf16.mxu0 0
    %2409 = vmatpush1.bf16.msra.mxu0 0
    %2410 = vmatprep.subr.bf16.mxu0 0
    %2411 = vmatpush1.bf16.msra.mxu0 0
    %2412 = vmatprep.subr.bf16.mxu0 0
    %2413 = vmatpush1.bf16.msra.mxu0 0
    %2414 = vmatprep.subr.bf16.mxu0 0
    %2415 = vmatpush1.bf16.msra.mxu0 0
    %2416 = vmatprep.subr.bf16.mxu0 0
    %2417 = vmatpush1.bf16.msra.mxu0 0
    %2418 = vmatprep.subr.bf16.mxu0 0
    %2419 = vmatpush1.bf16.msra.mxu0 0
    %2420 = vmatprep.subr.bf16.mxu0 0
    %2421 = vmatpush1.bf16.msra.mxu0 0
    %2422 = vmatprep.subr.bf16.mxu0 0
    %2423 = vmatpush1.bf16.msra.mxu0 0
    %2424 = vmatprep.subr.bf16.mxu0 0
    %2425 = vmatpush1.bf16.msra.mxu0 0
    %2426 = vmatprep.subr.bf16.mxu0 0
    %2427 = vmatpush1.bf16.msra.mxu0 0
    %2428 = vmatprep.subr.bf16.mxu0 0
    %2429 = vmatpush1.bf16.msra.mxu0 0
    %2430 = vmatprep.subr.bf16.mxu0 0
    %2431 = vmatpush1.bf16.msra.mxu0 0
    %2432 = vmatprep.subr.bf16.mxu0 0
    %2433 = vmatpush1.bf16.msra.mxu0 0
    %2434 = vmatprep.mubr.bf16.mxu0 0
    %2435 = vmatmul.mubr.bf16.gmra.mrb[0].mxu0 %v2400
    %v2436 = vpop.f32.mrb[0].mxu0
    %v2437 = vadd.f32 0.0, %v2436
    %v2438 = vpop.f32.mrb[0].mxu0
    %v2439 = vpop.f32.mrb[0].mxu0
    %v2440 = vpop.f32.mrb[0].mxu0
    %2441 = vdwg.mxu0
    %2443 = vrot.lane.b32.xlu0 %v1777, 96
    %v2444 = vpop.permute.xlu0 %2443
    %v2447 = vsel %vm2157, %v2250, 0
    %2449 = vmatprep.subr.bf16.mxu0 0
    %2450 = vmatpush1.bf16.msra.mxu0 %v2444
    %2451 = vmatprep.subr.bf16.mxu0 0
    %2452 = vmatpush1.bf16.msra.mxu0 0
    %2453 = vmatprep.subr.bf16.mxu0 0
    %2454 = vmatpush1.bf16.msra.mxu0 0
    %2455 = vmatprep.subr.bf16.mxu0 0
    %2456 = vmatpush1.bf16.msra.mxu0 0
    %2457 = vmatprep.subr.bf16.mxu0 0
    %2458 = vmatpush1.bf16.msra.mxu0 0
    %2459 = vmatprep.subr.bf16.mxu0 0
    %2460 = vmatpush1.bf16.msra.mxu0 0
    %2461 = vmatprep.subr.bf16.mxu0 0
    %2462 = vmatpush1.bf16.msra.mxu0 0
    %2463 = vmatprep.subr.bf16.mxu0 0
    %2464 = vmatpush1.bf16.msra.mxu0 0
    %2465 = vmatprep.subr.bf16.mxu0 0
    %2466 = vmatpush1.bf16.msra.mxu0 0
    %2467 = vmatprep.subr.bf16.mxu0 0
    %2468 = vmatpush1.bf16.msra.mxu0 0
    %2469 = vmatprep.subr.bf16.mxu0 0
    %2470 = vmatpush1.bf16.msra.mxu0 0
    %2471 = vmatprep.subr.bf16.mxu0 0
    %2472 = vmatpush1.bf16.msra.mxu0 0
    %2473 = vmatprep.subr.bf16.mxu0 0
    %2474 = vmatpush1.bf16.msra.mxu0 0
    %2475 = vmatprep.subr.bf16.mxu0 0
    %2476 = vmatpush1.bf16.msra.mxu0 0
    %2477 = vmatprep.subr.bf16.mxu0 0
    %2478 = vmatpush1.bf16.msra.mxu0 0
    %2479 = vmatprep.subr.bf16.mxu0 0
    %2480 = vmatpush1.bf16.msra.mxu0 0
    %2481 = vmatprep.mubr.bf16.mxu0 0
    %2482 = vmatmul.mubr.bf16.gmra.mrb[0].mxu0 %v2447
    %v2483 = vpop.f32.mrb[0].mxu0
    %v2484 = vadd.f32 0.0, %v2483
    %v2485 = vpop.f32.mrb[0].mxu0
    %v2486 = vpop.f32.mrb[0].mxu0
    %v2487 = vpop.f32.mrb[0].mxu0
    %2488 = vdwg.mxu0
    %2490 = vrot.lane.b32.xlu0 %v1778, 96
    %v2491 = vpop.permute.xlu0 %2490
    %v2494 = vsel %vm2157, %v2251, 0
    %2496 = vmatprep.subr.bf16.mxu0 0
    %2497 = vmatpush1.bf16.msra.mxu0 %v2491
    %2498 = vmatprep.subr.bf16.mxu0 0
    %2499 = vmatpush1.bf16.msra.mxu0 0
    %2500 = vmatprep.subr.bf16.mxu0 0
    %2501 = vmatpush1.bf16.msra.mxu0 0
    %2502 = vmatprep.subr.bf16.mxu0 0
    %2503 = vmatpush1.bf16.msra.mxu0 0
    %2504 = vmatprep.subr.bf16.mxu0 0
    %2505 = vmatpush1.bf16.msra.mxu0 0
    %2506 = vmatprep.subr.bf16.mxu0 0
    %2507 = vmatpush1.bf16.msra.mxu0 0
    %2508 = vmatprep.subr.bf16.mxu0 0
    %2509 = vmatpush1.bf16.msra.mxu0 0
    %2510 = vmatprep.subr.bf16.mxu0 0
    %2511 = vmatpush1.bf16.msra.mxu0 0
    %2512 = vmatprep.subr.bf16.mxu0 0
    %2513 = vmatpush1.bf16.msra.mxu0 0
    %2514 = vmatprep.subr.bf16.mxu0 0
    %2515 = vmatpush1.bf16.msra.mxu0 0
    %2516 = vmatprep.subr.bf16.mxu0 0
    %2517 = vmatpush1.bf16.msra.mxu0 0
    %2518 = vmatprep.subr.bf16.mxu0 0
    %2519 = vmatpush1.bf16.msra.mxu0 0
    %2520 = vmatprep.subr.bf16.mxu0 0
    %2521 = vmatpush1.bf16.msra.mxu0 0
    %2522 = vmatprep.subr.bf16.mxu0 0
    %2523 = vmatpush1.bf16.msra.mxu0 0
    %2524 = vmatprep.subr.bf16.mxu0 0
    %2525 = vmatpush1.bf16.msra.mxu0 0
    %2526 = vmatprep.subr.bf16.mxu0 0
    %2527 = vmatpush1.bf16.msra.mxu0 0
    %2528 = vmatprep.mubr.bf16.mxu0 0
    %2529 = vmatmul.mubr.bf16.gmra.mrb[0].mxu0 %v2494
    %v2530 = vpop.f32.mrb[0].mxu0
    %v2531 = vadd.f32 0.0, %v2530
    %v2532 = vpop.f32.mrb[0].mxu0
    %v2533 = vpop.f32.mrb[0].mxu0
    %v2534 = vpop.f32.mrb[0].mxu0
    %2535 = vdwg.mxu0
    %2537 = vrot.lane.b32.xlu0 %v1779, 96
    %v2538 = vpop.permute.xlu0 %2537
    %v2541 = vsel %vm2157, %v2252, 0
    %2543 = vmatprep.subr.bf16.mxu0 0
    %2544 = vmatpush1.bf16.msra.mxu0 %v2538
    %2545 = vmatprep.subr.bf16.mxu0 0
    %2546 = vmatpush1.bf16.msra.mxu0 0
    %2547 = vmatprep.subr.bf16.mxu0 0
    %2548 = vmatpush1.bf16.msra.mxu0 0
    %2549 = vmatprep.subr.bf16.mxu0 0
    %2550 = vmatpush1.bf16.msra.mxu0 0
    %2551 = vmatprep.subr.bf16.mxu0 0
    %2552 = vmatpush1.bf16.msra.mxu0 0
    %2553 = vmatprep.subr.bf16.mxu0 0
    %2554 = vmatpush1.bf16.msra.mxu0 0
    %2555 = vmatprep.subr.bf16.mxu0 0
    %2556 = vmatpush1.bf16.msra.mxu0 0
    %2557 = vmatprep.subr.bf16.mxu0 0
    %2558 = vmatpush1.bf16.msra.mxu0 0
    %2559 = vmatprep.subr.bf16.mxu0 0
    %2560 = vmatpush1.bf16.msra.mxu0 0
    %2561 = vmatprep.subr.bf16.mxu0 0
    %2562 = vmatpush1.bf16.msra.mxu0 0
    %2563 = vmatprep.subr.bf16.mxu0 0
    %2564 = vmatpush1.bf16.msra.mxu0 0
    %2565 = vmatprep.subr.bf16.mxu0 0
    %2566 = vmatpush1.bf16.msra.mxu0 0
    %2567 = vmatprep.subr.bf16.mxu0 0
    %2568 = vmatpush1.bf16.msra.mxu0 0
    %2569 = vmatprep.subr.bf16.mxu0 0
    %2570 = vmatpush1.bf16.msra.mxu0 0
    %2571 = vmatprep.subr.bf16.mxu0 0
    %2572 = vmatpush1.bf16.msra.mxu0 0
    %2573 = vmatprep.subr.bf16.mxu0 0
    %2574 = vmatpush1.bf16.msra.mxu0 0
    %2575 = vmatprep.mubr.bf16.mxu0 0
    %2576 = vmatmul.mubr.bf16.gmra.mrb[0].mxu0 %v2541
    %v2577 = vpop.f32.mrb[0].mxu0
    %v2578 = vadd.f32 0.0, %v2577
    %v2579 = vpop.f32.mrb[0].mxu0
    %v2580 = vpop.f32.mrb[0].mxu0
    %v2581 = vpop.f32.mrb[0].mxu0
    %2582 = vdwg.mxu0
    %2584 = vrot.lane.b32.xlu0 %v1780, 96
    %v2585 = vpop.permute.xlu0 %2584
    %v2588 = vsel %vm2157, %v2253, 0
    %2590 = vmatprep.subr.bf16.mxu0 0
    %2591 = vmatpush1.bf16.msra.mxu0 %v2585
    %2592 = vmatprep.subr.bf16.mxu0 0
    %2593 = vmatpush1.bf16.msra.mxu0 0
    %2594 = vmatprep.subr.bf16.mxu0 0
    %2595 = vmatpush1.bf16.msra.mxu0 0
    %2596 = vmatprep.subr.bf16.mxu0 0
    %2597 = vmatpush1.bf16.msra.mxu0 0
    %2598 = vmatprep.subr.bf16.mxu0 0
    %2599 = vmatpush1.bf16.msra.mxu0 0
    %2600 = vmatprep.subr.bf16.mxu0 0
    %2601 = vmatpush1.bf16.msra.mxu0 0
    %2602 = vmatprep.subr.bf16.mxu0 0
    %2603 = vmatpush1.bf16.msra.mxu0 0
    %2604 = vmatprep.subr.bf16.mxu0 0
    %2605 = vmatpush1.bf16.msra.mxu0 0
    %2606 = vmatprep.subr.bf16.mxu0 0
    %2607 = vmatpush1.bf16.msra.mxu0 0
    %2608 = vmatprep.subr.bf16.mxu0 0
    %2609 = vmatpush1.bf16.msra.mxu0 0
    %2610 = vmatprep.subr.bf16.mxu0 0
    %2611 = vmatpush1.bf16.msra.mxu0 0
    %2612 = vmatprep.subr.bf16.mxu0 0
    %2613 = vmatpush1.bf16.msra.mxu0 0
    %2614 = vmatprep.subr.bf16.mxu0 0
    %2615 = vmatpush1.bf16.msra.mxu0 0
    %2616 = vmatprep.subr.bf16.mxu0 0
    %2617 = vmatpush1.bf16.msra.mxu0 0
    %2618 = vmatprep.subr.bf16.mxu0 0
    %2619 = vmatpush1.bf16.msra.mxu0 0
    %2620 = vmatprep.subr.bf16.mxu0 0
    %2621 = vmatpush1.bf16.msra.mxu0 0
    %2622 = vmatprep.mubr.bf16.mxu0 0
    %2623 = vmatmul.mubr.bf16.gmra.mrb[0].mxu0 %v2588
    %v2624 = vpop.f32.mrb[0].mxu0
    %v2625 = vadd.f32 0.0, %v2624
    %v2626 = vpop.f32.mrb[0].mxu0
    %v2627 = vpop.f32.mrb[0].mxu0
    %v2628 = vpop.f32.mrb[0].mxu0
    %2629 = vdwg.mxu0
    %v2630 = vpack.c.bf16 %v2296, %v2296
    %v2631 = vpack.c.bf16 %v2343, %v2343
    %v2632 = vpack.c.bf16 %v2390, %v2390
    %v2633 = vpack.c.bf16 %v2437, %v2437
    %v2634 = vpack.c.bf16 %v2484, %v2484
    %v2635 = vpack.c.bf16 %v2531, %v2531
    %v2636 = vpack.c.bf16 %v2578, %v2578
    %v2637 = vpack.c.bf16 %v2625, %v2625
    %v2639 = vsel %vm233, %v2630, 0
    %v2642 = vsel %vm732, %v1756, 0
    %2644 = vmatprep.subr.bf16.mxu0 0
    %2645 = vmatpush1.bf16.msra.mxu0 %v2642
    %2646 = vmatprep.subr.bf16.mxu0 0
    %2647 = vmatpush1.bf16.msra.mxu0 0
    %2648 = vmatprep.subr.bf16.mxu0 0
    %2649 = vmatpush1.bf16.msra.mxu0 0
    %2650 = vmatprep.subr.bf16.mxu0 0
    %2651 = vmatpush1.bf16.msra.mxu0 0
    %2652 = vmatprep.subr.bf16.mxu0 0
    %2653 = vmatpush1.bf16.msra.mxu0 0
    %2654 = vmatprep.subr.bf16.mxu0 0
    %2655 = vmatpush1.bf16.msra.mxu0 0
    %2656 = vmatprep.subr.bf16.mxu0 0
    %2657 = vmatpush1.bf16.msra.mxu0 0
    %2658 = vmatprep.subr.bf16.mxu0 0
    %2659 = vmatpush1.bf16.msra.mxu0 0
    %2660 = vmatprep.subr.bf16.mxu0 0
    %2661 = vmatpush1.bf16.msra.mxu0 0
    %2662 = vmatprep.subr.bf16.mxu0 0
    %2663 = vmatpush1.bf16.msra.mxu0 0
    %2664 = vmatprep.subr.bf16.mxu0 0
    %2665 = vmatpush1.bf16.msra.mxu0 0
    %2666 = vmatprep.subr.bf16.mxu0 0
    %2667 = vmatpush1.bf16.msra.mxu0 0
    %2668 = vmatprep.subr.bf16.mxu0 0
    %2669 = vmatpush1.bf16.msra.mxu0 0
    %2670 = vmatprep.subr.bf16.mxu0 0
    %2671 = vmatpush1.bf16.msra.mxu0 0
    %2672 = vmatprep.subr.bf16.mxu0 0
    %2673 = vmatpush1.bf16.msra.mxu0 0
    %2674 = vmatprep.subr.bf16.mxu0 0
    %2675 = vmatpush1.bf16.msra.mxu0 0
    %2676 = vmatprep.mubr.bf16.mxu0 0
    %2677 = vmatmul.mubr.bf16.gmra.mrb[0].mxu0 %v2639
    %v2678 = vpop.f32.mrb[0].mxu0
    %v2679 = vadd.f32 0.0, %v2678
    %v2680 = vpop.f32.mrb[0].mxu0
    %v2681 = vpop.f32.mrb[0].mxu0
    %v2682 = vpop.f32.mrb[0].mxu0
    %2683 = vdwg.mxu0
    %v2685 = vsel %vm233, %v2631, 0
    %v2688 = vsel %vm732, %v1757, 0
    %2690 = vmatprep.subr.bf16.mxu0 0
    %2691 = vmatpush1.bf16.msra.mxu0 %v2688
    %2692 = vmatprep.subr.bf16.mxu0 0
    %2693 = vmatpush1.bf16.msra.mxu0 0
    %2694 = vmatprep.subr.bf16.mxu0 0
    %2695 = vmatpush1.bf16.msra.mxu0 0
    %2696 = vmatprep.subr.bf16.mxu0 0
    %2697 = vmatpush1.bf16.msra.mxu0 0
    %2698 = vmatprep.subr.bf16.mxu0 0
    %2699 = vmatpush1.bf16.msra.mxu0 0
    %2700 = vmatprep.subr.bf16.mxu0 0
    %2701 = vmatpush1.bf16.msra.mxu0 0
    %2702 = vmatprep.subr.bf16.mxu0 0
    %2703 = vmatpush1.bf16.msra.mxu0 0
    %2704 = vmatprep.subr.bf16.mxu0 0
    %2705 = vmatpush1.bf16.msra.mxu0 0
    %2706 = vmatprep.subr.bf16.mxu0 0
    %2707 = vmatpush1.bf16.msra.mxu0 0
    %2708 = vmatprep.subr.bf16.mxu0 0
    %2709 = vmatpush1.bf16.msra.mxu0 0
    %2710 = vmatprep.subr.bf16.mxu0 0
    %2711 = vmatpush1.bf16.msra.mxu0 0
    %2712 = vmatprep.subr.bf16.mxu0 0
    %2713 = vmatpush1.bf16.msra.mxu0 0
    %2714 = vmatprep.subr.bf16.mxu0 0
    %2715 = vmatpush1.bf16.msra.mxu0 0
    %2716 = vmatprep.subr.bf16.mxu0 0
    %2717 = vmatpush1.bf16.msra.mxu0 0
    %2718 = vmatprep.subr.bf16.mxu0 0
    %2719 = vmatpush1.bf16.msra.mxu0 0
    %2720 = vmatprep.subr.bf16.mxu0 0
    %2721 = vmatpush1.bf16.msra.mxu0 0
    %2722 = vmatprep.mubr.bf16.mxu0 0
    %2723 = vmatmul.mubr.bf16.gmra.mrb[0].mxu0 %v2685
    %v2724 = vpop.f32.mrb[0].mxu0
    %v2725 = vadd.f32 0.0, %v2724
    %v2726 = vpop.f32.mrb[0].mxu0
    %v2727 = vpop.f32.mrb[0].mxu0
    %v2728 = vpop.f32.mrb[0].mxu0
    %2729 = vdwg.mxu0
    %v2731 = vsel %vm233, %v2632, 0
    %v2734 = vsel %vm732, %v1758, 0
    %2736 = vmatprep.subr.bf16.mxu0 0
    %2737 = vmatpush1.bf16.msra.mxu0 %v2734
    %2738 = vmatprep.subr.bf16.mxu0 0
    %2739 = vmatpush1.bf16.msra.mxu0 0
    %2740 = vmatprep.subr.bf16.mxu0 0
    %2741 = vmatpush1.bf16.msra.mxu0 0
    %2742 = vmatprep.subr.bf16.mxu0 0
    %2743 = vmatpush1.bf16.msra.mxu0 0
    %2744 = vmatprep.subr.bf16.mxu0 0
    %2745 = vmatpush1.bf16.msra.mxu0 0
    %2746 = vmatprep.subr.bf16.mxu0 0
    %2747 = vmatpush1.bf16.msra.mxu0 0
    %2748 = vmatprep.subr.bf16.mxu0 0
    %2749 = vmatpush1.bf16.msra.mxu0 0
    %2750 = vmatprep.subr.bf16.mxu0 0
    %2751 = vmatpush1.bf16.msra.mxu0 0
    %2752 = vmatprep.subr.bf16.mxu0 0
    %2753 = vmatpush1.bf16.msra.mxu0 0
    %2754 = vmatprep.subr.bf16.mxu0 0
    %2755 = vmatpush1.bf16.msra.mxu0 0
    %2756 = vmatprep.subr.bf16.mxu0 0
    %2757 = vmatpush1.bf16.msra.mxu0 0
    %2758 = vmatprep.subr.bf16.mxu0 0
    %2759 = vmatpush1.bf16.msra.mxu0 0
    %2760 = vmatprep.subr.bf16.mxu0 0
    %2761 = vmatpush1.bf16.msra.mxu0 0
    %2762 = vmatprep.subr.bf16.mxu0 0
    %2763 = vmatpush1.bf16.msra.mxu0 0
    %2764 = vmatprep.subr.bf16.mxu0 0
    %2765 = vmatpush1.bf16.msra.mxu0 0
    %2766 = vmatprep.subr.bf16.mxu0 0
    %2767 = vmatpush1.bf16.msra.mxu0 0
    %2768 = vmatprep.mubr.bf16.mxu0 0
    %2769 = vmatmul.mubr.bf16.gmra.mrb[0].mxu0 %v2731
    %v2770 = vpop.f32.mrb[0].mxu0
    %v2771 = vadd.f32 0.0, %v2770
    %v2772 = vpop.f32.mrb[0].mxu0
    %v2773 = vpop.f32.mrb[0].mxu0
    %v2774 = vpop.f32.mrb[0].mxu0
    %2775 = vdwg.mxu0
    %v2777 = vsel %vm233, %v2633, 0
    %v2780 = vsel %vm732, %v1759, 0
    %2782 = vmatprep.subr.bf16.mxu0 0
    %2783 = vmatpush1.bf16.msra.mxu0 %v2780
    %2784 = vmatprep.subr.bf16.mxu0 0
    %2785 = vmatpush1.bf16.msra.mxu0 0
    %2786 = vmatprep.subr.bf16.mxu0 0
    %2787 = vmatpush1.bf16.msra.mxu0 0
    %2788 = vmatprep.subr.bf16.mxu0 0
    %2789 = vmatpush1.bf16.msra.mxu0 0
    %2790 = vmatprep.subr.bf16.mxu0 0
    %2791 = vmatpush1.bf16.msra.mxu0 0
    %2792 = vmatprep.subr.bf16.mxu0 0
    %2793 = vmatpush1.bf16.msra.mxu0 0
    %2794 = vmatprep.subr.bf16.mxu0 0
    %2795 = vmatpush1.bf16.msra.mxu0 0
    %2796 = vmatprep.subr.bf16.mxu0 0
    %2797 = vmatpush1.bf16.msra.mxu0 0
    %2798 = vmatprep.subr.bf16.mxu0 0
    %2799 = vmatpush1.bf16.msra.mxu0 0
    %2800 = vmatprep.subr.bf16.mxu0 0
    %2801 = vmatpush1.bf16.msra.mxu0 0
    %2802 = vmatprep.subr.bf16.mxu0 0
    %2803 = vmatpush1.bf16.msra.mxu0 0
    %2804 = vmatprep.subr.bf16.mxu0 0
    %2805 = vmatpush1.bf16.msra.mxu0 0
    %2806 = vmatprep.subr.bf16.mxu0 0
    %2807 = vmatpush1.bf16.msra.mxu0 0
    %2808 = vmatprep.subr.bf16.mxu0 0
    %2809 = vmatpush1.bf16.msra.mxu0 0
    %2810 = vmatprep.subr.bf16.mxu0 0
    %2811 = vmatpush1.bf16.msra.mxu0 0
    %2812 = vmatprep.subr.bf16.mxu0 0
    %2813 = vmatpush1.bf16.msra.mxu0 0
    %2814 = vmatprep.mubr.bf16.mxu0 0
    %2815 = vmatmul.mubr.bf16.gmra.mrb[0].mxu0 %v2777
    %v2816 = vpop.f32.mrb[0].mxu0
    %v2817 = vadd.f32 0.0, %v2816
    %v2818 = vpop.f32.mrb[0].mxu0
    %v2819 = vpop.f32.mrb[0].mxu0
    %v2820 = vpop.f32.mrb[0].mxu0
    %2821 = vdwg.mxu0
    %v2823 = vsel %vm233, %v2634, 0
    %v2826 = vsel %vm732, %v1760, 0
    %2828 = vmatprep.subr.bf16.mxu0 0
    %2829 = vmatpush1.bf16.msra.mxu0 %v2826
    %2830 = vmatprep.subr.bf16.mxu0 0
    %2831 = vmatpush1.bf16.msra.mxu0 0
    %2832 = vmatprep.subr.bf16.mxu0 0
    %2833 = vmatpush1.bf16.msra.mxu0 0
    %2834 = vmatprep.subr.bf16.mxu0 0
    %2835 = vmatpush1.bf16.msra.mxu0 0
    %2836 = vmatprep.subr.bf16.mxu0 0
    %2837 = vmatpush1.bf16.msra.mxu0 0
    %2838 = vmatprep.subr.bf16.mxu0 0
    %2839 = vmatpush1.bf16.msra.mxu0 0
    %2840 = vmatprep.subr.bf16.mxu0 0
    %2841 = vmatpush1.bf16.msra.mxu0 0
    %2842 = vmatprep.subr.bf16.mxu0 0
    %2843 = vmatpush1.bf16.msra.mxu0 0
    %2844 = vmatprep.subr.bf16.mxu0 0
    %2845 = vmatpush1.bf16.msra.mxu0 0
    %2846 = vmatprep.subr.bf16.mxu0 0
    %2847 = vmatpush1.bf16.msra.mxu0 0
    %2848 = vmatprep.subr.bf16.mxu0 0
    %2849 = vmatpush1.bf16.msra.mxu0 0
    %2850 = vmatprep.subr.bf16.mxu0 0
    %2851 = vmatpush1.bf16.msra.mxu0 0
    %2852 = vmatprep.subr.bf16.mxu0 0
    %2853 = vmatpush1.bf16.msra.mxu0 0
    %2854 = vmatprep.subr.bf16.mxu0 0
    %2855 = vmatpush1.bf16.msra.mxu0 0
    %2856 = vmatprep.subr.bf16.mxu0 0
    %2857 = vmatpush1.bf16.msra.mxu0 0
    %2858 = vmatprep.subr.bf16.mxu0 0
    %2859 = vmatpush1.bf16.msra.mxu0 0
    %2860 = vmatprep.mubr.bf16.mxu0 0
    %2861 = vmatmul.mubr.bf16.gmra.mrb[0].mxu0 %v2823
    %v2862 = vpop.f32.mrb[0].mxu0
    %v2863 = vadd.f32 0.0, %v2862
    %v2864 = vpop.f32.mrb[0].mxu0
    %v2865 = vpop.f32.mrb[0].mxu0
    %v2866 = vpop.f32.mrb[0].mxu0
    %2867 = vdwg.mxu0
    %v2869 = vsel %vm233, %v2635, 0
    %v2872 = vsel %vm732, %v1761, 0
    %2874 = vmatprep.subr.bf16.mxu0 0
    %2875 = vmatpush1.bf16.msra.mxu0 %v2872
    %2876 = vmatprep.subr.bf16.mxu0 0
    %2877 = vmatpush1.bf16.msra.mxu0 0
    %2878 = vmatprep.subr.bf16.mxu0 0
    %2879 = vmatpush1.bf16.msra.mxu0 0
    %2880 = vmatprep.subr.bf16.mxu0 0
    %2881 = vmatpush1.bf16.msra.mxu0 0
    %2882 = vmatprep.subr.bf16.mxu0 0
    %2883 = vmatpush1.bf16.msra.mxu0 0
    %2884 = vmatprep.subr.bf16.mxu0 0
    %2885 = vmatpush1.bf16.msra.mxu0 0
    %2886 = vmatprep.subr.bf16.mxu0 0
    %2887 = vmatpush1.bf16.msra.mxu0 0
    %2888 = vmatprep.subr.bf16.mxu0 0
    %2889 = vmatpush1.bf16.msra.mxu0 0
    %2890 = vmatprep.subr.bf16.mxu0 0
    %2891 = vmatpush1.bf16.msra.mxu0 0
    %2892 = vmatprep.subr.bf16.mxu0 0
    %2893 = vmatpush1.bf16.msra.mxu0 0
    %2894 = vmatprep.subr.bf16.mxu0 0
    %2895 = vmatpush1.bf16.msra.mxu0 0
    %2896 = vmatprep.subr.bf16.mxu0 0
    %2897 = vmatpush1.bf16.msra.mxu0 0
    %2898 = vmatprep.subr.bf16.mxu0 0
    %2899 = vmatpush1.bf16.msra.mxu0 0
    %2900 = vmatprep.subr.bf16.mxu0 0
    %2901 = vmatpush1.bf16.msra.mxu0 0
    %2902 = vmatprep.subr.bf16.mxu0 0
    %2903 = vmatpush1.bf16.msra.mxu0 0
    %2904 = vmatprep.subr.bf16.mxu0 0
    %2905 = vmatpush1.bf16.msra.mxu0 0
    %2906 = vmatprep.mubr.bf16.mxu0 0
    %2907 = vmatmul.mubr.bf16.gmra.mrb[0].mxu0 %v2869
    %v2908 = vpop.f32.mrb[0].mxu0
    %v2909 = vadd.f32 0.0, %v2908
    %v2910 = vpop.f32.mrb[0].mxu0
    %v2911 = vpop.f32.mrb[0].mxu0
    %v2912 = vpop.f32.mrb[0].mxu0
    %2913 = vdwg.mxu0
    %v2915 = vsel %vm233, %v2636, 0
    %v2918 = vsel %vm732, %v1762, 0
    %2920 = vmatprep.subr.bf16.mxu0 0
    %2921 = vmatpush1.bf16.msra.mxu0 %v2918
    %2922 = vmatprep.subr.bf16.mxu0 0
    %2923 = vmatpush1.bf16.msra.mxu0 0
    %2924 = vmatprep.subr.bf16.mxu0 0
    %2925 = vmatpush1.bf16.msra.mxu0 0
    %2926 = vmatprep.subr.bf16.mxu0 0
    %2927 = vmatpush1.bf16.msra.mxu0 0
    %2928 = vmatprep.subr.bf16.mxu0 0
    %2929 = vmatpush1.bf16.msra.mxu0 0
    %2930 = vmatprep.subr.bf16.mxu0 0
    %2931 = vmatpush1.bf16.msra.mxu0 0
    %2932 = vmatprep.subr.bf16.mxu0 0
    %2933 = vmatpush1.bf16.msra.mxu0 0
    %2934 = vmatprep.subr.bf16.mxu0 0
    %2935 = vmatpush1.bf16.msra.mxu0 0
    %2936 = vmatprep.subr.bf16.mxu0 0
    %2937 = vmatpush1.bf16.msra.mxu0 0
    %2938 = vmatprep.subr.bf16.mxu0 0
    %2939 = vmatpush1.bf16.msra.mxu0 0
    %2940 = vmatprep.subr.bf16.mxu0 0
    %2941 = vmatpush1.bf16.msra.mxu0 0
    %2942 = vmatprep.subr.bf16.mxu0 0
    %2943 = vmatpush1.bf16.msra.mxu0 0
    %2944 = vmatprep.subr.bf16.mxu0 0
    %2945 = vmatpush1.bf16.msra.mxu0 0
    %2946 = vmatprep.subr.bf16.mxu0 0
    %2947 = vmatpush1.bf16.msra.mxu0 0
    %2948 = vmatprep.subr.bf16.mxu0 0
    %2949 = vmatpush1.bf16.msra.mxu0 0
    %2950 = vmatprep.subr.bf16.mxu0 0
    %2951 = vmatpush1.bf16.msra.mxu0 0
    %2952 = vmatprep.mubr.bf16.mxu0 0
    %2953 = vmatmul.mubr.bf16.gmra.mrb[0].mxu0 %v2915
    %v2954 = vpop.f32.mrb[0].mxu0
    %v2955 = vadd.f32 0.0, %v2954
    %v2956 = vpop.f32.mrb[0].mxu0
    %v2957 = vpop.f32.mrb[0].mxu0
    %v2958 = vpop.f32.mrb[0].mxu0
    %2959 = vdwg.mxu0
    %v2961 = vsel %vm233, %v2637, 0
    %v2964 = vsel %vm732, %v1763, 0
    %2966 = vmatprep.subr.bf16.mxu0 0
    %2967 = vmatpush1.bf16.msra.mxu0 %v2964
    %2968 = vmatprep.subr.bf16.mxu0 0
    %2969 = vmatpush1.bf16.msra.mxu0 0
    %2970 = vmatprep.subr.bf16.mxu0 0
    %2971 = vmatpush1.bf16.msra.mxu0 0
    %2972 = vmatprep.subr.bf16.mxu0 0
    %2973 = vmatpush1.bf16.msra.mxu0 0
    %2974 = vmatprep.subr.bf16.mxu0 0
    %2975 = vmatpush1.bf16.msra.mxu0 0
    %2976 = vmatprep.subr.bf16.mxu0 0
    %2977 = vmatpush1.bf16.msra.mxu0 0
    %2978 = vmatprep.subr.bf16.mxu0 0
    %2979 = vmatpush1.bf16.msra.mxu0 0
    %2980 = vmatprep.subr.bf16.mxu0 0
    %2981 = vmatpush1.bf16.msra.mxu0 0
    %2982 = vmatprep.subr.bf16.mxu0 0
    %2983 = vmatpush1.bf16.msra.mxu0 0
    %2984 = vmatprep.subr.bf16.mxu0 0
    %2985 = vmatpush1.bf16.msra.mxu0 0
    %2986 = vmatprep.subr.bf16.mxu0 0
    %2987 = vmatpush1.bf16.msra.mxu0 0
    %2988 = vmatprep.subr.bf16.mxu0 0
    %2989 = vmatpush1.bf16.msra.mxu0 0
    %2990 = vmatprep.subr.bf16.mxu0 0
    %2991 = vmatpush1.bf16.msra.mxu0 0
    %2992 = vmatprep.subr.bf16.mxu0 0
    %2993 = vmatpush1.bf16.msra.mxu0 0
    %2994 = vmatprep.subr.bf16.mxu0 0
    %2995 = vmatpush1.bf16.msra.mxu0 0
    %2996 = vmatprep.subr.bf16.mxu0 0
    %2997 = vmatpush1.bf16.msra.mxu0 0
    %2998 = vmatprep.mubr.bf16.mxu0 0
    %2999 = vmatmul.mubr.bf16.gmra.mrb[0].mxu0 %v2961
    %v3000 = vpop.f32.mrb[0].mxu0
    %v3001 = vadd.f32 0.0, %v3000
    %v3002 = vpop.f32.mrb[0].mxu0
    %v3003 = vpop.f32.mrb[0].mxu0
    %v3004 = vpop.f32.mrb[0].mxu0
    %3005 = vdwg.mxu0
    %v3006 = vadd.f32 %v2679, %v2771
    %v3007 = vadd.f32 %v2725, %v2817
    %v3008 = vadd.f32 %v3006, %v2863
    %v3009 = vadd.f32 %v3007, %v2909
    %v3010 = vadd.f32 %v3008, %v2955
    %v3011 = vadd.f32 %v3009, %v3001
    %v3013 = vlaneseq
    %v3014 = vshrl.u32 %v3013, 7
    %v3015 = vsub.s32 0, %v3014
    %v3016 = vrot.slane %v1764, %v3015
    %v3018 = vadd.f32 %v3010, %v3016
    %v3019 = vadd.f32 %v3011, %v3016
    %v3020 = vadd.f32 %v1502, %v3018
    %v3021 = vadd.f32 %v1503, %v3019
    %v3022 = vld [vmem:[%s16] sm:$0x1]
    %v3023 = vld [vmem:[%s17] sm:$0x1]
    %v3024 = vsel %vm81, %v3020, 0.0
    %3025 = vadd.xlane.f32.xlu0 %v3024
    %v3026 = vpop.xlane.xlu0 %3025
    %v3027 = vsel %vm81, %v3021, 0.0
    %3028 = vadd.xlane.f32.xlu0 %v3027
    %v3029 = vpop.xlane.xlu0 %3028
    %v3030 = vmul.f32 %v3026, %v88
    %v3031 = vmul.f32 %v3029, %v88
    %v3032 = vsub.f32 %v3020, %v3030
    %v3033 = vsub.f32 %v3021, %v3031
    %v3034 = vmul.f32 %v3032, %v3032
    %v3035 = vmul.f32 %v3033, %v3033
    %v3036 = vsel %vm81, %v3034, 0.0
    %3037 = vadd.xlane.f32.xlu0 %v3036
    %v3038 = vpop.xlane.xlu0 %3037
    %v3039 = vsel %vm81, %v3035, 0.0
    %3040 = vadd.xlane.f32.xlu0 %v3039
    %v3041 = vpop.xlane.xlu0 %3040
    %v3042 = vmul.f32 %v3038, %v88
    %v3043 = vmul.f32 %v3041, %v88
    %v3044 = vadd.f32 %v3042, 1e-05
    %v3045 = vadd.f32 %v3043, 1e-05
    %v3046 = vrsqrt.pop %v3044
    %v3047 = vrsqrt.pop %v3045
    %v3048 = vmul.f32 %v3032, %v3046
    %v3049 = vmul.f32 %v3033, %v3047
    %v3051 = vlaneseq
    %v3052 = vshrl.u32 %v3051, 7
    %v3053 = vsub.s32 0, %v3052
    %v3054 = vrot.slane %v3022, %v3053
    %v3056 = vmul.f32 %v3048, %v3054
    %v3057 = vmul.f32 %v3049, %v3054
    %v3059 = vlaneseq
    %v3060 = vshrl.u32 %v3059, 7
    %v3061 = vsub.s32 0, %v3060
    %v3062 = vrot.slane %v3023, %v3061
    %v3064 = vadd.f32 %v3056, %v3062
    %v3065 = vadd.f32 %v3057, %v3062
    %v3066 = vpack.c.bf16 %v3065, %v3064
    %v3067 = vld [vmem:[%s18] sm:$0xf]
    %v3068 = vld [vmem:[%s18 + $0x4] sm:$0xf]
    %v3069 = vld [vmem:[%s18 + $0x8] sm:$0xf]
    %v3070 = vld [vmem:[%s18 + $0xc] sm:$0xf]
    %v3071 = vld [vmem:[%s19] sm:$0x1]
    %v3073 = vlaneseq
    %v3074 = vshrl.u32 %v3073, 7
    %v3075 = vsub.s32 0, %v3074
    %v3076 = vrot.slane %v3071, %v3075
    %v3082 = vunpack.c.l.b16 %v3067
    %v3083 = vunpack.c.l.b16 %v3068
    %v3084 = vunpack.c.l.b16 %v3069
    %v3085 = vunpack.c.l.b16 %v3070
    %v3086 = vpack.c.b16 %v3083, %v3082
    %v3087 = vpack.c.b16 %v3085, %v3084
    %v3091 = vsel %vm81, %v3066, 0
    %3093 = vmatprep.subr.bf16.mxu0 0
    %3094 = vmatpush1.bf16.msra.mxu0 %v3086
    %3095 = vmatprep.subr.bf16.mxu0 0
    %3096 = vmatpush1.bf16.msra.mxu0 %v3087
    %3097 = vmatprep.subr.bf16.mxu0 0
    %3098 = vmatpush1.bf16.msra.mxu0 0
    %3099 = vmatprep.subr.bf16.mxu0 0
    %3100 = vmatpush1.bf16.msra.mxu0 0
    %3101 = vmatprep.subr.bf16.mxu0 0
    %3102 = vmatpush1.bf16.msra.mxu0 0
    %3103 = vmatprep.subr.bf16.mxu0 0
    %3104 = vmatpush1.bf16.msra.mxu0 0
    %3105 = vmatprep.subr.bf16.mxu0 0
    %3106 = vmatpush1.bf16.msra.mxu0 0
    %3107 = vmatprep.subr.bf16.mxu0 0
    %3108 = vmatpush1.bf16.msra.mxu0 0
    %3109 = vmatprep.subr.bf16.mxu0 0
    %3110 = vmatpush1.bf16.msra.mxu0 0
    %3111 = vmatprep.subr.bf16.mxu0 0
    %3112 = vmatpush1.bf16.msra.mxu0 0
    %3113 = vmatprep.subr.bf16.mxu0 0
    %3114 = vmatpush1.bf16.msra.mxu0 0
    %3115 = vmatprep.subr.bf16.mxu0 0
    %3116 = vmatpush1.bf16.msra.mxu0 0
    %3117 = vmatprep.subr.bf16.mxu0 0
    %3118 = vmatpush1.bf16.msra.mxu0 0
    %3119 = vmatprep.subr.bf16.mxu0 0
    %3120 = vmatpush1.bf16.msra.mxu0 0
    %3121 = vmatprep.subr.bf16.mxu0 0
    %3122 = vmatpush1.bf16.msra.mxu0 0
    %3123 = vmatprep.subr.bf16.mxu0 0
    %3124 = vmatpush1.bf16.msra.mxu0 0
    %3125 = vmatprep.mubr.bf16.mxu0 0
    %3126 = vmatmul.mubr.bf16.gmra.mrb[0].mxu0 %v3091
    %v3127 = vpop.f32.mrb[0].mxu0
    %v3128 = vadd.f32 %v3076, %v3127
    %v3129 = vpop.f32.mrb[0].mxu0
    %v3130 = vpop.f32.mrb[0].mxu0
    %v3131 = vadd.f32 %v3076, %v3130
    %v3132 = vpop.f32.mrb[0].mxu0
    %3133 = vdwg.mxu0
    %v3134 = vmul.f32 %v3128, 0.5
    %v3135 = vmul.f32 %v3131, 0.5
    %v3136 = vmul.f32 %v3128, 0.70710677
    %v3137 = vmul.f32 %v3131, 0.70710677
    %v3138 = verf.f32.pop %v3136
    %v3139 = verf.f32.pop %v3137
    %v3140 = vadd.f32 %v3138, 1.0
    %v3141 = vadd.f32 %v3139, 1.0
    %v3142 = vmul.f32 %v3134, %v3140
    %v3143 = vmul.f32 %v3135, %v3141
    %v3144 = vpack.c.bf16 %v3143, %v3142
    %v3145 = vld [vmem:[%s20] sm:$0xf]
    %v3146 = vld [vmem:[%s20 + $0x4] sm:$0xf]
    %v3147 = vld [vmem:[%s20 + $0x8] sm:$0xf]
    %v3148 = vld [vmem:[%s20 + $0xc] sm:$0xf]
    %v3149 = vld [vmem:[%s20 + $0x10] sm:$0xf]
    %v3150 = vld [vmem:[%s20 + $0x14] sm:$0xf]
    %v3151 = vld [vmem:[%s20 + $0x18] sm:$0xf]
    %v3152 = vld [vmem:[%s20 + $0x1c] sm:$0xf]
    %v3153 = vld [vmem:[%s21] sm:$0x1]
    %v3155 = vlaneseq
    %v3156 = vshrl.u32 %v3155, 7
    %v3157 = vsub.s32 0, %v3156
    %v3158 = vrot.slane %v3153, %v3157
    %v3168 = vunpack.c.l.b16 %v3145
    %v3169 = vunpack.c.l.b16 %v3146
    %v3170 = vunpack.c.l.b16 %v3147
    %v3171 = vunpack.c.l.b16 %v3148
    %v3172 = vunpack.c.l.b16 %v3149
    %v3173 = vunpack.c.l.b16 %v3150
    %v3174 = vunpack.c.l.b16 %v3151
    %v3175 = vunpack.c.l.b16 %v3152
    %v3176 = vpack.c.b16 %v3169, %v3168
    %v3177 = vpack.c.b16 %v3171, %v3170
    %v3178 = vpack.c.b16 %v3173, %v3172
    %v3179 = vpack.c.b16 %v3175, %v3174
    %vm3184 = vcmask 523264
    %v3186 = vsel %vm3184, %v3144, 0
    %3188 = vmatprep.subr.bf16.mxu0 0
    %3189 = vmatpush1.bf16.msra.mxu0 %v3176
    %3190 = vmatprep.subr.bf16.mxu0 0
    %3191 = vmatpush1.bf16.msra.mxu0 %v3177
    %3192 = vmatprep.subr.bf16.mxu0 0
    %3193 = vmatpush1.bf16.msra.mxu0 %v3178
    %3194 = vmatprep.subr.bf16.mxu0 0
    %3195 = vmatpush1.bf16.msra.mxu0 %v3179
    %3196 = vmatprep.subr.bf16.mxu0 0
    %3197 = vmatpush1.bf16.msra.mxu0 0
    %3198 = vmatprep.subr.bf16.mxu0 0
    %3199 = vmatpush1.bf16.msra.mxu0 0
    %3200 = vmatprep.subr.bf16.mxu0 0
    %3201 = vmatpush1.bf16.msra.mxu0 0
    %3202 = vmatprep.subr.bf16.mxu0 0
    %3203 = vmatpush1.bf16.msra.mxu0 0
    %3204 = vmatprep.subr.bf16.mxu0 0
    %3205 = vmatpush1.bf16.msra.mxu0 0
    %3206 = vmatprep.subr.bf16.mxu0 0
    %3207 = vmatpush1.bf16.msra.mxu0 0
    %3208 = vmatprep.subr.bf16.mxu0 0
    %3209 = vmatpush1.bf16.msra.mxu0 0
    %3210 = vmatprep.subr.bf16.mxu0 0
    %3211 = vmatpush1.bf16.msra.mxu0 0
    %3212 = vmatprep.subr.bf16.mxu0 0
    %3213 = vmatpush1.bf16.msra.mxu0 0
    %3214 = vmatprep.subr.bf16.mxu0 0
    %3215 = vmatpush1.bf16.msra.mxu0 0
    %3216 = vmatprep.subr.bf16.mxu0 0
    %3217 = vmatpush1.bf16.msra.mxu0 0
    %3218 = vmatprep.subr.bf16.mxu0 0
    %3219 = vmatpush1.bf16.msra.mxu0 0
    %3220 = vmatprep.mubr.bf16.mxu0 0
    %3221 = vmatmul.mubr.bf16.gmra.mrb[0].mxu0 %v3186
    %v3222 = vpop.f32.mrb[0].mxu0
    %v3223 = vadd.f32 %v3158, %v3222
    %v3224 = vpop.f32.mrb[0].mxu0
    %v3225 = vpop.f32.mrb[0].mxu0
    %v3226 = vadd.f32 %v3158, %v3225
    %v3227 = vpop.f32.mrb[0].mxu0
    %3228 = vdwg.mxu0
    %v3229 = vadd.f32 %v3020, %v3223
    %v3230 = vadd.f32 %v3021, %v3226
    %3231 = vst.msk [vmem:[#allocation2] sm:$0xff] %vm81, %v3229
    %3232 = vst.msk [vmem:[#allocation2 + $0x8] sm:$0xff] %vm81, %v3230
    // Predicated region
    $region90: #{qformer_layer.1} parent=1 // pred_check
      _
    $region91: #{qformer_layer.1} parent=1 // pred_check_branch
      %3234 = sbr.rel (0) target = $region93
    $region92: #{qformer_layer.1} parent=1 // pred_region
      %s3236 = ssub.s32 256, 256
      %3237 = vsyncadd [#allocation3], %s3236
      %s3238 = sshll.u32 [#allocation2], 4
      %s3239 = int_to_ptr.vmem [resolvable:$true] %s3238
      %3244 = dma.vmem_to_hbm [thread:$0]  %s3239, 256, %s22, [#allocation3], 128, 128, 8
    $region93: #{qformer_layer.1} parent=1 // pred_fallthru
      _
    // Predicated region
    $region94: #{qformer_layer.1} parent=1 // pred_check
      _
    $region95: #{qformer_layer.1} parent=1 // pred_check_branch
      %3246 = sbr.rel (0) target = $region97
    $region96: #{qformer_layer.1} parent=1 // pred_region
      %3247 = dma.done [#allocation3], 256
    $region97: #{qformer_layer.1} parent=1 // pred_fallthru
      _
    %3248 = vsyncpa [#allocation3], 1

</llo_original>
